<compile_context>
chip_gen: v6e
topology: v6e:2x2x1
jax: 0.10.0
libtpu: 0.0.40
codegen_flags: <defaults>
</compile_context>

<pallas_src>
import numpy as np
import jax
import jax.numpy as jnp
from jax.experimental import pallas as pl
from jax.experimental.pallas import tpu as pltpu


# --------------------------------------------------------------------------
# One grid step == one cascade stage:
#   im  = im + MLP(im)                          (stand-in for transformer(im))
#   K   = F im F            (separable 2-D ortho DFT, bf16 MXU / f32 accum)
#   D   = w_s * (y - K)
#   im  = im + Re( conj(F) D conj(F) )          (== Re(iFFT2(K + w*(y-K))))
# --------------------------------------------------------------------------
def _cascade_stage_kernel(x_ref, yr_ref, yi_ref, fr_ref, fi_ref, wdc_ref,
                          w1_ref, b1_ref, w2_ref, b2_ref, o_ref, im_ref):
    s = pl.program_id(0)
    bc, n, _ = x_ref.shape
    n2 = n * n

    @pl.when(s == 0)
    def _():
        im_ref[...] = x_ref[...]          # load the input image only once

    im = im_ref[...]                      # (BC, N, N) f32, resident in VMEM
    imb = im.astype(jnp.bfloat16)         # single bf16 shadow for the matmuls

    # ---- denoiser + residual:  im = im + transformer(im) -------------------
    h = jnp.dot(imb.reshape(bc, n2), w1_ref[0],
                preferred_element_type=jnp.float32) + b1_ref[0]
    h = jax.nn.gelu(h)
    d = jnp.dot(h.astype(jnp.bfloat16), w2_ref[0],
                preferred_element_type=jnp.float32) + b2_ref[0]
    im = im + d.reshape(bc, n, n)
    imb = im.astype(jnp.bfloat16)

    # ---- FFT data consistency ----------------------------------------------
    fr = fr_ref[...]                      # (N, N) bf16  Re(F), F symmetric
    fi = fi_ref[...]                      # (N, N) bf16  Im(F)
    frb = jnp.broadcast_to(fr, (bc, n, n))   # hoisted broadcasts for the
    fib = jnp.broadcast_to(fi, (bc, n, n))   # batched left-multiplies

    # Forward 2-D DFT:  K = F @ im @ F
    x2 = imb.reshape(bc * n, n)           # row (last-axis) transform: 2-D dots
    ar = jnp.dot(x2, fr, preferred_element_type=jnp.float32)
    ai = jnp.dot(x2, fi, preferred_element_type=jnp.float32)
    arb = ar.astype(jnp.bfloat16).reshape(bc, n, n)
    aib = ai.astype(jnp.bfloat16).reshape(bc, n, n)
    kr = (jnp.einsum('bij,bjk->bik', frb, arb,
                     preferred_element_type=jnp.float32) -
          jnp.einsum('bij,bjk->bik', fib, aib,
                     preferred_element_type=jnp.float32))
    ki = (jnp.einsum('bij,bjk->bik', frb, aib,
                     preferred_element_type=jnp.float32) +
          jnp.einsum('bij,bjk->bik', fib, arb,
                     preferred_element_type=jnp.float32))

    # D = w*(y - K)  (f32 VPU math);  im += Re(conj(F) @ D @ conj(F))
    w = wdc_ref[0]                        # (N, N), broadcast over BC
    dr = w * (yr_ref[...] - kr)
    di = w * (yi_ref[...] - ki)

    drb = dr.astype(jnp.bfloat16).reshape(bc * n, n)
    dib = di.astype(jnp.bfloat16).reshape(bc * n, n)
    er = (jnp.dot(drb, fr, preferred_element_type=jnp.float32) +
          jnp.dot(dib, fi, preferred_element_type=jnp.float32))
    ei = (jnp.dot(dib, fr, preferred_element_type=jnp.float32) -
          jnp.dot(drb, fi, preferred_element_type=jnp.float32))
    erb = er.astype(jnp.bfloat16).reshape(bc, n, n)
    eib = ei.astype(jnp.bfloat16).reshape(bc, n, n)
    delta = (jnp.einsum('bij,bjk->bik', frb, erb,
                        preferred_element_type=jnp.float32) +
             jnp.einsum('bij,bjk->bik', fib, eib,
                        preferred_element_type=jnp.float32))

    im = im + delta
    im_ref[...] = im                      # carry to the next stage

    @pl.when(s == pl.num_programs(0) - 1)
    def _():
        o_ref[...] = im


def cascade_net_forward(x_prev, y_real, y_imag, sample_mask, mlp_params, lamb,
                        fr, fi):
    B, C, N, _ = x_prev.shape
    BC, N2 = B * C, N * N
    S = len(mlp_params)

    x = x_prev.reshape(BC, N, N).astype(jnp.float32)
    yr = y_real.reshape(BC, N, N).astype(jnp.float32)
    yi = y_imag.reshape(BC, N, N).astype(jnp.float32)

    # Per-stage DC weight  w_s = mask * lamb_s / (1 + lamb_s)  so that
    # k + w*(y-k) == (1-m)*k + m*(k + lamb*y)/(1+lamb).
    lamb = jnp.asarray(lamb, jnp.float32)
    w_dc = ((lamb / (1.0 + lamb)).reshape(S, 1, 1) *
            sample_mask.astype(jnp.float32)[None])                  # (S,N,N)

    w1 = jnp.stack([p[0] for p in mlp_params]).astype(jnp.bfloat16)  # (S,N2,H)
    b1 = jnp.stack([p[1] for p in mlp_params]).astype(jnp.float32)   # (S,1,H)
    w2 = jnp.stack([p[2] for p in mlp_params]).astype(jnp.bfloat16)  # (S,H,N2)
    b2 = jnp.stack([p[3] for p in mlp_params]).astype(jnp.float32)   # (S,1,N2)
    HID = w1.shape[-1]

    # Explicit VMEM budget: 2x (pipeline double buffering) the per-step
    # blocks plus headroom for the in-kernel intermediates.
    block_bytes = (4 * BC * N2 * 4            # x, yr, yi, out blocks (f32)
                   + BC * N2 * 4              # im scratch (f32)
                   + 2 * N2 * 2               # fr, fi (bf16)
                   + N2 * 4                   # per-stage DC weights
                   + 2 * N2 * HID * 2         # W1, W2 (bf16)
                   + (HID + N2) * 4)          # b1, b2
    vmem_limit = min(2 * block_bytes + (16 << 20), 100 << 20)

    flops = S * (4 * BC * N2 * HID            # 2 denoiser matmuls
                 + 24 * BC * N2 * N)          # 12 separable N^3 DFT matmuls
    bytes_accessed = (4 * 4 * BC * N2                      # x, yr, yi, out
                      + 2 * 2 * N2                         # fr, fi
                      + S * (2 * 2 * N2 * HID              # W1, W2
                             + 4 * (HID + 2 * N2)))        # b1, b2, w_dc
    cost = pl.CostEstimate(flops=int(flops),
                           transcendentals=int(S * BC * HID),
                           bytes_accessed=int(bytes_accessed))

    out = pl.pallas_call(
        _cascade_stage_kernel,
        out_shape=jax.ShapeDtypeStruct((BC, N, N), jnp.float32),
        grid=(S,),                                            # stage-streamed
        in_specs=[
            pl.BlockSpec((BC, N, N), lambda s: (0, 0, 0)),    # x (stage 0)
            pl.BlockSpec((BC, N, N), lambda s: (0, 0, 0)),    # y real
            pl.BlockSpec((BC, N, N), lambda s: (0, 0, 0)),    # y imag
            pl.BlockSpec((N, N), lambda s: (0, 0)),           # Re(F)
            pl.BlockSpec((N, N), lambda s: (0, 0)),           # Im(F)
            pl.BlockSpec((1, N, N), lambda s: (s, 0, 0)),     # DC weights
            pl.BlockSpec((1, N2, HID), lambda s: (s, 0, 0)),  # W1
            pl.BlockSpec((1, 1, HID), lambda s: (s, 0, 0)),   # b1
            pl.BlockSpec((1, HID, N2), lambda s: (s, 0, 0)),  # W2
            pl.BlockSpec((1, 1, N2), lambda s: (s, 0, 0)),    # b2
        ],
        out_specs=pl.BlockSpec((BC, N, N), lambda s: (0, 0, 0)),
        scratch_shapes=[pltpu.VMEM((BC, N, N), jnp.float32)],  # im carry
        compiler_params=pltpu.CompilerParams(
            dimension_semantics=("arbitrary",),     # stages are sequential
            vmem_limit_bytes=int(vmem_limit)),
        cost_estimate=cost,
    )(x, yr, yi, fr, fi, w_dc, w1, b1, w2, b2)

    return out.reshape(B, C, N, N)


def dft_matrices(N, dtype=jnp.bfloat16):
    """Real/imag parts of the symmetric ortho 1-D DFT matrix F, so that
    fft2(X, norm='ortho') == F @ X @ F for an NxN image X."""
    j = np.arange(N)
    ang = -2.0 * np.pi * np.outer(j, j) / N
    return (jnp.asarray(np.cos(ang) / np.sqrt(N), dtype),
            jnp.asarray(np.sin(ang) / np.sqrt(N), dtype))


# Pure-JAX reference (same stand-in denoiser, jnp.fft data consistency).
def cascade_reference(x_prev, y_real, y_imag, sample_mask, mlp_params, lamb):
    B, C, N, _ = x_prev.shape
    im = x_prev.reshape(B * C, N * N)
    y = (y_real + 1j * y_imag).reshape(B * C, N, N)
    m = sample_mask
    for i, (w1, b1, w2, b2) in enumerate(mlp_params):
        h = jax.nn.gelu(im @ w1 + b1)
        im = im + (h @ w2 + b2)
        k = jnp.fft.fft2(im.reshape(-1, N, N), norm="ortho")
        k = (1 - m) * k + m * (k + lamb[i] * y) / (1 + lamb[i])
        im = jnp.real(jnp.fft.ifft2(k, norm="ortho")).reshape(-1, N * N)
    return im.reshape(B, C, N, N)


if __name__ == "__main__":
    # Small deterministic problem: N=16 image, 2 batches, 4 channels, 2 stages.
    B, C, N = 2, 4, 16
    num_cascades = 2
    hidden = 256                    # multiple of 256: fills the v6e/v7x MXU
    D = N * N                       # one (b,c) image per MLP row

    key = jax.random.PRNGKey(0)
    kx, kyr, kyi, km, kw = jax.random.split(key, 5)

    x_prev = jax.random.normal(kx, (B, C, N, N), jnp.float32)
    y_real = jax.random.normal(kyr, (B, C, N, N), jnp.float32)
    y_imag = jax.random.normal(kyi, (B, C, N, N), jnp.float32)
    sample_mask = (jax.random.uniform(km, (N, N)) < 0.35).astype(jnp.float32)

    # Deterministic stand-in denoiser parameters per cascade stage.
    mlp_params = []
    wkeys = jax.random.split(kw, num_cascades * 2)
    for i in range(num_cascades):
        w1 = jax.random.normal(wkeys[2 * i], (D, hidden), jnp.float32) * 0.02
        b1 = jnp.zeros((1, hidden), jnp.float32)
        w2 = jax.random.normal(wkeys[2 * i + 1], (hidden, D), jnp.float32) * 0.02
        b2 = jnp.zeros((1, D), jnp.float32)
        mlp_params.append((w1, b1, w2, b2))

    # nn.Parameter(torch.ones(len(encList)) * 0.5)
    lamb = jnp.ones((num_cascades,), jnp.float32) * 0.5

    fr, fi = dft_matrices(N)

    fwd = jax.jit(cascade_net_forward)
    out = fwd(x_prev, y_real, y_imag, sample_mask, mlp_params, lamb, fr, fi)
    jax.block_until_ready(out)
    assert out.shape == (B, C, N, N)

    # Numerical sanity check against the pure-JAX reference (bf16 MXU
    # operands + f32 accumulation => small expected mismatch).
    ref = cascade_reference(x_prev, y_real, y_imag, sample_mask, mlp_params,
                            lamb)
    rel_err = float(jnp.linalg.norm(out - ref) / jnp.linalg.norm(ref))
    assert rel_err < 0.05, f"relative error too large: {rel_err}"

    print("KERNEL_OK")
</pallas_src>

<mosaic_0001>
module attributes {stable_mosaic.version = 11 : i64} {
  func.func @_cascade_stage_kernel(%arg0: i32, %arg1: memref<8x16x16xf32, #tpu.memory_space<vmem>>, %arg2: memref<8x16x16xf32, #tpu.memory_space<vmem>>, %arg3: memref<8x16x16xf32, #tpu.memory_space<vmem>>, %arg4: memref<16x16xbf16, #tpu.memory_space<vmem>>, %arg5: memref<16x16xbf16, #tpu.memory_space<vmem>>, %arg6: memref<1x16x16xf32, #tpu.memory_space<vmem>>, %arg7: memref<1x256x256xbf16, #tpu.memory_space<vmem>>, %arg8: memref<1x1x256xf32, #tpu.memory_space<vmem>>, %arg9: memref<1x256x256xbf16, #tpu.memory_space<vmem>>, %arg10: memref<1x1x256xf32, #tpu.memory_space<vmem>>, %arg11: memref<8x16x16xf32, #tpu.memory_space<vmem>>, %arg12: memref<8x16x16xf32, #tpu.memory_space<vmem>>) attributes {dimension_semantics = [#tpu.dimension_semantics<arbitrary>], iteration_bounds = array<i64: 2>, scalar_prefetch = 0 : i64, scratch_operands = 1 : i64, tpu.core_type = #tpu.core_type<tc>, window_params = [{pipeline_mode = #tpu.pipeline_mode<synchronous>, transform_indices = @transform_0, window_bounds = array<i64: 8, 16, 16>}, {pipeline_mode = #tpu.pipeline_mode<synchronous>, transform_indices = @transform_1, window_bounds = array<i64: 8, 16, 16>}, {pipeline_mode = #tpu.pipeline_mode<synchronous>, transform_indices = @transform_2, window_bounds = array<i64: 8, 16, 16>}, {pipeline_mode = #tpu.pipeline_mode<synchronous>, transform_indices = @transform_3, window_bounds = array<i64: 16, 16>}, {pipeline_mode = #tpu.pipeline_mode<synchronous>, transform_indices = @transform_4, window_bounds = array<i64: 16, 16>}, {transform_indices = @transform_5, window_bounds = array<i64: 1, 16, 16>}, {transform_indices = @transform_6, window_bounds = array<i64: 1, 256, 256>}, {transform_indices = @transform_7, window_bounds = array<i64: 1, 1, 256>}, {transform_indices = @transform_8, window_bounds = array<i64: 1, 256, 256>}, {transform_indices = @transform_9, window_bounds = array<i64: 1, 1, 256>}, {pipeline_mode = #tpu.pipeline_mode<synchronous>, transform_indices = @transform_10, window_bounds = array<i64: 8, 16, 16>}]} {
    %c0_i32 = arith.constant 0 : i32
    %0 = arith.cmpi eq, %arg0, %c0_i32 : i32
    %1 = arith.extui %0 : i1 to i32
    %c0_i32_0 = arith.constant 0 : i32
    %2 = arith.cmpi ne, %1, %c0_i32_0 : i32
    scf.if %2 {
      %c0_49 = arith.constant 0 : index
      %c0_50 = arith.constant 0 : index
      %c0_51 = arith.constant 0 : index
      %90 = vector.load %arg1[%c0_49, %c0_50, %c0_51] : memref<8x16x16xf32, #tpu.memory_space<vmem>>, vector<8x16x16xf32>
      %c0_52 = arith.constant 0 : index
      %c0_53 = arith.constant 0 : index
      %c0_54 = arith.constant 0 : index
      %91 = vector.load %arg12[%c0_52, %c0_53, %c0_54] : memref<8x16x16xf32, #tpu.memory_space<vmem>>, vector<8x16x16xf32>
      tpu.vector_store %arg12[%c0_52, %c0_53, %c0_54], %90 {strides = array<i32>} : memref<8x16x16xf32, #tpu.memory_space<vmem>>, vector<8x16x16xf32>,
    } else {
    }
    %c0 = arith.constant 0 : index
    %c0_1 = arith.constant 0 : index
    %c0_2 = arith.constant 0 : index
    %3 = vector.load %arg12[%c0, %c0_1, %c0_2] : memref<8x16x16xf32, #tpu.memory_space<vmem>>, vector<8x16x16xf32>
    %4 = arith.truncf %3 : vector<8x16x16xf32> to vector<8x16x16xbf16>
    %5 = vector.shape_cast %4 : vector<8x16x16xbf16> to vector<8x256xbf16>
    %c0_3 = arith.constant 0 : index
    %c0_4 = arith.constant 0 : index
    %c0_5 = arith.constant 0 : index
    %6 = vector.load %arg7[%c0_3, %c0_4, %c0_5] : memref<1x256x256xbf16, #tpu.memory_space<vmem>>, vector<1x256x256xbf16>
    %7 = vector.shape_cast %6 : vector<1x256x256xbf16> to vector<256x256xbf16>
    %cst = arith.constant dense<0.000000e+00> : vector<8x256xf32>
    %8 = tpu.matmul %5, %7, %cst {dimension_numbers = #tpu.dot_dimension_numbers<[1], [0], [0], [1], [0, 0, 1, 1], [], []>} : vector<8x256xbf16>, vector<256x256xbf16>, vector<8x256xf32> -> vector<8x256xf32>
    %c0_6 = arith.constant 0 : index
    %c0_7 = arith.constant 0 : index
    %c0_8 = arith.constant 0 : index
    %9 = vector.load %arg8[%c0_6, %c0_7, %c0_8] : memref<1x1x256xf32, #tpu.memory_space<vmem>>, vector<1x1x256xf32>
    %10 = vector.shape_cast %9 : vector<1x1x256xf32> to vector<1x256xf32>
    %11 = vector.broadcast %10 : vector<1x256xf32> to vector<8x256xf32>
    %12 = arith.addf %8, %11 : vector<8x256xf32>
    %13 = arith.mulf %12, %12 : vector<8x256xf32>
    %14 = arith.mulf %12, %13 : vector<8x256xf32>
    %cst_9 = arith.constant 4.471500e-02 : f32
    %15 = vector.broadcast %cst_9 : f32 to vector<8x256xf32>
    %16 = arith.mulf %15, %14 : vector<8x256xf32>
    %17 = arith.addf %12, %16 : vector<8x256xf32>
    %cst_10 = arith.constant 0.797884583 : f32
    %18 = vector.broadcast %cst_10 : f32 to vector<8x256xf32>
    %19 = arith.mulf %18, %17 : vector<8x256xf32>
    %20 = math.tanh %19 : vector<8x256xf32>
    %cst_11 = arith.constant 1.000000e+00 : f32
    %21 = vector.broadcast %cst_11 : f32 to vector<8x256xf32>
    %22 = arith.addf %21, %20 : vector<8x256xf32>
    %cst_12 = arith.constant 5.000000e-01 : f32
    %23 = vector.broadcast %cst_12 : f32 to vector<8x256xf32>
    %24 = arith.mulf %23, %22 : vector<8x256xf32>
    %25 = arith.mulf %12, %24 : vector<8x256xf32>
    %26 = arith.truncf %25 : vector<8x256xf32> to vector<8x256xbf16>
    %c0_13 = arith.constant 0 : index
    %c0_14 = arith.constant 0 : index
    %c0_15 = arith.constant 0 : index
    %27 = vector.load %arg9[%c0_13, %c0_14, %c0_15] : memref<1x256x256xbf16, #tpu.memory_space<vmem>>, vector<1x256x256xbf16>
    %28 = vector.shape_cast %27 : vector<1x256x256xbf16> to vector<256x256xbf16>
    %cst_16 = arith.constant dense<0.000000e+00> : vector<8x256xf32>
    %29 = tpu.matmul %26, %28, %cst_16 {dimension_numbers = #tpu.dot_dimension_numbers<[1], [0], [0], [1], [0, 0, 1, 1], [], []>} : vector<8x256xbf16>, vector<256x256xbf16>, vector<8x256xf32> -> vector<8x256xf32>
    %c0_17 = arith.constant 0 : index
    %c0_18 = arith.constant 0 : index
    %c0_19 = arith.constant 0 : index
    %30 = vector.load %arg10[%c0_17, %c0_18, %c0_19] : memref<1x1x256xf32, #tpu.memory_space<vmem>>, vector<1x1x256xf32>
    %31 = vector.shape_cast %30 : vector<1x1x256xf32> to vector<1x256xf32>
    %32 = vector.broadcast %31 : vector<1x256xf32> to vector<8x256xf32>
    %33 = arith.addf %29, %32 : vector<8x256xf32>
    %34 = vector.shape_cast %33 : vector<8x256xf32> to vector<8x16x16xf32>
    %35 = arith.addf %3, %34 : vector<8x16x16xf32>
    %36 = arith.truncf %35 : vector<8x16x16xf32> to vector<8x16x16xbf16>
    %c0_20 = arith.constant 0 : index
    %c0_21 = arith.constant 0 : index
    %37 = vector.load %arg4[%c0_20, %c0_21] : memref<16x16xbf16, #tpu.memory_space<vmem>>, vector<16x16xbf16>
    %c0_22 = arith.constant 0 : index
    %c0_23 = arith.constant 0 : index
    %38 = vector.load %arg5[%c0_22, %c0_23] : memref<16x16xbf16, #tpu.memory_space<vmem>>, vector<16x16xbf16>
    %39 = vector.shape_cast %37 : vector<16x16xbf16> to vector<1x16x16xbf16>
    %40 = vector.broadcast %39 : vector<1x16x16xbf16> to vector<8x16x16xbf16>
    %41 = vector.shape_cast %38 : vector<16x16xbf16> to vector<1x16x16xbf16>
    %42 = vector.broadcast %41 : vector<1x16x16xbf16> to vector<8x16x16xbf16>
    %43 = vector.shape_cast %36 : vector<8x16x16xbf16> to vector<128x16xbf16>
    %cst_24 = arith.constant dense<0.000000e+00> : vector<128x16xf32>
    %44 = tpu.matmul %43, %37, %cst_24 {dimension_numbers = #tpu.dot_dimension_numbers<[1], [0], [0], [1], [0, 0, 1, 1], [], []>} : vector<128x16xbf16>, vector<16x16xbf16>, vector<128x16xf32> -> vector<128x16xf32>
    %cst_25 = arith.constant dense<0.000000e+00> : vector<128x16xf32>
    %45 = tpu.matmul %43, %38, %cst_25 {dimension_numbers = #tpu.dot_dimension_numbers<[1], [0], [0], [1], [0, 0, 1, 1], [], []>} : vector<128x16xbf16>, vector<16x16xbf16>, vector<128x16xf32> -> vector<128x16xf32>
    %46 = arith.truncf %44 : vector<128x16xf32> to vector<128x16xbf16>
    %47 = vector.shape_cast %46 : vector<128x16xbf16> to vector<8x16x16xbf16>
    %48 = arith.truncf %45 : vector<128x16xf32> to vector<128x16xbf16>
    %49 = vector.shape_cast %48 : vector<128x16xbf16> to vector<8x16x16xbf16>
    "tpu.trace_start"() <{level = 10 : i32, message = "bij,bjk->bik"}> : () -> ()
    %cst_26 = arith.constant dense<0.000000e+00> : vector<8x16x16xf32>
    %50 = tpu.matmul %40, %47, %cst_26 {dimension_numbers = #tpu.dot_dimension_numbers<[2], [1], [1], [2], [0, 0, 0, 1, 1, 2], [0], [0]>} : vector<8x16x16xbf16>, vector<8x16x16xbf16>, vector<8x16x16xf32> -> vector<8x16x16xf32>
    %cst_27 = arith.constant dense<0.000000e+00> : vector<8x16x16xf32>
    %51 = tpu.matmul %42, %49, %cst_27 {dimension_numbers = #tpu.dot_dimension_numbers<[2], [1], [1], [2], [0, 0, 0, 1, 1, 2], [0], [0]>} : vector<8x16x16xbf16>, vector<8x16x16xbf16>, vector<8x16x16xf32> -> vector<8x16x16xf32>
    "tpu.trace_stop"() : () -> ()
    %52 = arith.subf %50, %51 : vector<8x16x16xf32>
    "tpu.trace_start"() <{level = 10 : i32, message = "bij,bjk->bik"}> : () -> ()
    %cst_28 = arith.constant dense<0.000000e+00> : vector<8x16x16xf32>
    %53 = tpu.matmul %40, %49, %cst_28 {dimension_numbers = #tpu.dot_dimension_numbers<[2], [1], [1], [2], [0, 0, 0, 1, 1, 2], [0], [0]>} : vector<8x16x16xbf16>, vector<8x16x16xbf16>, vector<8x16x16xf32> -> vector<8x16x16xf32>
    %cst_29 = arith.constant dense<0.000000e+00> : vector<8x16x16xf32>
    %54 = tpu.matmul %42, %47, %cst_29 {dimension_numbers = #tpu.dot_dimension_numbers<[2], [1], [1], [2], [0, 0, 0, 1, 1, 2], [0], [0]>} : vector<8x16x16xbf16>, vector<8x16x16xbf16>, vector<8x16x16xf32> -> vector<8x16x16xf32>
    "tpu.trace_stop"() : () -> ()
    %55 = arith.addf %53, %54 : vector<8x16x16xf32>
    %c0_30 = arith.constant 0 : index
    %c0_31 = arith.constant 0 : index
    %c0_32 = arith.constant 0 : index
    %56 = vector.load %arg6[%c0_30, %c0_31, %c0_32] : memref<1x16x16xf32, #tpu.memory_space<vmem>>, vector<1x16x16xf32>
    %57 = vector.shape_cast %56 : vector<1x16x16xf32> to vector<16x16xf32>
    %c0_33 = arith.constant 0 : index
    %c0_34 = arith.constant 0 : index
    %c0_35 = arith.constant 0 : index
    %58 = vector.load %arg2[%c0_33, %c0_34, %c0_35] : memref<8x16x16xf32, #tpu.memory_space<vmem>>, vector<8x16x16xf32>
    %59 = arith.subf %58, %52 : vector<8x16x16xf32>
    %60 = vector.shape_cast %57 : vector<16x16xf32> to vector<1x16x16xf32>
    %61 = vector.broadcast %60 : vector<1x16x16xf32> to vector<8x16x16xf32>
    %62 = arith.mulf %61, %59 : vector<8x16x16xf32>
    %c0_36 = arith.constant 0 : index
    %c0_37 = arith.constant 0 : index
    %c0_38 = arith.constant 0 : index
    %63 = vector.load %arg3[%c0_36, %c0_37, %c0_38] : memref<8x16x16xf32, #tpu.memory_space<vmem>>, vector<8x16x16xf32>
    %64 = arith.subf %63, %55 : vector<8x16x16xf32>
    %65 = vector.shape_cast %57 : vector<16x16xf32> to vector<1x16x16xf32>
    %66 = vector.broadcast %65 : vector<1x16x16xf32> to vector<8x16x16xf32>
    %67 = arith.mulf %66, %64 : vector<8x16x16xf32>
    %68 = arith.truncf %62 : vector<8x16x16xf32> to vector<8x16x16xbf16>
    %69 = vector.shape_cast %68 : vector<8x16x16xbf16> to vector<128x16xbf16>
    %70 = arith.truncf %67 : vector<8x16x16xf32> to vector<8x16x16xbf16>
    %71 = vector.shape_cast %70 : vector<8x16x16xbf16> to vector<128x16xbf16>
    %cst_39 = arith.constant dense<0.000000e+00> : vector<128x16xf32>
    %72 = tpu.matmul %69, %37, %cst_39 {dimension_numbers = #tpu.dot_dimension_numbers<[1], [0], [0], [1], [0, 0, 1, 1], [], []>} : vector<128x16xbf16>, vector<16x16xbf16>, vector<128x16xf32> -> vector<128x16xf32>
    %cst_40 = arith.constant dense<0.000000e+00> : vector<128x16xf32>
    %73 = tpu.matmul %71, %38, %cst_40 {dimension_numbers = #tpu.dot_dimension_numbers<[1], [0], [0], [1], [0, 0, 1, 1], [], []>} : vector<128x16xbf16>, vector<16x16xbf16>, vector<128x16xf32> -> vector<128x16xf32>
    %74 = arith.addf %72, %73 : vector<128x16xf32>
    %cst_41 = arith.constant dense<0.000000e+00> : vector<128x16xf32>
    %75 = tpu.matmul %71, %37, %cst_41 {dimension_numbers = #tpu.dot_dimension_numbers<[1], [0], [0], [1], [0, 0, 1, 1], [], []>} : vector<128x16xbf16>, vector<16x16xbf16>, vector<128x16xf32> -> vector<128x16xf32>
    %cst_42 = arith.constant dense<0.000000e+00> : vector<128x16xf32>
    %76 = tpu.matmul %69, %38, %cst_42 {dimension_numbers = #tpu.dot_dimension_numbers<[1], [0], [0], [1], [0, 0, 1, 1], [], []>} : vector<128x16xbf16>, vector<16x16xbf16>, vector<128x16xf32> -> vector<128x16xf32>
    %77 = arith.subf %75, %76 : vector<128x16xf32>
    %78 = arith.truncf %74 : vector<128x16xf32> to vector<128x16xbf16>
    %79 = vector.shape_cast %78 : vector<128x16xbf16> to vector<8x16x16xbf16>
    %80 = arith.truncf %77 : vector<128x16xf32> to vector<128x16xbf16>
    %81 = vector.shape_cast %80 : vector<128x16xbf16> to vector<8x16x16xbf16>
    "tpu.trace_start"() <{level = 10 : i32, message = "bij,bjk->bik"}> : () -> ()
    %cst_43 = arith.constant dense<0.000000e+00> : vector<8x16x16xf32>
    %82 = tpu.matmul %40, %79, %cst_43 {dimension_numbers = #tpu.dot_dimension_numbers<[2], [1], [1], [2], [0, 0, 0, 1, 1, 2], [0], [0]>} : vector<8x16x16xbf16>, vector<8x16x16xbf16>, vector<8x16x16xf32> -> vector<8x16x16xf32>
    %cst_44 = arith.constant dense<0.000000e+00> : vector<8x16x16xf32>
    %83 = tpu.matmul %42, %81, %cst_44 {dimension_numbers = #tpu.dot_dimension_numbers<[2], [1], [1], [2], [0, 0, 0, 1, 1, 2], [0], [0]>} : vector<8x16x16xbf16>, vector<8x16x16xbf16>, vector<8x16x16xf32> -> vector<8x16x16xf32>
    "tpu.trace_stop"() : () -> ()
    %84 = arith.addf %82, %83 : vector<8x16x16xf32>
    %85 = arith.addf %35, %84 : vector<8x16x16xf32>
    %c0_45 = arith.constant 0 : index
    %c0_46 = arith.constant 0 : index
    %c0_47 = arith.constant 0 : index
    %86 = vector.load %arg12[%c0_45, %c0_46, %c0_47] : memref<8x16x16xf32, #tpu.memory_space<vmem>>, vector<8x16x16xf32>
    tpu.vector_store %arg12[%c0_45, %c0_46, %c0_47], %85 {strides = array<i32>} : memref<8x16x16xf32, #tpu.memory_space<vmem>>, vector<8x16x16xf32>,
    %c1_i32 = arith.constant 1 : i32
    %87 = arith.cmpi eq, %arg0, %c1_i32 : i32
    %88 = arith.extui %87 : i1 to i32
    %c0_i32_48 = arith.constant 0 : i32
    %89 = arith.cmpi ne, %88, %c0_i32_48 : i32
    scf.if %89 {
      %c0_49 = arith.constant 0 : index
      %c0_50 = arith.constant 0 : index
      %c0_51 = arith.constant 0 : index
      %90 = vector.load %arg11[%c0_49, %c0_50, %c0_51] : memref<8x16x16xf32, #tpu.memory_space<vmem>>, vector<8x16x16xf32>
      tpu.vector_store %arg11[%c0_49, %c0_50, %c0_51], %85 {strides = array<i32>} : memref<8x16x16xf32, #tpu.memory_space<vmem>>, vector<8x16x16xf32>,
    } else {
    }
    return
  }
  func.func @transform_0(%arg0: i32) -> (i32, i32, i32) {
    %c0_i32 = arith.constant 0 : i32
    %c0_i32_0 = arith.constant 0 : i32
    %c0_i32_1 = arith.constant 0 : i32
    %c0_i32_2 = arith.constant 0 : i32
    return %c0_i32, %c0_i32_0, %c0_i32_1 : i32, i32, i32
  }
  func.func @transform_1(%arg0: i32) -> (i32, i32, i32) {
    %c0_i32 = arith.constant 0 : i32
    %c0_i32_0 = arith.constant 0 : i32
    %c0_i32_1 = arith.constant 0 : i32
    %c0_i32_2 = arith.constant 0 : i32
    return %c0_i32, %c0_i32_0, %c0_i32_1 : i32, i32, i32
  }
  func.func @transform_2(%arg0: i32) -> (i32, i32, i32) {
    %c0_i32 = arith.constant 0 : i32
    %c0_i32_0 = arith.constant 0 : i32
    %c0_i32_1 = arith.constant 0 : i32
    %c0_i32_2 = arith.constant 0 : i32
    return %c0_i32, %c0_i32_0, %c0_i32_1 : i32, i32, i32
  }
  func.func @transform_3(%arg0: i32) -> (i32, i32) {
    %c0_i32 = arith.constant 0 : i32
    %c0_i32_0 = arith.constant 0 : i32
    %c0_i32_1 = arith.constant 0 : i32
    return %c0_i32, %c0_i32_0 : i32, i32
  }
  func.func @transform_4(%arg0: i32) -> (i32, i32) {
    %c0_i32 = arith.constant 0 : i32
    %c0_i32_0 = arith.constant 0 : i32
    %c0_i32_1 = arith.constant 0 : i32
    return %c0_i32, %c0_i32_0 : i32, i32
  }
  func.func @transform_5(%arg0: i32) -> (i32, i32, i32) {
    %c0_i32 = arith.constant 0 : i32
    %c0_i32_0 = arith.constant 0 : i32
    %c0_i32_1 = arith.constant 0 : i32
    return %arg0, %c0_i32, %c0_i32_0 : i32, i32, i32
  }
  func.func @transform_6(%arg0: i32) -> (i32, i32, i32) {
    %c0_i32 = arith.constant 0 : i32
    %c0_i32_0 = arith.constant 0 : i32
    %c0_i32_1 = arith.constant 0 : i32
    return %arg0, %c0_i32, %c0_i32_0 : i32, i32, i32
  }
  func.func @transform_7(%arg0: i32) -> (i32, i32, i32) {
    %c0_i32 = arith.constant 0 : i32
    %c0_i32_0 = arith.constant 0 : i32
    %c0_i32_1 = arith.constant 0 : i32
    return %arg0, %c0_i32, %c0_i32_0 : i32, i32, i32
  }
  func.func @transform_8(%arg0: i32) -> (i32, i32, i32) {
    %c0_i32 = arith.constant 0 : i32
    %c0_i32_0 = arith.constant 0 : i32
    %c0_i32_1 = arith.constant 0 : i32
    return %arg0, %c0_i32, %c0_i32_0 : i32, i32, i32
  }
  func.func @transform_9(%arg0: i32) -> (i32, i32, i32) {
    %c0_i32 = arith.constant 0 : i32
    %c0_i32_0 = arith.constant 0 : i32
    %c0_i32_1 = arith.constant 0 : i32
    return %arg0, %c0_i32, %c0_i32_0 : i32, i32, i32
  }
  func.func @transform_10(%arg0: i32) -> (i32, i32, i32) {
    %c0_i32 = arith.constant 0 : i32
    %c0_i32_0 = arith.constant 0 : i32
    %c0_i32_1 = arith.constant 0 : i32
    %c0_i32_2 = arith.constant 0 : i32
    return %c0_i32, %c0_i32_0, %c0_i32_1 : i32, i32, i32
  }
}

</mosaic_0001>

<llo_original>
// kernel: cascade_net_forward.1
$region0: #{cascade_net_forward.1}
  #allocation0 [shape = 'u32[]', space=smem, size = 0x4, offset = 0x4, fixed_abs, tag = 'smem constant byte address 0x4 - core index']
  #allocation1 [shape = 'u32[144,128]{1,0:T(1,128)}', space=vmem, size = 0x12000, scoped, tag = 'internal scratch']
  #allocation2 [shape = 'f32[8,16,16]{2,1,0:T(8,128)}', space=vmem, size = 0x10000, scoped, tag = 'scratch operand']
  %s0 = inlined_call_operand.vmem [shape: f32[8,16,16], index: 0, kind: input, shape index: {}]
  %s1 = inlined_call_operand.vmem [shape: f32[8,16,16], index: 1, kind: input, shape index: {}]
  %s2 = inlined_call_operand.vmem [shape: f32[8,16,16], index: 2, kind: input, shape index: {}]
  %s3 = inlined_call_operand.vmem [shape: bf16[16,16], index: 3, kind: input, shape index: {}]
  %s4 = inlined_call_operand.vmem [shape: bf16[16,16], index: 4, kind: input, shape index: {}]
  %s5 = inlined_call_operand.vmem [shape: f32[2,16,16], index: 5, kind: input, shape index: {}]
  %s6 = inlined_call_operand.vmem [shape: bf16[2,256,256], index: 6, kind: input, shape index: {}]
  %s7 = inlined_call_operand.vmem [shape: f32[2,1,256], index: 7, kind: input, shape index: {}]
  %s8 = inlined_call_operand.vmem [shape: bf16[2,256,256], index: 8, kind: input, shape index: {}]
  %s9 = inlined_call_operand.vmem [shape: f32[2,1,256], index: 9, kind: input, shape index: {}]
  %s10 = inlined_call_operand.hbm [shape: f32[8,16,16], index: 10, kind: output, shape index: {}]
  %s11 = sld [smem:[#allocation0]]
  $region81: #{cascade_net_forward.1} parent=0
    _
  %s13 = ssub.s32 1, %s11
  %s14 = scalar_select 0, %s13, %s11
  $region1: #{cascade_net_forward.1} parent=0
    #allocation3 [shape = 'u8[65536]{0}', space=vmem, size = 0x10000, scoped, tag = 'output window, operand 0, single buffered']
    #allocation4 [shape = 's32[2]{0}', space=sflag, size = 0x8, scoped, tag = 'scoped memory for cascade_net_forward.1']
    %15 = vsyncpa [#allocation4], 0
    loop: start=0, step=1, limit=4
    $region2: #{cascade_net_forward.1} parent=1 // loop_pre_header
      _
    $region3: #{cascade_net_forward.1} parent=1 // loop_header
      %s17 = sphi 0, %s21
      %p18 = scmp.ge.s32.totalorder %s17, 4
      %s25 = sphi 0, %s25
      %s27 = sphi 0, %s25
      %s28 = sphi 0, %s27
      %s42 = sphi 0, %s28
      %s46 = sphi 0, %s46
      %s48 = sphi 0, %s46
      %s49 = sphi 0, %s48
      %s63 = sphi 0, %s49
      %s67 = sphi 0, %s67
      %s69 = sphi 0, %s67
      %s70 = sphi 0, %s69
      %s84 = sphi 0, %s70
      %s88 = sphi 0, %s88
      %s90 = sphi 0, %s88
      %s91 = sphi 0, %s90
      %s105 = sphi 0, %s91
      %s109 = sphi 0, %s109
      %s111 = sphi 0, %s109
      %s112 = sphi 0, %s111
      %s126 = sphi 0, %s112
      %s132 = sphi 0, %s134
      %s135 = sphi 0, %s132
      %s136 = sphi 0, %s135
      %s152 = sphi 0, %s136
      %s158 = sphi 0, %s160
      %s161 = sphi 0, %s158
      %s162 = sphi 0, %s161
      %s178 = sphi 0, %s162
      %s184 = sphi 0, %s186
      %s187 = sphi 0, %s184
      %s188 = sphi 0, %s187
      %s204 = sphi 0, %s188
      %s210 = sphi 0, %s212
      %s213 = sphi 0, %s210
      %s214 = sphi 0, %s213
      %s230 = sphi 0, %s214
      %s236 = sphi 0, %s238
      %s239 = sphi 0, %s236
      %s240 = sphi 0, %s239
      %s256 = sphi 0, %s240
      %s260 = sphi 0, %s260
      %s262 = sphi 0, %s260
      %s263 = sphi 0, %s262
      %s277 = sphi 0, %s263
    $region4: #{cascade_net_forward.1} parent=1 // loop_header_branch
      %20 = sbr.rel (%p18) target = $region8
    $region5: #{cascade_net_forward.1} parent=1 // loop_body
      %s22 = ssub.s32 %s17, 1
      %s23 = ssub.s32 %s17, 2
      %s24 = sadd.s32 %s17, 1
      %s26 = sadd.s32 %s25, 1
      %p29 = scmp.eq.s32.totalorder %s17, 1
      %p30 = scmp.ne.s32.totalorder %s25, %s27
      %p31 = scmp.eq.s32.totalorder %s17, 0
      %p32 = por %p30, %p31
      %p33 = scmp.ne.s32.totalorder %s25, %s27
      %p34 = scmp.eq.s32.totalorder %s22, 1
      %p35 = por %p33, %p34
      %p36 = scmp.ne.s32.totalorder %s27, %s28
      %p37 = scmp.eq.s32.totalorder %s22, 0
      %p38 = por %p36, %p37
      %p39 = scmp.ne.s32.totalorder %s27, %s28
      %p40 = scmp.eq.s32.totalorder %s23, 1
      %p41 = por %p39, %p40
      %p43 = scmp.ne.s32.totalorder %s28, %s42
      %p44 = scmp.eq.s32.totalorder %s23, 0
      %p45 = por %p43, %p44
      %s47 = sadd.s32 %s46, 1
      %p50 = scmp.eq.s32.totalorder %s17, 1
      %p51 = scmp.ne.s32.totalorder %s46, %s48
      %p52 = scmp.eq.s32.totalorder %s17, 0
      %p53 = por %p51, %p52
      %p54 = scmp.ne.s32.totalorder %s46, %s48
      %p55 = scmp.eq.s32.totalorder %s22, 1
      %p56 = por %p54, %p55
      %p57 = scmp.ne.s32.totalorder %s48, %s49
      %p58 = scmp.eq.s32.totalorder %s22, 0
      %p59 = por %p57, %p58
      %p60 = scmp.ne.s32.totalorder %s48, %s49
      %p61 = scmp.eq.s32.totalorder %s23, 1
      %p62 = por %p60, %p61
      %p64 = scmp.ne.s32.totalorder %s49, %s63
      %p65 = scmp.eq.s32.totalorder %s23, 0
      %p66 = por %p64, %p65
      %s68 = sadd.s32 %s67, 1
      %p71 = scmp.eq.s32.totalorder %s17, 1
      %p72 = scmp.ne.s32.totalorder %s67, %s69
      %p73 = scmp.eq.s32.totalorder %s17, 0
      %p74 = por %p72, %p73
      %p75 = scmp.ne.s32.totalorder %s67, %s69
      %p76 = scmp.eq.s32.totalorder %s22, 1
      %p77 = por %p75, %p76
      %p78 = scmp.ne.s32.totalorder %s69, %s70
      %p79 = scmp.eq.s32.totalorder %s22, 0
      %p80 = por %p78, %p79
      %p81 = scmp.ne.s32.totalorder %s69, %s70
      %p82 = scmp.eq.s32.totalorder %s23, 1
      %p83 = por %p81, %p82
      %p85 = scmp.ne.s32.totalorder %s70, %s84
      %p86 = scmp.eq.s32.totalorder %s23, 0
      %p87 = por %p85, %p86
      %s89 = sadd.s32 %s88, 1
      %p92 = scmp.eq.s32.totalorder %s17, 1
      %p93 = scmp.ne.s32.totalorder %s88, %s90
      %p94 = scmp.eq.s32.totalorder %s17, 0
      %p95 = por %p93, %p94
      %p96 = scmp.ne.s32.totalorder %s88, %s90
      %p97 = scmp.eq.s32.totalorder %s22, 1
      %p98 = por %p96, %p97
      %p99 = scmp.ne.s32.totalorder %s90, %s91
      %p100 = scmp.eq.s32.totalorder %s22, 0
      %p101 = por %p99, %p100
      %p102 = scmp.ne.s32.totalorder %s90, %s91
      %p103 = scmp.eq.s32.totalorder %s23, 1
      %p104 = por %p102, %p103
      %p106 = scmp.ne.s32.totalorder %s91, %s105
      %p107 = scmp.eq.s32.totalorder %s23, 0
      %p108 = por %p106, %p107
      %s110 = sadd.s32 %s109, 1
      %p113 = scmp.eq.s32.totalorder %s17, 1
      %p114 = scmp.ne.s32.totalorder %s109, %s111
      %p115 = scmp.eq.s32.totalorder %s17, 0
      %p116 = por %p114, %p115
      %p117 = scmp.ne.s32.totalorder %s109, %s111
      %p118 = scmp.eq.s32.totalorder %s22, 1
      %p119 = por %p117, %p118
      %p120 = scmp.ne.s32.totalorder %s111, %s112
      %p121 = scmp.eq.s32.totalorder %s22, 0
      %p122 = por %p120, %p121
      %p123 = scmp.ne.s32.totalorder %s111, %s112
      %p124 = scmp.eq.s32.totalorder %s23, 1
      %p125 = por %p123, %p124
      %p127 = scmp.ne.s32.totalorder %s112, %s126
      %p128 = scmp.eq.s32.totalorder %s23, 0
      %p129 = por %p127, %p128
      %s130 = ssub.s32 %s17, %s24
      %p131 = scmp.eq.s32.totalorder %s130, 0
      %s133 = sadd.s32 %s132, 1
      %s134 = scalar_select %p131, %s132, %s133
      %p137 = pneg %p131
      %p138 = scmp.eq.s32.totalorder %s17, 1
      %p139 = por %p137, %p138
      %p140 = scmp.ne.s32.totalorder %s132, %s135
      %p141 = scmp.eq.s32.totalorder %s17, 0
      %p142 = por %p140, %p141
      %p143 = scmp.ne.s32.totalorder %s132, %s135
      %p144 = scmp.eq.s32.totalorder %s22, 1
      %p145 = por %p143, %p144
      %p146 = scmp.ne.s32.totalorder %s135, %s136
      %p147 = scmp.eq.s32.totalorder %s22, 0
      %p148 = por %p146, %p147
      %p149 = scmp.ne.s32.totalorder %s135, %s136
      %p150 = scmp.eq.s32.totalorder %s23, 1
      %p151 = por %p149, %p150
      %p153 = scmp.ne.s32.totalorder %s136, %s152
      %p154 = scmp.eq.s32.totalorder %s23, 0
      %p155 = por %p153, %p154
      %s156 = ssub.s32 %s17, %s24
      %p157 = scmp.eq.s32.totalorder %s156, 0
      %s159 = sadd.s32 %s158, 1
      %s160 = scalar_select %p157, %s158, %s159
      %p163 = pneg %p157
      %p164 = scmp.eq.s32.totalorder %s17, 1
      %p165 = por %p163, %p164
      %p166 = scmp.ne.s32.totalorder %s158, %s161
      %p167 = scmp.eq.s32.totalorder %s17, 0
      %p168 = por %p166, %p167
      %p169 = scmp.ne.s32.totalorder %s158, %s161
      %p170 = scmp.eq.s32.totalorder %s22, 1
      %p171 = por %p169, %p170
      %p172 = scmp.ne.s32.totalorder %s161, %s162
      %p173 = scmp.eq.s32.totalorder %s22, 0
      %p174 = por %p172, %p173
      %p175 = scmp.ne.s32.totalorder %s161, %s162
      %p176 = scmp.eq.s32.totalorder %s23, 1
      %p177 = por %p175, %p176
      %p179 = scmp.ne.s32.totalorder %s162, %s178
      %p180 = scmp.eq.s32.totalorder %s23, 0
      %p181 = por %p179, %p180
      %s182 = ssub.s32 %s17, %s24
      %p183 = scmp.eq.s32.totalorder %s182, 0
      %s185 = sadd.s32 %s184, 1
      %s186 = scalar_select %p183, %s184, %s185
      %p189 = pneg %p183
      %p190 = scmp.eq.s32.totalorder %s17, 1
      %p191 = por %p189, %p190
      %p192 = scmp.ne.s32.totalorder %s184, %s187
      %p193 = scmp.eq.s32.totalorder %s17, 0
      %p194 = por %p192, %p193
      %p195 = scmp.ne.s32.totalorder %s184, %s187
      %p196 = scmp.eq.s32.totalorder %s22, 1
      %p197 = por %p195, %p196
      %p198 = scmp.ne.s32.totalorder %s187, %s188
      %p199 = scmp.eq.s32.totalorder %s22, 0
      %p200 = por %p198, %p199
      %p201 = scmp.ne.s32.totalorder %s187, %s188
      %p202 = scmp.eq.s32.totalorder %s23, 1
      %p203 = por %p201, %p202
      %p205 = scmp.ne.s32.totalorder %s188, %s204
      %p206 = scmp.eq.s32.totalorder %s23, 0
      %p207 = por %p205, %p206
      %s208 = ssub.s32 %s17, %s24
      %p209 = scmp.eq.s32.totalorder %s208, 0
      %s211 = sadd.s32 %s210, 1
      %s212 = scalar_select %p209, %s210, %s211
      %p215 = pneg %p209
      %p216 = scmp.eq.s32.totalorder %s17, 1
      %p217 = por %p215, %p216
      %p218 = scmp.ne.s32.totalorder %s210, %s213
      %p219 = scmp.eq.s32.totalorder %s17, 0
      %p220 = por %p218, %p219
      %p221 = scmp.ne.s32.totalorder %s210, %s213
      %p222 = scmp.eq.s32.totalorder %s22, 1
      %p223 = por %p221, %p222
      %p224 = scmp.ne.s32.totalorder %s213, %s214
      %p225 = scmp.eq.s32.totalorder %s22, 0
      %p226 = por %p224, %p225
      %p227 = scmp.ne.s32.totalorder %s213, %s214
      %p228 = scmp.eq.s32.totalorder %s23, 1
      %p229 = por %p227, %p228
      %p231 = scmp.ne.s32.totalorder %s214, %s230
      %p232 = scmp.eq.s32.totalorder %s23, 0
      %p233 = por %p231, %p232
      %s234 = ssub.s32 %s17, %s24
      %p235 = scmp.eq.s32.totalorder %s234, 0
      %s237 = sadd.s32 %s236, 1
      %s238 = scalar_select %p235, %s236, %s237
      %p241 = pneg %p235
      %p242 = scmp.eq.s32.totalorder %s17, 1
      %p243 = por %p241, %p242
      %p244 = scmp.ne.s32.totalorder %s236, %s239
      %p245 = scmp.eq.s32.totalorder %s17, 0
      %p246 = por %p244, %p245
      %p247 = scmp.ne.s32.totalorder %s236, %s239
      %p248 = scmp.eq.s32.totalorder %s22, 1
      %p249 = por %p247, %p248
      %p250 = scmp.ne.s32.totalorder %s239, %s240
      %p251 = scmp.eq.s32.totalorder %s22, 0
      %p252 = por %p250, %p251
      %p253 = scmp.ne.s32.totalorder %s239, %s240
      %p254 = scmp.eq.s32.totalorder %s23, 1
      %p255 = por %p253, %p254
      %p257 = scmp.ne.s32.totalorder %s240, %s256
      %p258 = scmp.eq.s32.totalorder %s23, 0
      %p259 = por %p257, %p258
      %s261 = sadd.s32 %s260, 1
      %p264 = scmp.eq.s32.totalorder %s17, 1
      %p265 = scmp.ne.s32.totalorder %s260, %s262
      %p266 = scmp.eq.s32.totalorder %s17, 0
      %p267 = por %p265, %p266
      %p268 = scmp.ne.s32.totalorder %s260, %s262
      %p269 = scmp.eq.s32.totalorder %s22, 1
      %p270 = por %p268, %p269
      %p271 = scmp.ne.s32.totalorder %s262, %s263
      %p272 = scmp.eq.s32.totalorder %s22, 0
      %p273 = por %p271, %p272
      %p274 = scmp.ne.s32.totalorder %s262, %s263
      %p275 = scmp.eq.s32.totalorder %s23, 1
      %p276 = por %p274, %p275
      %p278 = scmp.ne.s32.totalorder %s263, %s277
      %p279 = scmp.eq.s32.totalorder %s23, 0
      %p280 = por %p278, %p279
      %p281 = scmp.le.s32.totalorder 1, %s17
      %p282 = scmp.lt.s32.totalorder %s17, 3
      %p283 = pnand %p281, %p282
      %p284 = pneg %p283
      // Predicated region
      $region9: #{cascade_net_forward.1} parent=5 // pred_check
        _
      $region10: #{cascade_net_forward.1} parent=5 // pred_check_branch
        %286 = sbr.rel (%p283) target = $region12
      $region11: #{cascade_net_forward.1} parent=5 // pred_region
        %s287 = ssub.s32 %s17, 1
        // Predicated region
        $region13: #{cascade_net_forward.1} parent=11 // pred_check
          %p288 = pneg %p38
        $region14: #{cascade_net_forward.1} parent=11 // pred_check_branch
          %290 = sbr.rel (%p288) target = $region16
        $region15: #{cascade_net_forward.1} parent=11 // pred_region
          _
        $region16: #{cascade_net_forward.1} parent=11 // pred_fallthru
          _
        // Predicated region
        $region17: #{cascade_net_forward.1} parent=11 // pred_check
          %p291 = pneg %p59
        $region18: #{cascade_net_forward.1} parent=11 // pred_check_branch
          %293 = sbr.rel (%p291) target = $region20
        $region19: #{cascade_net_forward.1} parent=11 // pred_region
          _
        $region20: #{cascade_net_forward.1} parent=11 // pred_fallthru
          _
        // Predicated region
        $region21: #{cascade_net_forward.1} parent=11 // pred_check
          %p294 = pneg %p80
        $region22: #{cascade_net_forward.1} parent=11 // pred_check_branch
          %296 = sbr.rel (%p294) target = $region24
        $region23: #{cascade_net_forward.1} parent=11 // pred_region
          _
        $region24: #{cascade_net_forward.1} parent=11 // pred_fallthru
          _
        // Predicated region
        $region25: #{cascade_net_forward.1} parent=11 // pred_check
          %p297 = pneg %p101
        $region26: #{cascade_net_forward.1} parent=11 // pred_check_branch
          %299 = sbr.rel (%p297) target = $region28
        $region27: #{cascade_net_forward.1} parent=11 // pred_region
          _
        $region28: #{cascade_net_forward.1} parent=11 // pred_fallthru
          _
        // Predicated region
        $region29: #{cascade_net_forward.1} parent=11 // pred_check
          %p300 = pneg %p122
        $region30: #{cascade_net_forward.1} parent=11 // pred_check_branch
          %302 = sbr.rel (%p300) target = $region32
        $region31: #{cascade_net_forward.1} parent=11 // pred_region
          _
        $region32: #{cascade_net_forward.1} parent=11 // pred_fallthru
          _
      $region12: #{cascade_net_forward.1} parent=5 // pred_fallthru
        _
      %p303 = scmp.lt.s32.totalorder %s17, 2
      // Predicated region
      $region33: #{cascade_net_forward.1} parent=5 // pred_check
        %p304 = pneg %p303
      $region34: #{cascade_net_forward.1} parent=5 // pred_check_branch
        %306 = sbr.rel (%p304) target = $region36
      $region35: #{cascade_net_forward.1} parent=5 // pred_region
        // Predicated region
        $region37: #{cascade_net_forward.1} parent=35 // pred_check
          %p307 = pneg %p142
        $region38: #{cascade_net_forward.1} parent=35 // pred_check_branch
          %309 = sbr.rel (%p307) target = $region40
        $region39: #{cascade_net_forward.1} parent=35 // pred_region
          %p310 = scmp.lt.s32.totalorder %s17, 1
          %s311 = scalar_select %p310, %s17, 1
          %s312 = smul.addr %s311, 2
          %s313 = smul.addr %s312, 8
          %s314 = scalar_lea.vmem %s5, %s313
        $region40: #{cascade_net_forward.1} parent=35 // pred_fallthru
          _
        // Predicated region
        $region41: #{cascade_net_forward.1} parent=35 // pred_check
          %p315 = pneg %p168
        $region42: #{cascade_net_forward.1} parent=35 // pred_check_branch
          %317 = sbr.rel (%p315) target = $region44
        $region43: #{cascade_net_forward.1} parent=35 // pred_region
          %p318 = scmp.lt.s32.totalorder %s17, 1
          %s319 = scalar_select %p318, %s17, 1
          %s320 = smul.addr %s319, 64
          %s321 = smul.addr %s320, 4
          %s322 = scalar_lea.vmem %s6, %s321
        $region44: #{cascade_net_forward.1} parent=35 // pred_fallthru
          _
        // Predicated region
        $region45: #{cascade_net_forward.1} parent=35 // pred_check
          %p323 = pneg %p194
        $region46: #{cascade_net_forward.1} parent=35 // pred_check_branch
          %325 = sbr.rel (%p323) target = $region48
        $region47: #{cascade_net_forward.1} parent=35 // pred_region
          %p326 = scmp.lt.s32.totalorder %s17, 1
          %s327 = scalar_select %p326, %s17, 1
          %s328 = smul.addr %s327, 2
          %s329 = scalar_lea.vmem %s7, %s328
        $region48: #{cascade_net_forward.1} parent=35 // pred_fallthru
          _
        // Predicated region
        $region49: #{cascade_net_forward.1} parent=35 // pred_check
          %p330 = pneg %p220
        $region50: #{cascade_net_forward.1} parent=35 // pred_check_branch
          %332 = sbr.rel (%p330) target = $region52
        $region51: #{cascade_net_forward.1} parent=35 // pred_region
          %p333 = scmp.lt.s32.totalorder %s17, 1
          %s334 = scalar_select %p333, %s17, 1
          %s335 = smul.addr %s334, 64
          %s336 = smul.addr %s335, 4
          %s337 = scalar_lea.vmem %s8, %s336
        $region52: #{cascade_net_forward.1} parent=35 // pred_fallthru
          _
        // Predicated region
        $region53: #{cascade_net_forward.1} parent=35 // pred_check
          %p338 = pneg %p246
        $region54: #{cascade_net_forward.1} parent=35 // pred_check_branch
          %340 = sbr.rel (%p338) target = $region56
        $region55: #{cascade_net_forward.1} parent=35 // pred_region
          %p341 = scmp.lt.s32.totalorder %s17, 1
          %s342 = scalar_select %p341, %s17, 1
          %s343 = smul.addr %s342, 2
          %s344 = scalar_lea.vmem %s9, %s343
        $region56: #{cascade_net_forward.1} parent=35 // pred_fallthru
          _
      $region36: #{cascade_net_forward.1} parent=5 // pred_fallthru
        _
      %p345 = scmp.le.s32.totalorder 1, %s17
      %p346 = scmp.lt.s32.totalorder %s17, 3
      %p347 = pnand %p345, %p346
      %p348 = pneg %p347
      // Predicated region
      $region57: #{cascade_net_forward.1} parent=5 // pred_check
        _
      $region58: #{cascade_net_forward.1} parent=5 // pred_check_branch
        %350 = sbr.rel (%p347) target = $region60
      $region59: #{cascade_net_forward.1} parent=5 // pred_region
        %s351 = ssub.s32 %s17, 1
        %p352 = pneg %p38
        %p353 = pneg %p35
        %p354 = pneg %p59
        %p355 = pneg %p56
        %p356 = pneg %p80
        %p357 = pneg %p77
        %p358 = pneg %p101
        %p359 = pneg %p98
        %p360 = pneg %p122
        %p361 = pneg %p119
        %p362 = scmp.lt.s32.totalorder %s22, 1
        %s363 = scalar_select %p362, %s22, 1
        %s364 = smul.addr %s363, 2
        %s365 = smul.addr %s364, 8
        %s366 = scalar_lea.vmem %s5, %s365
        %p367 = pneg %p148
        %p368 = pneg %p145
        %p369 = scmp.lt.s32.totalorder %s22, 1
        %s370 = scalar_select %p369, %s22, 1
        %s371 = smul.addr %s370, 64
        %s372 = smul.addr %s371, 4
        %s373 = scalar_lea.vmem %s6, %s372
        %p374 = pneg %p174
        %p375 = pneg %p171
        %p376 = scmp.lt.s32.totalorder %s22, 1
        %s377 = scalar_select %p376, %s22, 1
        %s378 = smul.addr %s377, 2
        %s379 = scalar_lea.vmem %s7, %s378
        %p380 = pneg %p200
        %p381 = pneg %p197
        %p382 = scmp.lt.s32.totalorder %s22, 1
        %s383 = scalar_select %p382, %s22, 1
        %s384 = smul.addr %s383, 64
        %s385 = smul.addr %s384, 4
        %s386 = scalar_lea.vmem %s8, %s385
        %p387 = pneg %p226
        %p388 = pneg %p223
        %p389 = scmp.lt.s32.totalorder %s22, 1
        %s390 = scalar_select %p389, %s22, 1
        %s391 = smul.addr %s390, 2
        %s392 = scalar_lea.vmem %s9, %s391
        %p393 = pneg %p252
        %p394 = pneg %p249
        %p395 = pneg %p273
        %p396 = pneg %p270
        %p397 = scmp.lt.s32.totalorder %s22, 1
        %s398 = scalar_select %p397, %s22, 1
        %s399 = smul.addr %s398, 2
        %s400 = smul.addr %s399, 8
        %s401 = scalar_lea.vmem %s5, %s400
        %p402 = scmp.lt.s32.totalorder %s22, 1
        %s403 = scalar_select %p402, %s22, 1
        %s404 = smul.addr %s403, 64
        %s405 = smul.addr %s404, 4
        %s406 = scalar_lea.vmem %s6, %s405
        %p407 = scmp.lt.s32.totalorder %s22, 1
        %s408 = scalar_select %p407, %s22, 1
        %s409 = smul.addr %s408, 2
        %s410 = scalar_lea.vmem %s7, %s409
        %p411 = scmp.lt.s32.totalorder %s22, 1
        %s412 = scalar_select %p411, %s22, 1
        %s413 = smul.addr %s412, 64
        %s414 = smul.addr %s413, 4
        %s415 = scalar_lea.vmem %s8, %s414
        %p416 = scmp.lt.s32.totalorder %s22, 1
        %s417 = scalar_select %p416, %s22, 1
        %s418 = smul.addr %s417, 2
        %s419 = scalar_lea.vmem %s9, %s418
        %p421 = scmp.eq.s32.totalorder %s22, 0
        // Predicated region
        $region61: #{cascade_net_forward.1} parent=59 // pred_check
          %p422 = pneg %p421
        $region62: #{cascade_net_forward.1} parent=59 // pred_check_branch
          %424 = sbr.rel (%p422) target = $region64
        $region63: #{cascade_net_forward.1} parent=59 // pred_region
          %v425 = vld [vmem:[%s0] sm:$0xff]
          %v426 = vld [vmem:[%s0 + $0x8] sm:$0xff]
          %v427 = vld [vmem:[%s0 + $0x10] sm:$0xff]
          %v428 = vld [vmem:[%s0 + $0x18] sm:$0xff]
          %v429 = vld [vmem:[%s0 + $0x20] sm:$0xff]
          %v430 = vld [vmem:[%s0 + $0x28] sm:$0xff]
          %v431 = vld [vmem:[%s0 + $0x30] sm:$0xff]
          %v432 = vld [vmem:[%s0 + $0x38] sm:$0xff]
          %v433 = vld [vmem:[%s0 + $0x40] sm:$0xff]
          %v434 = vld [vmem:[%s0 + $0x48] sm:$0xff]
          %v435 = vld [vmem:[%s0 + $0x50] sm:$0xff]
          %v436 = vld [vmem:[%s0 + $0x58] sm:$0xff]
          %v437 = vld [vmem:[%s0 + $0x60] sm:$0xff]
          %v438 = vld [vmem:[%s0 + $0x68] sm:$0xff]
          %v439 = vld [vmem:[%s0 + $0x70] sm:$0xff]
          %v440 = vld [vmem:[%s0 + $0x78] sm:$0xff]
          %vm441 = vcmask 130048
          %442 = vst.msk [vmem:[#allocation2] sm:$0xff] %vm441, %v425
          %443 = vst.msk [vmem:[#allocation2 + $0x8] sm:$0xff] %vm441, %v426
          %444 = vst.msk [vmem:[#allocation2 + $0x10] sm:$0xff] %vm441, %v427
          %445 = vst.msk [vmem:[#allocation2 + $0x18] sm:$0xff] %vm441, %v428
          %446 = vst.msk [vmem:[#allocation2 + $0x20] sm:$0xff] %vm441, %v429
          %447 = vst.msk [vmem:[#allocation2 + $0x28] sm:$0xff] %vm441, %v430
          %448 = vst.msk [vmem:[#allocation2 + $0x30] sm:$0xff] %vm441, %v431
          %449 = vst.msk [vmem:[#allocation2 + $0x38] sm:$0xff] %vm441, %v432
          %450 = vst.msk [vmem:[#allocation2 + $0x40] sm:$0xff] %vm441, %v433
          %451 = vst.msk [vmem:[#allocation2 + $0x48] sm:$0xff] %vm441, %v434
          %452 = vst.msk [vmem:[#allocation2 + $0x50] sm:$0xff] %vm441, %v435
          %453 = vst.msk [vmem:[#allocation2 + $0x58] sm:$0xff] %vm441, %v436
          %454 = vst.msk [vmem:[#allocation2 + $0x60] sm:$0xff] %vm441, %v437
          %455 = vst.msk [vmem:[#allocation2 + $0x68] sm:$0xff] %vm441, %v438
          %456 = vst.msk [vmem:[#allocation2 + $0x70] sm:$0xff] %vm441, %v439
          %457 = vst.msk [vmem:[#allocation2 + $0x78] sm:$0xff] %vm441, %v440
        $region64: #{cascade_net_forward.1} parent=59 // pred_fallthru
          _
        %v458 = vld [vmem:[#allocation2] sm:$0xff]
        %v459 = vld [vmem:[#allocation2 + $0x8] sm:$0xff]
        %v460 = vld [vmem:[#allocation2 + $0x10] sm:$0xff]
        %v461 = vld [vmem:[#allocation2 + $0x18] sm:$0xff]
        %v462 = vld [vmem:[#allocation2 + $0x20] sm:$0xff]
        %v463 = vld [vmem:[#allocation2 + $0x28] sm:$0xff]
        %v464 = vld [vmem:[#allocation2 + $0x30] sm:$0xff]
        %v465 = vld [vmem:[#allocation2 + $0x38] sm:$0xff]
        %v466 = vld [vmem:[#allocation2 + $0x40] sm:$0xff]
        %v467 = vld [vmem:[#allocation2 + $0x48] sm:$0xff]
        %v468 = vld [vmem:[#allocation2 + $0x50] sm:$0xff]
        %v469 = vld [vmem:[#allocation2 + $0x58] sm:$0xff]
        %v470 = vld [vmem:[#allocation2 + $0x60] sm:$0xff]
        %v471 = vld [vmem:[#allocation2 + $0x68] sm:$0xff]
        %v472 = vld [vmem:[#allocation2 + $0x70] sm:$0xff]
        %v473 = vld [vmem:[#allocation2 + $0x78] sm:$0xff]
        %v474 = vpack.c.bf16 %v459, %v458
        %v475 = vpack.c.bf16 %v461, %v460
        %v476 = vpack.c.bf16 %v463, %v462
        %v477 = vpack.c.bf16 %v465, %v464
        %v478 = vpack.c.bf16 %v467, %v466
        %v479 = vpack.c.bf16 %v469, %v468
        %v480 = vpack.c.bf16 %v471, %v470
        %v481 = vpack.c.bf16 %v473, %v472
        %v484 = vpack.i.b16 %v475, %v474
        %v486 = vshrl.u32 %v474, 16
        %v487 = vshrl.u32 %v475, 16
        %v488 = vpack.i.b16 %v487, %v486
        %v492 = vpack.i.b16 %v477, %v476
        %v494 = vshrl.u32 %v476, 16
        %v495 = vshrl.u32 %v477, 16
        %v496 = vpack.i.b16 %v495, %v494
        %v500 = vpack.i.b16 %v479, %v478
        %v502 = vshrl.u32 %v478, 16
        %v503 = vshrl.u32 %v479, 16
        %v504 = vpack.i.b16 %v503, %v502
        %v508 = vpack.i.b16 %v481, %v480
        %v510 = vshrl.u32 %v480, 16
        %v511 = vshrl.u32 %v481, 16
        %v512 = vpack.i.b16 %v511, %v510
        %v514 = vcombine.low %v484, %v500
        %v515 = vcombine.high %v484, %v500
        %v517 = vunpack.c.l.s4 1983009808
        %v518 = vunpack.c.0.s8 %v517
        %v519 = vlaneseq
        %v520 = vshrl.u32 %v519, 7
        %v521 = vsub.s32 %v518, %v520
        %v522 = vrot.slane %v514, %v521
        %v524 = vunpack.c.l.s4 1983009808
        %v525 = vunpack.c.0.s8 %v524
        %v526 = vlaneseq
        %v527 = vshrl.u32 %v526, 7
        %v528 = vsub.s32 %v525, %v527
        %v529 = vrot.slane %v515, %v528
        %v530 = vcombine.low %v492, %v508
        %v531 = vcombine.high %v492, %v508
        %v533 = vunpack.c.l.s4 1983009808
        %v534 = vunpack.c.0.s8 %v533
        %v535 = vlaneseq
        %v536 = vshrl.u32 %v535, 7
        %v537 = vsub.s32 %v534, %v536
        %v538 = vrot.slane %v530, %v537
        %v540 = vunpack.c.l.s4 1983009808
        %v541 = vunpack.c.0.s8 %v540
        %v542 = vlaneseq
        %v543 = vshrl.u32 %v542, 7
        %v544 = vsub.s32 %v541, %v543
        %v545 = vrot.slane %v531, %v544
        %v546 = vcombine.low %v522, %v538
        %v547 = vcombine.high %v522, %v538
        %v549 = vunpack.c.l.s4 1934713408
        %v550 = vunpack.c.0.s8 %v549
        %v551 = vlaneseq
        %v552 = vshrl.u32 %v551, 7
        %v553 = vsub.s32 %v550, %v552
        %v554 = vrot.slane %v546, %v553
        %v556 = vunpack.c.l.s4 1934713408
        %v557 = vunpack.c.0.s8 %v556
        %v558 = vlaneseq
        %v559 = vshrl.u32 %v558, 7
        %v560 = vsub.s32 %v557, %v559
        %v561 = vrot.slane %v547, %v560
        %v562 = vcombine.low %v529, %v545
        %v563 = vcombine.high %v529, %v545
        %v565 = vunpack.c.l.s4 1934713408
        %v566 = vunpack.c.0.s8 %v565
        %v567 = vlaneseq
        %v568 = vshrl.u32 %v567, 7
        %v569 = vsub.s32 %v566, %v568
        %v570 = vrot.slane %v562, %v569
        %v572 = vunpack.c.l.s4 1934713408
        %v573 = vunpack.c.0.s8 %v572
        %v574 = vlaneseq
        %v575 = vshrl.u32 %v574, 7
        %v576 = vsub.s32 %v573, %v575
        %v577 = vrot.slane %v563, %v576
        %v578 = vcombine.high %v554, 0
        %v579 = vcombine.high %v561, 0
        %v580 = vcombine.high %v570, 0
        %v581 = vcombine.high %v577, 0
        %v582 = vcombine.low %v488, %v504
        %v583 = vcombine.high %v488, %v504
        %v585 = vunpack.c.l.s4 1983009808
        %v586 = vunpack.c.0.s8 %v585
        %v587 = vlaneseq
        %v588 = vshrl.u32 %v587, 7
        %v589 = vsub.s32 %v586, %v588
        %v590 = vrot.slane %v582, %v589
        %v592 = vunpack.c.l.s4 1983009808
        %v593 = vunpack.c.0.s8 %v592
        %v594 = vlaneseq
        %v595 = vshrl.u32 %v594, 7
        %v596 = vsub.s32 %v593, %v595
        %v597 = vrot.slane %v583, %v596
        %v598 = vcombine.low %v496, %v512
        %v599 = vcombine.high %v496, %v512
        %v601 = vunpack.c.l.s4 1983009808
        %v602 = vunpack.c.0.s8 %v601
        %v603 = vlaneseq
        %v604 = vshrl.u32 %v603, 7
        %v605 = vsub.s32 %v602, %v604
        %v606 = vrot.slane %v598, %v605
        %v608 = vunpack.c.l.s4 1983009808
        %v609 = vunpack.c.0.s8 %v608
        %v610 = vlaneseq
        %v611 = vshrl.u32 %v610, 7
        %v612 = vsub.s32 %v609, %v611
        %v613 = vrot.slane %v599, %v612
        %v614 = vcombine.low %v590, %v606
        %v615 = vcombine.high %v590, %v606
        %v617 = vunpack.c.l.s4 1934713408
        %v618 = vunpack.c.0.s8 %v617
        %v619 = vlaneseq
        %v620 = vshrl.u32 %v619, 7
        %v621 = vsub.s32 %v618, %v620
        %v622 = vrot.slane %v614, %v621
        %v624 = vunpack.c.l.s4 1934713408
        %v625 = vunpack.c.0.s8 %v624
        %v626 = vlaneseq
        %v627 = vshrl.u32 %v626, 7
        %v628 = vsub.s32 %v625, %v627
        %v629 = vrot.slane %v615, %v628
        %v630 = vcombine.low %v597, %v613
        %v631 = vcombine.high %v597, %v613
        %v633 = vunpack.c.l.s4 1934713408
        %v634 = vunpack.c.0.s8 %v633
        %v635 = vlaneseq
        %v636 = vshrl.u32 %v635, 7
        %v637 = vsub.s32 %v634, %v636
        %v638 = vrot.slane %v630, %v637
        %v640 = vunpack.c.l.s4 1934713408
        %v641 = vunpack.c.0.s8 %v640
        %v642 = vlaneseq
        %v643 = vshrl.u32 %v642, 7
        %v644 = vsub.s32 %v641, %v643
        %v645 = vrot.slane %v631, %v644
        %v646 = vcombine.high %v622, 0
        %v647 = vcombine.high %v629, 0
        %v648 = vcombine.high %v638, 0
        %v649 = vcombine.high %v645, 0
        %651 = vrot.lane.b32.xlu0 %v622, 16
        %v652 = vpop.permute.xlu0 %651
        %654 = vrot.lane.b32.xlu0 %v578, 32
        %v655 = vpop.permute.xlu0 %654
        %657 = vrot.lane.b32.xlu0 %v646, 48
        %v658 = vpop.permute.xlu0 %657
        %660 = vrot.lane.b32.xlu0 %v561, 64
        %v661 = vpop.permute.xlu0 %660
        %663 = vrot.lane.b32.xlu0 %v629, 80
        %v664 = vpop.permute.xlu0 %663
        %666 = vrot.lane.b32.xlu0 %v579, 96
        %v667 = vpop.permute.xlu0 %666
        %669 = vrot.lane.b32.xlu0 %v647, 112
        %v670 = vpop.permute.xlu0 %669
        %672 = vrot.lane.b32.xlu0 %v638, 16
        %v673 = vpop.permute.xlu0 %672
        %675 = vrot.lane.b32.xlu0 %v580, 32
        %v676 = vpop.permute.xlu0 %675
        %678 = vrot.lane.b32.xlu0 %v648, 48
        %v679 = vpop.permute.xlu0 %678
        %681 = vrot.lane.b32.xlu0 %v577, 64
        %v682 = vpop.permute.xlu0 %681
        %684 = vrot.lane.b32.xlu0 %v645, 80
        %v685 = vpop.permute.xlu0 %684
        %687 = vrot.lane.b32.xlu0 %v581, 96
        %v688 = vpop.permute.xlu0 %687
        %690 = vrot.lane.b32.xlu0 %v649, 112
        %v691 = vpop.permute.xlu0 %690
        %vm692 = vcmask 130048
        %v695 = vsel %vm692, %v554, %v652
        %vm696 = vcmask 261120
        %v698 = vsel %vm696, %v695, %v655
        %vm699 = vcmask 392192
        %v701 = vsel %vm699, %v698, %v658
        %vm702 = vcmask 523264
        %v704 = vsel %vm702, %v701, %v661
        %vm705 = vcmask 654336
        %v707 = vsel %vm705, %v704, %v664
        %vm708 = vcmask 785408
        %v710 = vsel %vm708, %v707, %v667
        %vm711 = vcmask 916480
        %v713 = vsel %vm711, %v710, %v670
        %v717 = vsel %vm692, %v570, %v673
        %v719 = vsel %vm696, %v717, %v676
        %v721 = vsel %vm699, %v719, %v679
        %v723 = vsel %vm702, %v721, %v682
        %v725 = vsel %vm705, %v723, %v685
        %v727 = vsel %vm708, %v725, %v688
        %v729 = vsel %vm711, %v727, %v691
        %v731 = vld [vmem:[%s406] sm:$0xff]
        %v732 = vld [vmem:[%s406 + $0x8] sm:$0xff]
        %v733 = vld [vmem:[%s406 + $0x10] sm:$0xff]
        %v734 = vld [vmem:[%s406 + $0x18] sm:$0xff]
        %v735 = vld [vmem:[%s406 + $0x20] sm:$0xff]
        %v736 = vld [vmem:[%s406 + $0x28] sm:$0xff]
        %v737 = vld [vmem:[%s406 + $0x30] sm:$0xff]
        %v738 = vld [vmem:[%s406 + $0x38] sm:$0xff]
        %v739 = vld [vmem:[%s406 + $0x40] sm:$0xff]
        %v740 = vld [vmem:[%s406 + $0x48] sm:$0xff]
        %v741 = vld [vmem:[%s406 + $0x50] sm:$0xff]
        %v742 = vld [vmem:[%s406 + $0x58] sm:$0xff]
        %v743 = vld [vmem:[%s406 + $0x60] sm:$0xff]
        %v744 = vld [vmem:[%s406 + $0x68] sm:$0xff]
        %v745 = vld [vmem:[%s406 + $0x70] sm:$0xff]
        %v746 = vld [vmem:[%s406 + $0x78] sm:$0xff]
        %v747 = vld [vmem:[%s406 + $0x80] sm:$0xff]
        %v748 = vld [vmem:[%s406 + $0x88] sm:$0xff]
        %v749 = vld [vmem:[%s406 + $0x90] sm:$0xff]
        %v750 = vld [vmem:[%s406 + $0x98] sm:$0xff]
        %v751 = vld [vmem:[%s406 + $0xa0] sm:$0xff]
        %v752 = vld [vmem:[%s406 + $0xa8] sm:$0xff]
        %v753 = vld [vmem:[%s406 + $0xb0] sm:$0xff]
        %v754 = vld [vmem:[%s406 + $0xb8] sm:$0xff]
        %v755 = vld [vmem:[%s406 + $0xc0] sm:$0xff]
        %v756 = vld [vmem:[%s406 + $0xc8] sm:$0xff]
        %v757 = vld [vmem:[%s406 + $0xd0] sm:$0xff]
        %v758 = vld [vmem:[%s406 + $0xd8] sm:$0xff]
        %v759 = vld [vmem:[%s406 + $0xe0] sm:$0xff]
        %v760 = vld [vmem:[%s406 + $0xe8] sm:$0xff]
        %v761 = vld [vmem:[%s406 + $0xf0] sm:$0xff]
        %v762 = vld [vmem:[%s406 + $0xf8] sm:$0xff]
        %v763 = vld [vmem:[%s410] sm:$0x3]
        %v765 = vlaneseq
        %v766 = vshrl.u32 %v765, 7
        %v767 = vsub.s32 0, %v766
        %v768 = vrot.slane %v763, %v767
        %v769 = vlaneseq
        %v770 = vshrl.u32 %v769, 7
        %v771 = vsub.s32 1, %v770
        %v772 = vrot.slane %v763, %v771
        %v807 = vunpack.c.l.b16 %v731
        %v808 = vunpack.c.h.b16 %v731
        %v809 = vunpack.c.l.b16 %v732
        %v810 = vunpack.c.h.b16 %v732
        %v811 = vunpack.c.l.b16 %v733
        %v812 = vunpack.c.h.b16 %v733
        %v813 = vunpack.c.l.b16 %v734
        %v814 = vunpack.c.h.b16 %v734
        %v815 = vunpack.c.l.b16 %v735
        %v816 = vunpack.c.h.b16 %v735
        %v817 = vunpack.c.l.b16 %v736
        %v818 = vunpack.c.h.b16 %v736
        %v819 = vunpack.c.l.b16 %v737
        %v820 = vunpack.c.h.b16 %v737
        %v821 = vunpack.c.l.b16 %v738
        %v822 = vunpack.c.h.b16 %v738
        %v823 = vunpack.c.l.b16 %v739
        %v824 = vunpack.c.h.b16 %v739
        %v825 = vunpack.c.l.b16 %v740
        %v826 = vunpack.c.h.b16 %v740
        %v827 = vunpack.c.l.b16 %v741
        %v828 = vunpack.c.h.b16 %v741
        %v829 = vunpack.c.l.b16 %v742
        %v830 = vunpack.c.h.b16 %v742
        %v831 = vunpack.c.l.b16 %v743
        %v832 = vunpack.c.h.b16 %v743
        %v833 = vunpack.c.l.b16 %v744
        %v834 = vunpack.c.h.b16 %v744
        %v835 = vunpack.c.l.b16 %v745
        %v836 = vunpack.c.h.b16 %v745
        %v837 = vunpack.c.l.b16 %v746
        %v838 = vunpack.c.h.b16 %v746
        %v839 = vunpack.c.l.b16 %v747
        %v840 = vunpack.c.h.b16 %v747
        %v841 = vunpack.c.l.b16 %v748
        %v842 = vunpack.c.h.b16 %v748
        %v843 = vunpack.c.l.b16 %v749
        %v844 = vunpack.c.h.b16 %v749
        %v845 = vunpack.c.l.b16 %v750
        %v846 = vunpack.c.h.b16 %v750
        %v847 = vunpack.c.l.b16 %v751
        %v848 = vunpack.c.h.b16 %v751
        %v849 = vunpack.c.l.b16 %v752
        %v850 = vunpack.c.h.b16 %v752
        %v851 = vunpack.c.l.b16 %v753
        %v852 = vunpack.c.h.b16 %v753
        %v853 = vunpack.c.l.b16 %v754
        %v854 = vunpack.c.h.b16 %v754
        %v855 = vunpack.c.l.b16 %v755
        %v856 = vunpack.c.h.b16 %v755
        %v857 = vunpack.c.l.b16 %v756
        %v858 = vunpack.c.h.b16 %v756
        %v859 = vunpack.c.l.b16 %v757
        %v860 = vunpack.c.h.b16 %v757
        %v861 = vunpack.c.l.b16 %v758
        %v862 = vunpack.c.h.b16 %v758
        %v863 = vunpack.c.l.b16 %v759
        %v864 = vunpack.c.h.b16 %v759
        %v865 = vunpack.c.l.b16 %v760
        %v866 = vunpack.c.h.b16 %v760
        %v867 = vunpack.c.l.b16 %v761
        %v868 = vunpack.c.h.b16 %v761
        %v869 = vunpack.c.l.b16 %v762
        %v870 = vunpack.c.h.b16 %v762
        %v871 = vpack.c.b16 %v809, %v807
        %v872 = vpack.c.b16 %v810, %v808
        %v873 = vpack.c.b16 %v813, %v811
        %v874 = vpack.c.b16 %v814, %v812
        %v875 = vpack.c.b16 %v817, %v815
        %v876 = vpack.c.b16 %v818, %v816
        %v877 = vpack.c.b16 %v821, %v819
        %v878 = vpack.c.b16 %v822, %v820
        %v879 = vpack.c.b16 %v825, %v823
        %v880 = vpack.c.b16 %v826, %v824
        %v881 = vpack.c.b16 %v829, %v827
        %v882 = vpack.c.b16 %v830, %v828
        %v883 = vpack.c.b16 %v833, %v831
        %v884 = vpack.c.b16 %v834, %v832
        %v885 = vpack.c.b16 %v837, %v835
        %v886 = vpack.c.b16 %v838, %v836
        %v887 = vpack.c.b16 %v841, %v839
        %v888 = vpack.c.b16 %v842, %v840
        %v889 = vpack.c.b16 %v845, %v843
        %v890 = vpack.c.b16 %v846, %v844
        %v891 = vpack.c.b16 %v849, %v847
        %v892 = vpack.c.b16 %v850, %v848
        %v893 = vpack.c.b16 %v853, %v851
        %v894 = vpack.c.b16 %v854, %v852
        %v895 = vpack.c.b16 %v857, %v855
        %v896 = vpack.c.b16 %v858, %v856
        %v897 = vpack.c.b16 %v861, %v859
        %v898 = vpack.c.b16 %v862, %v860
        %v899 = vpack.c.b16 %v865, %v863
        %v900 = vpack.c.b16 %v866, %v864
        %v901 = vpack.c.b16 %v869, %v867
        %v902 = vpack.c.b16 %v870, %v868
        %935 = vmatprep.subr.bf16.mxu0 %v886
        %936 = vmatpush1.bf16.msra.mxu0 %v885
        %937 = vmatprep.subr.bf16.mxu0 %v884
        %938 = vmatpush1.bf16.msra.mxu0 %v883
        %939 = vmatprep.subr.bf16.mxu0 %v882
        %940 = vmatpush1.bf16.msra.mxu0 %v881
        %941 = vmatprep.subr.bf16.mxu0 %v880
        %942 = vmatpush1.bf16.msra.mxu0 %v879
        %943 = vmatprep.subr.bf16.mxu0 %v878
        %944 = vmatpush1.bf16.msra.mxu0 %v877
        %945 = vmatprep.subr.bf16.mxu0 %v876
        %946 = vmatpush1.bf16.msra.mxu0 %v875
        %947 = vmatprep.subr.bf16.mxu0 %v874
        %948 = vmatpush1.bf16.msra.mxu0 %v873
        %949 = vmatprep.subr.bf16.mxu0 %v872
        %950 = vmatpush1.bf16.msra.mxu0 %v871
        %951 = vmatprep.subr.bf16.mxu0 %v902
        %952 = vmatpush2.bf16.msra.mxu0 %v901
        %953 = vmatprep.subr.bf16.mxu0 %v900
        %954 = vmatpush2.bf16.msra.mxu0 %v899
        %955 = vmatprep.subr.bf16.mxu0 %v898
        %956 = vmatpush2.bf16.msra.mxu0 %v897
        %957 = vmatprep.subr.bf16.mxu0 %v896
        %958 = vmatpush2.bf16.msra.mxu0 %v895
        %959 = vmatprep.subr.bf16.mxu0 %v894
        %960 = vmatpush2.bf16.msra.mxu0 %v893
        %961 = vmatprep.subr.bf16.mxu0 %v892
        %962 = vmatpush2.bf16.msra.mxu0 %v891
        %963 = vmatprep.subr.bf16.mxu0 %v890
        %964 = vmatpush2.bf16.msra.mxu0 %v889
        %965 = vmatprep.subr.bf16.mxu0 %v888
        %966 = vmatpush2.bf16.msra.mxu0 %v887
        %967 = vmatprep.mubr.bf16.mxu0 %v729
        %968 = vmatmul.mubr.bf16.gmra.mxu0 %v713
        %v969 = vpop.f32.mrf.mxu0
        %v970 = vadd.f32 %v768, %v969
        %v971 = vpop.f32.mrf.mxu0
        %v972 = vadd.f32 %v772, %v971
        %v973 = vpop.f32.mrf.mxu0
        %v974 = vpop.f32.mrf.mxu0
        %975 = vdwg.mxu0
        %v976 = vmul.f32 %v970, %v970
        %v977 = vmul.f32 %v972, %v972
        %v978 = vmul.f32 %v970, %v976
        %v979 = vmul.f32 %v972, %v977
        %v980 = vmul.f32 %v978, 0.044715
        %v981 = vmul.f32 %v979, 0.044715
        %v982 = vadd.f32 %v970, %v980
        %v983 = vadd.f32 %v972, %v981
        %v984 = vmul.f32 %v982, 0.7978846
        %v985 = vmul.f32 %v983, 0.7978846
        %v986 = vtanh.pop %v984
        %v987 = vtanh.pop %v985
        %v988 = vadd.f32 %v986, 1.0
        %v989 = vadd.f32 %v987, 1.0
        %v990 = vmul.f32 %v988, 0.5
        %v991 = vmul.f32 %v989, 0.5
        %v992 = vmul.f32 %v970, %v990
        %v993 = vmul.f32 %v972, %v991
        %v994 = vpack.c.bf16 %v992, %v992
        %v995 = vpack.c.bf16 %v993, %v993
        %v996 = vld [vmem:[%s415] sm:$0xff]
        %v997 = vld [vmem:[%s415 + $0x8] sm:$0xff]
        %v998 = vld [vmem:[%s415 + $0x10] sm:$0xff]
        %v999 = vld [vmem:[%s415 + $0x18] sm:$0xff]
        %v1000 = vld [vmem:[%s415 + $0x20] sm:$0xff]
        %v1001 = vld [vmem:[%s415 + $0x28] sm:$0xff]
        %v1002 = vld [vmem:[%s415 + $0x30] sm:$0xff]
        %v1003 = vld [vmem:[%s415 + $0x38] sm:$0xff]
        %v1004 = vld [vmem:[%s415 + $0x40] sm:$0xff]
        %v1005 = vld [vmem:[%s415 + $0x48] sm:$0xff]
        %v1006 = vld [vmem:[%s415 + $0x50] sm:$0xff]
        %v1007 = vld [vmem:[%s415 + $0x58] sm:$0xff]
        %v1008 = vld [vmem:[%s415 + $0x60] sm:$0xff]
        %v1009 = vld [vmem:[%s415 + $0x68] sm:$0xff]
        %v1010 = vld [vmem:[%s415 + $0x70] sm:$0xff]
        %v1011 = vld [vmem:[%s415 + $0x78] sm:$0xff]
        %v1012 = vld [vmem:[%s415 + $0x80] sm:$0xff]
        %v1013 = vld [vmem:[%s415 + $0x88] sm:$0xff]
        %v1014 = vld [vmem:[%s415 + $0x90] sm:$0xff]
        %v1015 = vld [vmem:[%s415 + $0x98] sm:$0xff]
        %v1016 = vld [vmem:[%s415 + $0xa0] sm:$0xff]
        %v1017 = vld [vmem:[%s415 + $0xa8] sm:$0xff]
        %v1018 = vld [vmem:[%s415 + $0xb0] sm:$0xff]
        %v1019 = vld [vmem:[%s415 + $0xb8] sm:$0xff]
        %v1020 = vld [vmem:[%s415 + $0xc0] sm:$0xff]
        %v1021 = vld [vmem:[%s415 + $0xc8] sm:$0xff]
        %v1022 = vld [vmem:[%s415 + $0xd0] sm:$0xff]
        %v1023 = vld [vmem:[%s415 + $0xd8] sm:$0xff]
        %v1024 = vld [vmem:[%s415 + $0xe0] sm:$0xff]
        %v1025 = vld [vmem:[%s415 + $0xe8] sm:$0xff]
        %v1026 = vld [vmem:[%s415 + $0xf0] sm:$0xff]
        %v1027 = vld [vmem:[%s415 + $0xf8] sm:$0xff]
        %v1028 = vld [vmem:[%s419] sm:$0x3]
        %v1030 = vlaneseq
        %v1031 = vshrl.u32 %v1030, 7
        %v1032 = vsub.s32 0, %v1031
        %v1033 = vrot.slane %v1028, %v1032
        %v1034 = vlaneseq
        %v1035 = vshrl.u32 %v1034, 7
        %v1036 = vsub.s32 1, %v1035
        %v1037 = vrot.slane %v1028, %v1036
        %v1072 = vunpack.c.l.b16 %v996
        %v1073 = vunpack.c.h.b16 %v996
        %v1074 = vunpack.c.l.b16 %v997
        %v1075 = vunpack.c.h.b16 %v997
        %v1076 = vunpack.c.l.b16 %v998
        %v1077 = vunpack.c.h.b16 %v998
        %v1078 = vunpack.c.l.b16 %v999
        %v1079 = vunpack.c.h.b16 %v999
        %v1080 = vunpack.c.l.b16 %v1000
        %v1081 = vunpack.c.h.b16 %v1000
        %v1082 = vunpack.c.l.b16 %v1001
        %v1083 = vunpack.c.h.b16 %v1001
        %v1084 = vunpack.c.l.b16 %v1002
        %v1085 = vunpack.c.h.b16 %v1002
        %v1086 = vunpack.c.l.b16 %v1003
        %v1087 = vunpack.c.h.b16 %v1003
        %v1088 = vunpack.c.l.b16 %v1004
        %v1089 = vunpack.c.h.b16 %v1004
        %v1090 = vunpack.c.l.b16 %v1005
        %v1091 = vunpack.c.h.b16 %v1005
        %v1092 = vunpack.c.l.b16 %v1006
        %v1093 = vunpack.c.h.b16 %v1006
        %v1094 = vunpack.c.l.b16 %v1007
        %v1095 = vunpack.c.h.b16 %v1007
        %v1096 = vunpack.c.l.b16 %v1008
        %v1097 = vunpack.c.h.b16 %v1008
        %v1098 = vunpack.c.l.b16 %v1009
        %v1099 = vunpack.c.h.b16 %v1009
        %v1100 = vunpack.c.l.b16 %v1010
        %v1101 = vunpack.c.h.b16 %v1010
        %v1102 = vunpack.c.l.b16 %v1011
        %v1103 = vunpack.c.h.b16 %v1011
        %v1104 = vunpack.c.l.b16 %v1012
        %v1105 = vunpack.c.h.b16 %v1012
        %v1106 = vunpack.c.l.b16 %v1013
        %v1107 = vunpack.c.h.b16 %v1013
        %v1108 = vunpack.c.l.b16 %v1014
        %v1109 = vunpack.c.h.b16 %v1014
        %v1110 = vunpack.c.l.b16 %v1015
        %v1111 = vunpack.c.h.b16 %v1015
        %v1112 = vunpack.c.l.b16 %v1016
        %v1113 = vunpack.c.h.b16 %v1016
        %v1114 = vunpack.c.l.b16 %v1017
        %v1115 = vunpack.c.h.b16 %v1017
        %v1116 = vunpack.c.l.b16 %v1018
        %v1117 = vunpack.c.h.b16 %v1018
        %v1118 = vunpack.c.l.b16 %v1019
        %v1119 = vunpack.c.h.b16 %v1019
        %v1120 = vunpack.c.l.b16 %v1020
        %v1121 = vunpack.c.h.b16 %v1020
        %v1122 = vunpack.c.l.b16 %v1021
        %v1123 = vunpack.c.h.b16 %v1021
        %v1124 = vunpack.c.l.b16 %v1022
        %v1125 = vunpack.c.h.b16 %v1022
        %v1126 = vunpack.c.l.b16 %v1023
        %v1127 = vunpack.c.h.b16 %v1023
        %v1128 = vunpack.c.l.b16 %v1024
        %v1129 = vunpack.c.h.b16 %v1024
        %v1130 = vunpack.c.l.b16 %v1025
        %v1131 = vunpack.c.h.b16 %v1025
        %v1132 = vunpack.c.l.b16 %v1026
        %v1133 = vunpack.c.h.b16 %v1026
        %v1134 = vunpack.c.l.b16 %v1027
        %v1135 = vunpack.c.h.b16 %v1027
        %v1136 = vpack.c.b16 %v1074, %v1072
        %v1137 = vpack.c.b16 %v1075, %v1073
        %v1138 = vpack.c.b16 %v1078, %v1076
        %v1139 = vpack.c.b16 %v1079, %v1077
        %v1140 = vpack.c.b16 %v1082, %v1080
        %v1141 = vpack.c.b16 %v1083, %v1081
        %v1142 = vpack.c.b16 %v1086, %v1084
        %v1143 = vpack.c.b16 %v1087, %v1085
        %v1144 = vpack.c.b16 %v1090, %v1088
        %v1145 = vpack.c.b16 %v1091, %v1089
        %v1146 = vpack.c.b16 %v1094, %v1092
        %v1147 = vpack.c.b16 %v1095, %v1093
        %v1148 = vpack.c.b16 %v1098, %v1096
        %v1149 = vpack.c.b16 %v1099, %v1097
        %v1150 = vpack.c.b16 %v1102, %v1100
        %v1151 = vpack.c.b16 %v1103, %v1101
        %v1152 = vpack.c.b16 %v1106, %v1104
        %v1153 = vpack.c.b16 %v1107, %v1105
        %v1154 = vpack.c.b16 %v1110, %v1108
        %v1155 = vpack.c.b16 %v1111, %v1109
        %v1156 = vpack.c.b16 %v1114, %v1112
        %v1157 = vpack.c.b16 %v1115, %v1113
        %v1158 = vpack.c.b16 %v1118, %v1116
        %v1159 = vpack.c.b16 %v1119, %v1117
        %v1160 = vpack.c.b16 %v1122, %v1120
        %v1161 = vpack.c.b16 %v1123, %v1121
        %v1162 = vpack.c.b16 %v1126, %v1124
        %v1163 = vpack.c.b16 %v1127, %v1125
        %v1164 = vpack.c.b16 %v1130, %v1128
        %v1165 = vpack.c.b16 %v1131, %v1129
        %v1166 = vpack.c.b16 %v1134, %v1132
        %v1167 = vpack.c.b16 %v1135, %v1133
        %1200 = vmatprep.subr.bf16.mxu0 %v1151
        %1201 = vmatpush1.bf16.msra.mxu0 %v1150
        %1202 = vmatprep.subr.bf16.mxu0 %v1149
        %1203 = vmatpush1.bf16.msra.mxu0 %v1148
        %1204 = vmatprep.subr.bf16.mxu0 %v1147
        %1205 = vmatpush1.bf16.msra.mxu0 %v1146
        %1206 = vmatprep.subr.bf16.mxu0 %v1145
        %1207 = vmatpush1.bf16.msra.mxu0 %v1144
        %1208 = vmatprep.subr.bf16.mxu0 %v1143
        %1209 = vmatpush1.bf16.msra.mxu0 %v1142
        %1210 = vmatprep.subr.bf16.mxu0 %v1141
        %1211 = vmatpush1.bf16.msra.mxu0 %v1140
        %1212 = vmatprep.subr.bf16.mxu0 %v1139
        %1213 = vmatpush1.bf16.msra.mxu0 %v1138
        %1214 = vmatprep.subr.bf16.mxu0 %v1137
        %1215 = vmatpush1.bf16.msra.mxu0 %v1136
        %1216 = vmatprep.subr.bf16.mxu0 %v1167
        %1217 = vmatpush2.bf16.msra.mxu0 %v1166
        %1218 = vmatprep.subr.bf16.mxu0 %v1165
        %1219 = vmatpush2.bf16.msra.mxu0 %v1164
        %1220 = vmatprep.subr.bf16.mxu0 %v1163
        %1221 = vmatpush2.bf16.msra.mxu0 %v1162
        %1222 = vmatprep.subr.bf16.mxu0 %v1161
        %1223 = vmatpush2.bf16.msra.mxu0 %v1160
        %1224 = vmatprep.subr.bf16.mxu0 %v1159
        %1225 = vmatpush2.bf16.msra.mxu0 %v1158
        %1226 = vmatprep.subr.bf16.mxu0 %v1157
        %1227 = vmatpush2.bf16.msra.mxu0 %v1156
        %1228 = vmatprep.subr.bf16.mxu0 %v1155
        %1229 = vmatpush2.bf16.msra.mxu0 %v1154
        %1230 = vmatprep.subr.bf16.mxu0 %v1153
        %1231 = vmatpush2.bf16.msra.mxu0 %v1152
        %1232 = vmatprep.mubr.bf16.mxu0 %v995
        %1233 = vmatmul.mubr.bf16.gmra.mxu0 %v994
        %v1234 = vpop.f32.mrf.mxu0
        %v1235 = vadd.f32 %v1033, %v1234
        %v1236 = vpop.f32.mrf.mxu0
        %v1237 = vadd.f32 %v1037, %v1236
        %v1238 = vpop.f32.mrf.mxu0
        %v1239 = vpop.f32.mrf.mxu0
        %1240 = vdwg.mxu0
        %1242 = vrot.lane.b32.xlu0 %v1235, 112
        %v1243 = vpop.permute.xlu0 %1242
        %1245 = vrot.lane.b32.xlu0 %v1235, 96
        %v1246 = vpop.permute.xlu0 %1245
        %1248 = vrot.lane.b32.xlu0 %v1235, 80
        %v1249 = vpop.permute.xlu0 %1248
        %1251 = vrot.lane.b32.xlu0 %v1235, 64
        %v1252 = vpop.permute.xlu0 %1251
        %1254 = vrot.lane.b32.xlu0 %v1235, 48
        %v1255 = vpop.permute.xlu0 %1254
        %1257 = vrot.lane.b32.xlu0 %v1235, 32
        %v1258 = vpop.permute.xlu0 %1257
        %1260 = vrot.lane.b32.xlu0 %v1235, 16
        %v1261 = vpop.permute.xlu0 %1260
        %1264 = vrot.lane.b32.xlu0 %v1237, 112
        %v1265 = vpop.permute.xlu0 %1264
        %1267 = vrot.lane.b32.xlu0 %v1237, 96
        %v1268 = vpop.permute.xlu0 %1267
        %1270 = vrot.lane.b32.xlu0 %v1237, 80
        %v1271 = vpop.permute.xlu0 %1270
        %1273 = vrot.lane.b32.xlu0 %v1237, 64
        %v1274 = vpop.permute.xlu0 %1273
        %1276 = vrot.lane.b32.xlu0 %v1237, 48
        %v1277 = vpop.permute.xlu0 %1276
        %1279 = vrot.lane.b32.xlu0 %v1237, 32
        %v1280 = vpop.permute.xlu0 %1279
        %1282 = vrot.lane.b32.xlu0 %v1237, 16
        %v1283 = vpop.permute.xlu0 %1282
        %v1285 = vcombine.low %v1235, %v1246
        %v1286 = vcombine.high %v1235, %v1246
        %v1288 = vunpack.c.l.s4 1983009808
        %v1289 = vunpack.c.0.s8 %v1288
        %v1290 = vlaneseq
        %v1291 = vshrl.u32 %v1290, 7
        %v1292 = vsub.s32 %v1289, %v1291
        %v1293 = vrot.slane %v1285, %v1292
        %v1295 = vunpack.c.l.s4 1983009808
        %v1296 = vunpack.c.0.s8 %v1295
        %v1297 = vlaneseq
        %v1298 = vshrl.u32 %v1297, 7
        %v1299 = vsub.s32 %v1296, %v1298
        %v1300 = vrot.slane %v1286, %v1299
        %v1301 = vcombine.low %v1243, %v1249
        %v1302 = vcombine.high %v1243, %v1249
        %v1304 = vunpack.c.l.s4 1983009808
        %v1305 = vunpack.c.0.s8 %v1304
        %v1306 = vlaneseq
        %v1307 = vshrl.u32 %v1306, 7
        %v1308 = vsub.s32 %v1305, %v1307
        %v1309 = vrot.slane %v1301, %v1308
        %v1311 = vunpack.c.l.s4 1983009808
        %v1312 = vunpack.c.0.s8 %v1311
        %v1313 = vlaneseq
        %v1314 = vshrl.u32 %v1313, 7
        %v1315 = vsub.s32 %v1312, %v1314
        %v1316 = vrot.slane %v1302, %v1315
        %v1317 = vcombine.low %v1252, %v1258
        %v1318 = vcombine.high %v1252, %v1258
        %v1320 = vunpack.c.l.s4 1983009808
        %v1321 = vunpack.c.0.s8 %v1320
        %v1322 = vlaneseq
        %v1323 = vshrl.u32 %v1322, 7
        %v1324 = vsub.s32 %v1321, %v1323
        %v1325 = vrot.slane %v1317, %v1324
        %v1327 = vunpack.c.l.s4 1983009808
        %v1328 = vunpack.c.0.s8 %v1327
        %v1329 = vlaneseq
        %v1330 = vshrl.u32 %v1329, 7
        %v1331 = vsub.s32 %v1328, %v1330
        %v1332 = vrot.slane %v1318, %v1331
        %v1333 = vcombine.low %v1255, %v1261
        %v1334 = vcombine.high %v1255, %v1261
        %v1336 = vunpack.c.l.s4 1983009808
        %v1337 = vunpack.c.0.s8 %v1336
        %v1338 = vlaneseq
        %v1339 = vshrl.u32 %v1338, 7
        %v1340 = vsub.s32 %v1337, %v1339
        %v1341 = vrot.slane %v1333, %v1340
        %v1343 = vunpack.c.l.s4 1983009808
        %v1344 = vunpack.c.0.s8 %v1343
        %v1345 = vlaneseq
        %v1346 = vshrl.u32 %v1345, 7
        %v1347 = vsub.s32 %v1344, %v1346
        %v1348 = vrot.slane %v1334, %v1347
        %v1349 = vcombine.low %v1293, %v1309
        %v1350 = vcombine.high %v1293, %v1309
        %v1352 = vunpack.c.l.s4 1934713408
        %v1353 = vunpack.c.0.s8 %v1352
        %v1354 = vlaneseq
        %v1355 = vshrl.u32 %v1354, 7
        %v1356 = vsub.s32 %v1353, %v1355
        %v1357 = vrot.slane %v1349, %v1356
        %v1359 = vunpack.c.l.s4 1934713408
        %v1360 = vunpack.c.0.s8 %v1359
        %v1361 = vlaneseq
        %v1362 = vshrl.u32 %v1361, 7
        %v1363 = vsub.s32 %v1360, %v1362
        %v1364 = vrot.slane %v1350, %v1363
        %v1365 = vcombine.low %v1300, %v1316
        %v1366 = vcombine.high %v1300, %v1316
        %v1368 = vunpack.c.l.s4 1934713408
        %v1369 = vunpack.c.0.s8 %v1368
        %v1370 = vlaneseq
        %v1371 = vshrl.u32 %v1370, 7
        %v1372 = vsub.s32 %v1369, %v1371
        %v1373 = vrot.slane %v1365, %v1372
        %v1375 = vunpack.c.l.s4 1934713408
        %v1376 = vunpack.c.0.s8 %v1375
        %v1377 = vlaneseq
        %v1378 = vshrl.u32 %v1377, 7
        %v1379 = vsub.s32 %v1376, %v1378
        %v1380 = vrot.slane %v1366, %v1379
        %v1381 = vcombine.low %v1325, %v1341
        %v1382 = vcombine.high %v1325, %v1341
        %v1384 = vunpack.c.l.s4 1934713408
        %v1385 = vunpack.c.0.s8 %v1384
        %v1386 = vlaneseq
        %v1387 = vshrl.u32 %v1386, 7
        %v1388 = vsub.s32 %v1385, %v1387
        %v1389 = vrot.slane %v1381, %v1388
        %v1391 = vunpack.c.l.s4 1934713408
        %v1392 = vunpack.c.0.s8 %v1391
        %v1393 = vlaneseq
        %v1394 = vshrl.u32 %v1393, 7
        %v1395 = vsub.s32 %v1392, %v1394
        %v1396 = vrot.slane %v1382, %v1395
        %v1397 = vcombine.low %v1332, %v1348
        %v1398 = vcombine.high %v1332, %v1348
        %v1400 = vunpack.c.l.s4 1934713408
        %v1401 = vunpack.c.0.s8 %v1400
        %v1402 = vlaneseq
        %v1403 = vshrl.u32 %v1402, 7
        %v1404 = vsub.s32 %v1401, %v1403
        %v1405 = vrot.slane %v1397, %v1404
        %v1407 = vunpack.c.l.s4 1934713408
        %v1408 = vunpack.c.0.s8 %v1407
        %v1409 = vlaneseq
        %v1410 = vshrl.u32 %v1409, 7
        %v1411 = vsub.s32 %v1408, %v1410
        %v1412 = vrot.slane %v1398, %v1411
        %v1413 = vcombine.low %v1357, %v1389
        %v1414 = vcombine.high %v1357, %v1389
        %v1415 = vcombine.low %v1364, %v1396
        %v1416 = vcombine.high %v1364, %v1396
        %v1417 = vcombine.low %v1373, %v1405
        %v1418 = vcombine.high %v1373, %v1405
        %v1419 = vcombine.low %v1380, %v1412
        %v1420 = vcombine.high %v1380, %v1412
        %v1421 = vcombine.low %v1237, %v1268
        %v1422 = vcombine.high %v1237, %v1268
        %v1424 = vunpack.c.l.s4 1983009808
        %v1425 = vunpack.c.0.s8 %v1424
        %v1426 = vlaneseq
        %v1427 = vshrl.u32 %v1426, 7
        %v1428 = vsub.s32 %v1425, %v1427
        %v1429 = vrot.slane %v1421, %v1428
        %v1431 = vunpack.c.l.s4 1983009808
        %v1432 = vunpack.c.0.s8 %v1431
        %v1433 = vlaneseq
        %v1434 = vshrl.u32 %v1433, 7
        %v1435 = vsub.s32 %v1432, %v1434
        %v1436 = vrot.slane %v1422, %v1435
        %v1437 = vcombine.low %v1265, %v1271
        %v1438 = vcombine.high %v1265, %v1271
        %v1440 = vunpack.c.l.s4 1983009808
        %v1441 = vunpack.c.0.s8 %v1440
        %v1442 = vlaneseq
        %v1443 = vshrl.u32 %v1442, 7
        %v1444 = vsub.s32 %v1441, %v1443
        %v1445 = vrot.slane %v1437, %v1444
        %v1447 = vunpack.c.l.s4 1983009808
        %v1448 = vunpack.c.0.s8 %v1447
        %v1449 = vlaneseq
        %v1450 = vshrl.u32 %v1449, 7
        %v1451 = vsub.s32 %v1448, %v1450
        %v1452 = vrot.slane %v1438, %v1451
        %v1453 = vcombine.low %v1274, %v1280
        %v1454 = vcombine.high %v1274, %v1280
        %v1456 = vunpack.c.l.s4 1983009808
        %v1457 = vunpack.c.0.s8 %v1456
        %v1458 = vlaneseq
        %v1459 = vshrl.u32 %v1458, 7
        %v1460 = vsub.s32 %v1457, %v1459
        %v1461 = vrot.slane %v1453, %v1460
        %v1463 = vunpack.c.l.s4 1983009808
        %v1464 = vunpack.c.0.s8 %v1463
        %v1465 = vlaneseq
        %v1466 = vshrl.u32 %v1465, 7
        %v1467 = vsub.s32 %v1464, %v1466
        %v1468 = vrot.slane %v1454, %v1467
        %v1469 = vcombine.low %v1277, %v1283
        %v1470 = vcombine.high %v1277, %v1283
        %v1472 = vunpack.c.l.s4 1983009808
        %v1473 = vunpack.c.0.s8 %v1472
        %v1474 = vlaneseq
        %v1475 = vshrl.u32 %v1474, 7
        %v1476 = vsub.s32 %v1473, %v1475
        %v1477 = vrot.slane %v1469, %v1476
        %v1479 = vunpack.c.l.s4 1983009808
        %v1480 = vunpack.c.0.s8 %v1479
        %v1481 = vlaneseq
        %v1482 = vshrl.u32 %v1481, 7
        %v1483 = vsub.s32 %v1480, %v1482
        %v1484 = vrot.slane %v1470, %v1483
        %v1485 = vcombine.low %v1429, %v1445
        %v1486 = vcombine.high %v1429, %v1445
        %v1488 = vunpack.c.l.s4 1934713408
        %v1489 = vunpack.c.0.s8 %v1488
        %v1490 = vlaneseq
        %v1491 = vshrl.u32 %v1490, 7
        %v1492 = vsub.s32 %v1489, %v1491
        %v1493 = vrot.slane %v1485, %v1492
        %v1495 = vunpack.c.l.s4 1934713408
        %v1496 = vunpack.c.0.s8 %v1495
        %v1497 = vlaneseq
        %v1498 = vshrl.u32 %v1497, 7
        %v1499 = vsub.s32 %v1496, %v1498
        %v1500 = vrot.slane %v1486, %v1499
        %v1501 = vcombine.low %v1436, %v1452
        %v1502 = vcombine.high %v1436, %v1452
        %v1504 = vunpack.c.l.s4 1934713408
        %v1505 = vunpack.c.0.s8 %v1504
        %v1506 = vlaneseq
        %v1507 = vshrl.u32 %v1506, 7
        %v1508 = vsub.s32 %v1505, %v1507
        %v1509 = vrot.slane %v1501, %v1508
        %v1511 = vunpack.c.l.s4 1934713408
        %v1512 = vunpack.c.0.s8 %v1511
        %v1513 = vlaneseq
        %v1514 = vshrl.u32 %v1513, 7
        %v1515 = vsub.s32 %v1512, %v1514
        %v1516 = vrot.slane %v1502, %v1515
        %v1517 = vcombine.low %v1461, %v1477
        %v1518 = vcombine.high %v1461, %v1477
        %v1520 = vunpack.c.l.s4 1934713408
        %v1521 = vunpack.c.0.s8 %v1520
        %v1522 = vlaneseq
        %v1523 = vshrl.u32 %v1522, 7
        %v1524 = vsub.s32 %v1521, %v1523
        %v1525 = vrot.slane %v1517, %v1524
        %v1527 = vunpack.c.l.s4 1934713408
        %v1528 = vunpack.c.0.s8 %v1527
        %v1529 = vlaneseq
        %v1530 = vshrl.u32 %v1529, 7
        %v1531 = vsub.s32 %v1528, %v1530
        %v1532 = vrot.slane %v1518, %v1531
        %v1533 = vcombine.low %v1468, %v1484
        %v1534 = vcombine.high %v1468, %v1484
        %v1536 = vunpack.c.l.s4 1934713408
        %v1537 = vunpack.c.0.s8 %v1536
        %v1538 = vlaneseq
        %v1539 = vshrl.u32 %v1538, 7
        %v1540 = vsub.s32 %v1537, %v1539
        %v1541 = vrot.slane %v1533, %v1540
        %v1543 = vunpack.c.l.s4 1934713408
        %v1544 = vunpack.c.0.s8 %v1543
        %v1545 = vlaneseq
        %v1546 = vshrl.u32 %v1545, 7
        %v1547 = vsub.s32 %v1544, %v1546
        %v1548 = vrot.slane %v1534, %v1547
        %v1549 = vcombine.low %v1493, %v1525
        %v1550 = vcombine.high %v1493, %v1525
        %v1551 = vcombine.low %v1500, %v1532
        %v1552 = vcombine.high %v1500, %v1532
        %v1553 = vcombine.low %v1509, %v1541
        %v1554 = vcombine.high %v1509, %v1541
        %v1555 = vcombine.low %v1516, %v1548
        %v1556 = vcombine.high %v1516, %v1548
        %v1557 = vadd.f32 %v458, %v1413
        %v1558 = vadd.f32 %v459, %v1549
        %v1559 = vadd.f32 %v460, %v1414
        %v1560 = vadd.f32 %v461, %v1550
        %v1561 = vadd.f32 %v462, %v1415
        %v1562 = vadd.f32 %v463, %v1551
        %v1563 = vadd.f32 %v464, %v1416
        %v1564 = vadd.f32 %v465, %v1552
        %v1565 = vadd.f32 %v466, %v1417
        %v1566 = vadd.f32 %v467, %v1553
        %v1567 = vadd.f32 %v468, %v1418
        %v1568 = vadd.f32 %v469, %v1554
        %v1569 = vadd.f32 %v470, %v1419
        %v1570 = vadd.f32 %v471, %v1555
        %v1571 = vadd.f32 %v472, %v1420
        %v1572 = vadd.f32 %v473, %v1556
        %v1573 = vpack.c.bf16 %v1558, %v1557
        %v1574 = vpack.c.bf16 %v1560, %v1559
        %v1575 = vpack.c.bf16 %v1562, %v1561
        %v1576 = vpack.c.bf16 %v1564, %v1563
        %v1577 = vpack.c.bf16 %v1566, %v1565
        %v1578 = vpack.c.bf16 %v1568, %v1567
        %v1579 = vpack.c.bf16 %v1570, %v1569
        %v1580 = vpack.c.bf16 %v1572, %v1571
        %v1581 = vld [vmem:[%s3] sm:$0xf]
        %v1582 = vld [vmem:[%s3 + $0x4] sm:$0xf]
        %v1583 = vld [vmem:[%s4] sm:$0xf]
        %v1584 = vld [vmem:[%s4 + $0x4] sm:$0xf]
        %v1587 = vunpack.c.l.b16 %v1581
        %v1588 = vunpack.c.l.b16 %v1582
        %v1589 = vpack.c.b16 %v1588, %v1587
        %v1592 = vsel %vm692, %v1573, 0
        %v1595 = vsel %vm692, %v1574, 0
        %v1598 = vsel %vm692, %v1575, 0
        %v1601 = vsel %vm692, %v1576, 0
        %v1604 = vsel %vm692, %v1577, 0
        %v1607 = vsel %vm692, %v1578, 0
        %v1610 = vsel %vm692, %v1579, 0
        %v1613 = vsel %vm692, %v1580, 0
        %1615 = vmatprep.subr.bf16.mxu0 0
        %1616 = vmatpush1.bf16.msra.mxu0 0
        %1617 = vmatprep.subr.bf16.mxu0 0
        %1618 = vmatpush1.bf16.msra.mxu0 0
        %1619 = vmatprep.subr.bf16.mxu0 0
        %1620 = vmatpush1.bf16.msra.mxu0 0
        %1621 = vmatprep.subr.bf16.mxu0 0
        %1622 = vmatpush1.bf16.msra.mxu0 0
        %1623 = vmatprep.subr.bf16.mxu0 0
        %1624 = vmatpush1.bf16.msra.mxu0 0
        %1625 = vmatprep.subr.bf16.mxu0 0
        %1626 = vmatpush1.bf16.msra.mxu0 0
        %1627 = vmatprep.subr.bf16.mxu0 0
        %1628 = vmatpush1.bf16.msra.mxu0 0
        %1629 = vmatprep.subr.bf16.mxu0 0
        %1630 = vmatpush1.bf16.msra.mxu0 %v1589
        %1631 = vmatprep.subr.bf16.mxu0 0
        %1632 = vmatpush2.bf16.msra.mxu0 0
        %1633 = vmatprep.subr.bf16.mxu0 0
        %1634 = vmatpush2.bf16.msra.mxu0 0
        %1635 = vmatprep.subr.bf16.mxu0 0
        %1636 = vmatpush2.bf16.msra.mxu0 0
        %1637 = vmatprep.subr.bf16.mxu0 0
        %1638 = vmatpush2.bf16.msra.mxu0 0
        %1639 = vmatprep.subr.bf16.mxu0 0
        %1640 = vmatpush2.bf16.msra.mxu0 0
        %1641 = vmatprep.subr.bf16.mxu0 0
        %1642 = vmatpush2.bf16.msra.mxu0 0
        %1643 = vmatprep.subr.bf16.mxu0 0
        %1644 = vmatpush2.bf16.msra.mxu0 0
        %1645 = vmatprep.subr.bf16.mxu0 0
        %1646 = vmatpush2.bf16.msra.mxu0 0
        %1647 = vmatprep.mubr.bf16.mxu0 0
        %1648 = vmatmul.mubr.bf16.gmra.mxu0 %v1592
        %v1649 = vpop.f32.mrf.mxu0
        %v1650 = vadd.f32 0.0, %v1649
        %v1651 = vpop.f32.mrf.mxu0
        %v1652 = vpop.f32.mrf.mxu0
        %v1653 = vadd.f32 0.0, %v1652
        %v1654 = vpop.f32.mrf.mxu0
        %1655 = vmatprep.mubr.bf16.mxu0 0
        %1656 = vmatmul.mubr.bf16.gmra.mxu0 %v1595
        %v1657 = vpop.f32.mrf.mxu0
        %v1658 = vadd.f32 0.0, %v1657
        %v1659 = vpop.f32.mrf.mxu0
        %v1660 = vpop.f32.mrf.mxu0
        %v1661 = vadd.f32 0.0, %v1660
        %v1662 = vpop.f32.mrf.mxu0
        %1663 = vmatprep.mubr.bf16.mxu0 0
        %1664 = vmatmul.mubr.bf16.gmra.mxu0 %v1598
        %v1665 = vpop.f32.mrf.mxu0
        %v1666 = vadd.f32 0.0, %v1665
        %v1667 = vpop.f32.mrf.mxu0
        %v1668 = vpop.f32.mrf.mxu0
        %v1669 = vadd.f32 0.0, %v1668
        %v1670 = vpop.f32.mrf.mxu0
        %1671 = vmatprep.mubr.bf16.mxu0 0
        %1672 = vmatmul.mubr.bf16.gmra.mxu0 %v1601
        %v1673 = vpop.f32.mrf.mxu0
        %v1674 = vadd.f32 0.0, %v1673
        %v1675 = vpop.f32.mrf.mxu0
        %v1676 = vpop.f32.mrf.mxu0
        %v1677 = vadd.f32 0.0, %v1676
        %v1678 = vpop.f32.mrf.mxu0
        %1679 = vmatprep.mubr.bf16.mxu0 0
        %1680 = vmatmul.mubr.bf16.gmra.mxu0 %v1604
        %v1681 = vpop.f32.mrf.mxu0
        %v1682 = vadd.f32 0.0, %v1681
        %v1683 = vpop.f32.mrf.mxu0
        %v1684 = vpop.f32.mrf.mxu0
        %v1685 = vadd.f32 0.0, %v1684
        %v1686 = vpop.f32.mrf.mxu0
        %1687 = vmatprep.mubr.bf16.mxu0 0
        %1688 = vmatmul.mubr.bf16.gmra.mxu0 %v1607
        %v1689 = vpop.f32.mrf.mxu0
        %v1690 = vadd.f32 0.0, %v1689
        %v1691 = vpop.f32.mrf.mxu0
        %v1692 = vpop.f32.mrf.mxu0
        %v1693 = vadd.f32 0.0, %v1692
        %v1694 = vpop.f32.mrf.mxu0
        %1695 = vmatprep.mubr.bf16.mxu0 0
        %1696 = vmatmul.mubr.bf16.gmra.mxu0 %v1610
        %v1697 = vpop.f32.mrf.mxu0
        %v1698 = vadd.f32 0.0, %v1697
        %v1699 = vpop.f32.mrf.mxu0
        %v1700 = vpop.f32.mrf.mxu0
        %v1701 = vadd.f32 0.0, %v1700
        %v1702 = vpop.f32.mrf.mxu0
        %1703 = vmatprep.mubr.bf16.mxu0 0
        %1704 = vmatmul.mubr.bf16.gmra.mxu0 %v1613
        %v1705 = vpop.f32.mrf.mxu0
        %v1706 = vadd.f32 0.0, %v1705
        %v1707 = vpop.f32.mrf.mxu0
        %v1708 = vpop.f32.mrf.mxu0
        %v1709 = vadd.f32 0.0, %v1708
        %v1710 = vpop.f32.mrf.mxu0
        %1711 = vdwg.mxu0
        %v1714 = vunpack.c.l.b16 %v1583
        %v1715 = vunpack.c.l.b16 %v1584
        %v1716 = vpack.c.b16 %v1715, %v1714
        %1718 = vmatprep.subr.bf16.mxu0 0
        %1719 = vmatpush1.bf16.msra.mxu0 0
        %1720 = vmatprep.subr.bf16.mxu0 0
        %1721 = vmatpush1.bf16.msra.mxu0 0
        %1722 = vmatprep.subr.bf16.mxu0 0
        %1723 = vmatpush1.bf16.msra.mxu0 0
        %1724 = vmatprep.subr.bf16.mxu0 0
        %1725 = vmatpush1.bf16.msra.mxu0 0
        %1726 = vmatprep.subr.bf16.mxu0 0
        %1727 = vmatpush1.bf16.msra.mxu0 0
        %1728 = vmatprep.subr.bf16.mxu0 0
        %1729 = vmatpush1.bf16.msra.mxu0 0
        %1730 = vmatprep.subr.bf16.mxu0 0
        %1731 = vmatpush1.bf16.msra.mxu0 0
        %1732 = vmatprep.subr.bf16.mxu0 0
        %1733 = vmatpush1.bf16.msra.mxu0 %v1716
        %1734 = vmatprep.subr.bf16.mxu0 0
        %1735 = vmatpush2.bf16.msra.mxu0 0
        %1736 = vmatprep.subr.bf16.mxu0 0
        %1737 = vmatpush2.bf16.msra.mxu0 0
        %1738 = vmatprep.subr.bf16.mxu0 0
        %1739 = vmatpush2.bf16.msra.mxu0 0
        %1740 = vmatprep.subr.bf16.mxu0 0
        %1741 = vmatpush2.bf16.msra.mxu0 0
        %1742 = vmatprep.subr.bf16.mxu0 0
        %1743 = vmatpush2.bf16.msra.mxu0 0
        %1744 = vmatprep.subr.bf16.mxu0 0
        %1745 = vmatpush2.bf16.msra.mxu0 0
        %1746 = vmatprep.subr.bf16.mxu0 0
        %1747 = vmatpush2.bf16.msra.mxu0 0
        %1748 = vmatprep.subr.bf16.mxu0 0
        %1749 = vmatpush2.bf16.msra.mxu0 0
        %1750 = vmatprep.mubr.bf16.mxu0 0
        %1751 = vmatmul.mubr.bf16.gmra.mxu0 %v1592
        %v1752 = vpop.f32.mrf.mxu0
        %v1753 = vadd.f32 0.0, %v1752
        %v1754 = vpop.f32.mrf.mxu0
        %v1755 = vpop.f32.mrf.mxu0
        %v1756 = vadd.f32 0.0, %v1755
        %v1757 = vpop.f32.mrf.mxu0
        %1758 = vmatprep.mubr.bf16.mxu0 0
        %1759 = vmatmul.mubr.bf16.gmra.mxu0 %v1595
        %v1760 = vpop.f32.mrf.mxu0
        %v1761 = vadd.f32 0.0, %v1760
        %v1762 = vpop.f32.mrf.mxu0
        %v1763 = vpop.f32.mrf.mxu0
        %v1764 = vadd.f32 0.0, %v1763
        %v1765 = vpop.f32.mrf.mxu0
        %1766 = vmatprep.mubr.bf16.mxu0 0
        %1767 = vmatmul.mubr.bf16.gmra.mxu0 %v1598
        %v1768 = vpop.f32.mrf.mxu0
        %v1769 = vadd.f32 0.0, %v1768
        %v1770 = vpop.f32.mrf.mxu0
        %v1771 = vpop.f32.mrf.mxu0
        %v1772 = vadd.f32 0.0, %v1771
        %v1773 = vpop.f32.mrf.mxu0
        %1774 = vmatprep.mubr.bf16.mxu0 0
        %1775 = vmatmul.mubr.bf16.gmra.mxu0 %v1601
        %v1776 = vpop.f32.mrf.mxu0
        %v1777 = vadd.f32 0.0, %v1776
        %v1778 = vpop.f32.mrf.mxu0
        %v1779 = vpop.f32.mrf.mxu0
        %v1780 = vadd.f32 0.0, %v1779
        %v1781 = vpop.f32.mrf.mxu0
        %1782 = vmatprep.mubr.bf16.mxu0 0
        %1783 = vmatmul.mubr.bf16.gmra.mxu0 %v1604
        %v1784 = vpop.f32.mrf.mxu0
        %v1785 = vadd.f32 0.0, %v1784
        %v1786 = vpop.f32.mrf.mxu0
        %v1787 = vpop.f32.mrf.mxu0
        %v1788 = vadd.f32 0.0, %v1787
        %v1789 = vpop.f32.mrf.mxu0
        %1790 = vmatprep.mubr.bf16.mxu0 0
        %1791 = vmatmul.mubr.bf16.gmra.mxu0 %v1607
        %v1792 = vpop.f32.mrf.mxu0
        %v1793 = vadd.f32 0.0, %v1792
        %v1794 = vpop.f32.mrf.mxu0
        %v1795 = vpop.f32.mrf.mxu0
        %v1796 = vadd.f32 0.0, %v1795
        %v1797 = vpop.f32.mrf.mxu0
        %1798 = vmatprep.mubr.bf16.mxu0 0
        %1799 = vmatmul.mubr.bf16.gmra.mxu0 %v1610
        %v1800 = vpop.f32.mrf.mxu0
        %v1801 = vadd.f32 0.0, %v1800
        %v1802 = vpop.f32.mrf.mxu0
        %v1803 = vpop.f32.mrf.mxu0
        %v1804 = vadd.f32 0.0, %v1803
        %v1805 = vpop.f32.mrf.mxu0
        %1806 = vmatprep.mubr.bf16.mxu0 0
        %1807 = vmatmul.mubr.bf16.gmra.mxu0 %v1613
        %v1808 = vpop.f32.mrf.mxu0
        %v1809 = vadd.f32 0.0, %v1808
        %v1810 = vpop.f32.mrf.mxu0
        %v1811 = vpop.f32.mrf.mxu0
        %v1812 = vadd.f32 0.0, %v1811
        %v1813 = vpop.f32.mrf.mxu0
        %1814 = vdwg.mxu0
        %v1815 = vpack.c.bf16 %v1653, %v1650
        %v1816 = vpack.c.bf16 %v1661, %v1658
        %v1817 = vpack.c.bf16 %v1669, %v1666
        %v1818 = vpack.c.bf16 %v1677, %v1674
        %v1819 = vpack.c.bf16 %v1685, %v1682
        %v1820 = vpack.c.bf16 %v1693, %v1690
        %v1821 = vpack.c.bf16 %v1701, %v1698
        %v1822 = vpack.c.bf16 %v1709, %v1706
        %v1823 = vpack.c.bf16 %v1756, %v1753
        %v1824 = vpack.c.bf16 %v1764, %v1761
        %v1825 = vpack.c.bf16 %v1772, %v1769
        %v1826 = vpack.c.bf16 %v1780, %v1777
        %v1827 = vpack.c.bf16 %v1788, %v1785
        %v1828 = vpack.c.bf16 %v1796, %v1793
        %v1829 = vpack.c.bf16 %v1804, %v1801
        %v1830 = vpack.c.bf16 %v1812, %v1809
        %v1832 = vsel %vm692, %v1589, 0
        %1834 = vmatprep.subr.bf16.mxu0 0
        %1835 = vmatpush1.bf16.msra.mxu0 0
        %1836 = vmatprep.subr.bf16.mxu0 0
        %1837 = vmatpush1.bf16.msra.mxu0 0
        %1838 = vmatprep.subr.bf16.mxu0 0
        %1839 = vmatpush1.bf16.msra.mxu0 0
        %1840 = vmatprep.subr.bf16.mxu0 0
        %1841 = vmatpush1.bf16.msra.mxu0 0
        %1842 = vmatprep.subr.bf16.mxu0 0
        %1843 = vmatpush1.bf16.msra.mxu0 0
        %1844 = vmatprep.subr.bf16.mxu0 0
        %1845 = vmatpush1.bf16.msra.mxu0 0
        %1846 = vmatprep.subr.bf16.mxu0 0
        %1847 = vmatpush1.bf16.msra.mxu0 0
        %1848 = vmatprep.subr.bf16.mxu0 0
        %1849 = vmatpush1.bf16.msra.mxu0 %v1815
        %1850 = vmatprep.subr.bf16.mxu0 0
        %1851 = vmatpush2.bf16.msra.mxu0 0
        %1852 = vmatprep.subr.bf16.mxu0 0
        %1853 = vmatpush2.bf16.msra.mxu0 0
        %1854 = vmatprep.subr.bf16.mxu0 0
        %1855 = vmatpush2.bf16.msra.mxu0 0
        %1856 = vmatprep.subr.bf16.mxu0 0
        %1857 = vmatpush2.bf16.msra.mxu0 0
        %1858 = vmatprep.subr.bf16.mxu0 0
        %1859 = vmatpush2.bf16.msra.mxu0 0
        %1860 = vmatprep.subr.bf16.mxu0 0
        %1861 = vmatpush2.bf16.msra.mxu0 0
        %1862 = vmatprep.subr.bf16.mxu0 0
        %1863 = vmatpush2.bf16.msra.mxu0 0
        %1864 = vmatprep.subr.bf16.mxu0 0
        %1865 = vmatpush2.bf16.msra.mxu0 0
        %1866 = vmatprep.mubr.bf16.mxu0 0
        %1867 = vmatmul.mubr.bf16.gmra.mxu0 %v1832
        %v1868 = vpop.f32.mrf.mxu0
        %v1869 = vadd.f32 0.0, %v1868
        %v1870 = vpop.f32.mrf.mxu0
        %v1871 = vpop.f32.mrf.mxu0
        %v1872 = vadd.f32 0.0, %v1871
        %v1873 = vpop.f32.mrf.mxu0
        %1874 = vdwg.mxu0
        %1875 = vmatprep.subr.bf16.mxu0 0
        %1876 = vmatpush1.bf16.msra.mxu0 0
        %1877 = vmatprep.subr.bf16.mxu0 0
        %1878 = vmatpush1.bf16.msra.mxu0 0
        %1879 = vmatprep.subr.bf16.mxu0 0
        %1880 = vmatpush1.bf16.msra.mxu0 0
        %1881 = vmatprep.subr.bf16.mxu0 0
        %1882 = vmatpush1.bf16.msra.mxu0 0
        %1883 = vmatprep.subr.bf16.mxu0 0
        %1884 = vmatpush1.bf16.msra.mxu0 0
        %1885 = vmatprep.subr.bf16.mxu0 0
        %1886 = vmatpush1.bf16.msra.mxu0 0
        %1887 = vmatprep.subr.bf16.mxu0 0
        %1888 = vmatpush1.bf16.msra.mxu0 0
        %1889 = vmatprep.subr.bf16.mxu0 0
        %1890 = vmatpush1.bf16.msra.mxu0 %v1816
        %1891 = vmatprep.subr.bf16.mxu0 0
        %1892 = vmatpush2.bf16.msra.mxu0 0
        %1893 = vmatprep.subr.bf16.mxu0 0
        %1894 = vmatpush2.bf16.msra.mxu0 0
        %1895 = vmatprep.subr.bf16.mxu0 0
        %1896 = vmatpush2.bf16.msra.mxu0 0
        %1897 = vmatprep.subr.bf16.mxu0 0
        %1898 = vmatpush2.bf16.msra.mxu0 0
        %1899 = vmatprep.subr.bf16.mxu0 0
        %1900 = vmatpush2.bf16.msra.mxu0 0
        %1901 = vmatprep.subr.bf16.mxu0 0
        %1902 = vmatpush2.bf16.msra.mxu0 0
        %1903 = vmatprep.subr.bf16.mxu0 0
        %1904 = vmatpush2.bf16.msra.mxu0 0
        %1905 = vmatprep.subr.bf16.mxu0 0
        %1906 = vmatpush2.bf16.msra.mxu0 0
        %1907 = vmatprep.mubr.bf16.mxu0 0
        %1908 = vmatmul.mubr.bf16.gmra.mxu0 %v1832
        %v1909 = vpop.f32.mrf.mxu0
        %v1910 = vadd.f32 0.0, %v1909
        %v1911 = vpop.f32.mrf.mxu0
        %v1912 = vpop.f32.mrf.mxu0
        %v1913 = vadd.f32 0.0, %v1912
        %v1914 = vpop.f32.mrf.mxu0
        %1915 = vdwg.mxu0
        %1916 = vmatprep.subr.bf16.mxu0 0
        %1917 = vmatpush1.bf16.msra.mxu0 0
        %1918 = vmatprep.subr.bf16.mxu0 0
        %1919 = vmatpush1.bf16.msra.mxu0 0
        %1920 = vmatprep.subr.bf16.mxu0 0
        %1921 = vmatpush1.bf16.msra.mxu0 0
        %1922 = vmatprep.subr.bf16.mxu0 0
        %1923 = vmatpush1.bf16.msra.mxu0 0
        %1924 = vmatprep.subr.bf16.mxu0 0
        %1925 = vmatpush1.bf16.msra.mxu0 0
        %1926 = vmatprep.subr.bf16.mxu0 0
        %1927 = vmatpush1.bf16.msra.mxu0 0
        %1928 = vmatprep.subr.bf16.mxu0 0
        %1929 = vmatpush1.bf16.msra.mxu0 0
        %1930 = vmatprep.subr.bf16.mxu0 0
        %1931 = vmatpush1.bf16.msra.mxu0 %v1817
        %1932 = vmatprep.subr.bf16.mxu0 0
        %1933 = vmatpush2.bf16.msra.mxu0 0
        %1934 = vmatprep.subr.bf16.mxu0 0
        %1935 = vmatpush2.bf16.msra.mxu0 0
        %1936 = vmatprep.subr.bf16.mxu0 0
        %1937 = vmatpush2.bf16.msra.mxu0 0
        %1938 = vmatprep.subr.bf16.mxu0 0
        %1939 = vmatpush2.bf16.msra.mxu0 0
        %1940 = vmatprep.subr.bf16.mxu0 0
        %1941 = vmatpush2.bf16.msra.mxu0 0
        %1942 = vmatprep.subr.bf16.mxu0 0
        %1943 = vmatpush2.bf16.msra.mxu0 0
        %1944 = vmatprep.subr.bf16.mxu0 0
        %1945 = vmatpush2.bf16.msra.mxu0 0
        %1946 = vmatprep.subr.bf16.mxu0 0
        %1947 = vmatpush2.bf16.msra.mxu0 0
        %1948 = vmatprep.mubr.bf16.mxu0 0
        %1949 = vmatmul.mubr.bf16.gmra.mxu0 %v1832
        %v1950 = vpop.f32.mrf.mxu0
        %v1951 = vadd.f32 0.0, %v1950
        %v1952 = vpop.f32.mrf.mxu0
        %v1953 = vpop.f32.mrf.mxu0
        %v1954 = vadd.f32 0.0, %v1953
        %v1955 = vpop.f32.mrf.mxu0
        %1956 = vdwg.mxu0
        %1957 = vmatprep.subr.bf16.mxu0 0
        %1958 = vmatpush1.bf16.msra.mxu0 0
        %1959 = vmatprep.subr.bf16.mxu0 0
        %1960 = vmatpush1.bf16.msra.mxu0 0
        %1961 = vmatprep.subr.bf16.mxu0 0
        %1962 = vmatpush1.bf16.msra.mxu0 0
        %1963 = vmatprep.subr.bf16.mxu0 0
        %1964 = vmatpush1.bf16.msra.mxu0 0
        %1965 = vmatprep.subr.bf16.mxu0 0
        %1966 = vmatpush1.bf16.msra.mxu0 0
        %1967 = vmatprep.subr.bf16.mxu0 0
        %1968 = vmatpush1.bf16.msra.mxu0 0
        %1969 = vmatprep.subr.bf16.mxu0 0
        %1970 = vmatpush1.bf16.msra.mxu0 0
        %1971 = vmatprep.subr.bf16.mxu0 0
        %1972 = vmatpush1.bf16.msra.mxu0 %v1818
        %1973 = vmatprep.subr.bf16.mxu0 0
        %1974 = vmatpush2.bf16.msra.mxu0 0
        %1975 = vmatprep.subr.bf16.mxu0 0
        %1976 = vmatpush2.bf16.msra.mxu0 0
        %1977 = vmatprep.subr.bf16.mxu0 0
        %1978 = vmatpush2.bf16.msra.mxu0 0
        %1979 = vmatprep.subr.bf16.mxu0 0
        %1980 = vmatpush2.bf16.msra.mxu0 0
        %1981 = vmatprep.subr.bf16.mxu0 0
        %1982 = vmatpush2.bf16.msra.mxu0 0
        %1983 = vmatprep.subr.bf16.mxu0 0
        %1984 = vmatpush2.bf16.msra.mxu0 0
        %1985 = vmatprep.subr.bf16.mxu0 0
        %1986 = vmatpush2.bf16.msra.mxu0 0
        %1987 = vmatprep.subr.bf16.mxu0 0
        %1988 = vmatpush2.bf16.msra.mxu0 0
        %1989 = vmatprep.mubr.bf16.mxu0 0
        %1990 = vmatmul.mubr.bf16.gmra.mxu0 %v1832
        %v1991 = vpop.f32.mrf.mxu0
        %v1992 = vadd.f32 0.0, %v1991
        %v1993 = vpop.f32.mrf.mxu0
        %v1994 = vpop.f32.mrf.mxu0
        %v1995 = vadd.f32 0.0, %v1994
        %v1996 = vpop.f32.mrf.mxu0
        %1997 = vdwg.mxu0
        %1998 = vmatprep.subr.bf16.mxu0 0
        %1999 = vmatpush1.bf16.msra.mxu0 0
        %2000 = vmatprep.subr.bf16.mxu0 0
        %2001 = vmatpush1.bf16.msra.mxu0 0
        %2002 = vmatprep.subr.bf16.mxu0 0
        %2003 = vmatpush1.bf16.msra.mxu0 0
        %2004 = vmatprep.subr.bf16.mxu0 0
        %2005 = vmatpush1.bf16.msra.mxu0 0
        %2006 = vmatprep.subr.bf16.mxu0 0
        %2007 = vmatpush1.bf16.msra.mxu0 0
        %2008 = vmatprep.subr.bf16.mxu0 0
        %2009 = vmatpush1.bf16.msra.mxu0 0
        %2010 = vmatprep.subr.bf16.mxu0 0
        %2011 = vmatpush1.bf16.msra.mxu0 0
        %2012 = vmatprep.subr.bf16.mxu0 0
        %2013 = vmatpush1.bf16.msra.mxu0 %v1819
        %2014 = vmatprep.subr.bf16.mxu0 0
        %2015 = vmatpush2.bf16.msra.mxu0 0
        %2016 = vmatprep.subr.bf16.mxu0 0
        %2017 = vmatpush2.bf16.msra.mxu0 0
        %2018 = vmatprep.subr.bf16.mxu0 0
        %2019 = vmatpush2.bf16.msra.mxu0 0
        %2020 = vmatprep.subr.bf16.mxu0 0
        %2021 = vmatpush2.bf16.msra.mxu0 0
        %2022 = vmatprep.subr.bf16.mxu0 0
        %2023 = vmatpush2.bf16.msra.mxu0 0
        %2024 = vmatprep.subr.bf16.mxu0 0
        %2025 = vmatpush2.bf16.msra.mxu0 0
        %2026 = vmatprep.subr.bf16.mxu0 0
        %2027 = vmatpush2.bf16.msra.mxu0 0
        %2028 = vmatprep.subr.bf16.mxu0 0
        %2029 = vmatpush2.bf16.msra.mxu0 0
        %2030 = vmatprep.mubr.bf16.mxu0 0
        %2031 = vmatmul.mubr.bf16.gmra.mxu0 %v1832
        %v2032 = vpop.f32.mrf.mxu0
        %v2033 = vadd.f32 0.0, %v2032
        %v2034 = vpop.f32.mrf.mxu0
        %v2035 = vpop.f32.mrf.mxu0
        %v2036 = vadd.f32 0.0, %v2035
        %v2037 = vpop.f32.mrf.mxu0
        %2038 = vdwg.mxu0
        %2039 = vmatprep.subr.bf16.mxu0 0
        %2040 = vmatpush1.bf16.msra.mxu0 0
        %2041 = vmatprep.subr.bf16.mxu0 0
        %2042 = vmatpush1.bf16.msra.mxu0 0
        %2043 = vmatprep.subr.bf16.mxu0 0
        %2044 = vmatpush1.bf16.msra.mxu0 0
        %2045 = vmatprep.subr.bf16.mxu0 0
        %2046 = vmatpush1.bf16.msra.mxu0 0
        %2047 = vmatprep.subr.bf16.mxu0 0
        %2048 = vmatpush1.bf16.msra.mxu0 0
        %2049 = vmatprep.subr.bf16.mxu0 0
        %2050 = vmatpush1.bf16.msra.mxu0 0
        %2051 = vmatprep.subr.bf16.mxu0 0
        %2052 = vmatpush1.bf16.msra.mxu0 0
        %2053 = vmatprep.subr.bf16.mxu0 0
        %2054 = vmatpush1.bf16.msra.mxu0 %v1820
        %2055 = vmatprep.subr.bf16.mxu0 0
        %2056 = vmatpush2.bf16.msra.mxu0 0
        %2057 = vmatprep.subr.bf16.mxu0 0
        %2058 = vmatpush2.bf16.msra.mxu0 0
        %2059 = vmatprep.subr.bf16.mxu0 0
        %2060 = vmatpush2.bf16.msra.mxu0 0
        %2061 = vmatprep.subr.bf16.mxu0 0
        %2062 = vmatpush2.bf16.msra.mxu0 0
        %2063 = vmatprep.subr.bf16.mxu0 0
        %2064 = vmatpush2.bf16.msra.mxu0 0
        %2065 = vmatprep.subr.bf16.mxu0 0
        %2066 = vmatpush2.bf16.msra.mxu0 0
        %2067 = vmatprep.subr.bf16.mxu0 0
        %2068 = vmatpush2.bf16.msra.mxu0 0
        %2069 = vmatprep.subr.bf16.mxu0 0
        %2070 = vmatpush2.bf16.msra.mxu0 0
        %2071 = vmatprep.mubr.bf16.mxu0 0
        %2072 = vmatmul.mubr.bf16.gmra.mxu0 %v1832
        %v2073 = vpop.f32.mrf.mxu0
        %v2074 = vadd.f32 0.0, %v2073
        %v2075 = vpop.f32.mrf.mxu0
        %v2076 = vpop.f32.mrf.mxu0
        %v2077 = vadd.f32 0.0, %v2076
        %v2078 = vpop.f32.mrf.mxu0
        %2079 = vdwg.mxu0
        %2080 = vmatprep.subr.bf16.mxu0 0
        %2081 = vmatpush1.bf16.msra.mxu0 0
        %2082 = vmatprep.subr.bf16.mxu0 0
        %2083 = vmatpush1.bf16.msra.mxu0 0
        %2084 = vmatprep.subr.bf16.mxu0 0
        %2085 = vmatpush1.bf16.msra.mxu0 0
        %2086 = vmatprep.subr.bf16.mxu0 0
        %2087 = vmatpush1.bf16.msra.mxu0 0
        %2088 = vmatprep.subr.bf16.mxu0 0
        %2089 = vmatpush1.bf16.msra.mxu0 0
        %2090 = vmatprep.subr.bf16.mxu0 0
        %2091 = vmatpush1.bf16.msra.mxu0 0
        %2092 = vmatprep.subr.bf16.mxu0 0
        %2093 = vmatpush1.bf16.msra.mxu0 0
        %2094 = vmatprep.subr.bf16.mxu0 0
        %2095 = vmatpush1.bf16.msra.mxu0 %v1821
        %2096 = vmatprep.subr.bf16.mxu0 0
        %2097 = vmatpush2.bf16.msra.mxu0 0
        %2098 = vmatprep.subr.bf16.mxu0 0
        %2099 = vmatpush2.bf16.msra.mxu0 0
        %2100 = vmatprep.subr.bf16.mxu0 0
        %2101 = vmatpush2.bf16.msra.mxu0 0
        %2102 = vmatprep.subr.bf16.mxu0 0
        %2103 = vmatpush2.bf16.msra.mxu0 0
        %2104 = vmatprep.subr.bf16.mxu0 0
        %2105 = vmatpush2.bf16.msra.mxu0 0
        %2106 = vmatprep.subr.bf16.mxu0 0
        %2107 = vmatpush2.bf16.msra.mxu0 0
        %2108 = vmatprep.subr.bf16.mxu0 0
        %2109 = vmatpush2.bf16.msra.mxu0 0
        %2110 = vmatprep.subr.bf16.mxu0 0
        %2111 = vmatpush2.bf16.msra.mxu0 0
        %2112 = vmatprep.mubr.bf16.mxu0 0
        %2113 = vmatmul.mubr.bf16.gmra.mxu0 %v1832
        %v2114 = vpop.f32.mrf.mxu0
        %v2115 = vadd.f32 0.0, %v2114
        %v2116 = vpop.f32.mrf.mxu0
        %v2117 = vpop.f32.mrf.mxu0
        %v2118 = vadd.f32 0.0, %v2117
        %v2119 = vpop.f32.mrf.mxu0
        %2120 = vdwg.mxu0
        %2121 = vmatprep.subr.bf16.mxu0 0
        %2122 = vmatpush1.bf16.msra.mxu0 0
        %2123 = vmatprep.subr.bf16.mxu0 0
        %2124 = vmatpush1.bf16.msra.mxu0 0
        %2125 = vmatprep.subr.bf16.mxu0 0
        %2126 = vmatpush1.bf16.msra.mxu0 0
        %2127 = vmatprep.subr.bf16.mxu0 0
        %2128 = vmatpush1.bf16.msra.mxu0 0
        %2129 = vmatprep.subr.bf16.mxu0 0
        %2130 = vmatpush1.bf16.msra.mxu0 0
        %2131 = vmatprep.subr.bf16.mxu0 0
        %2132 = vmatpush1.bf16.msra.mxu0 0
        %2133 = vmatprep.subr.bf16.mxu0 0
        %2134 = vmatpush1.bf16.msra.mxu0 0
        %2135 = vmatprep.subr.bf16.mxu0 0
        %2136 = vmatpush1.bf16.msra.mxu0 %v1822
        %2137 = vmatprep.subr.bf16.mxu0 0
        %2138 = vmatpush2.bf16.msra.mxu0 0
        %2139 = vmatprep.subr.bf16.mxu0 0
        %2140 = vmatpush2.bf16.msra.mxu0 0
        %2141 = vmatprep.subr.bf16.mxu0 0
        %2142 = vmatpush2.bf16.msra.mxu0 0
        %2143 = vmatprep.subr.bf16.mxu0 0
        %2144 = vmatpush2.bf16.msra.mxu0 0
        %2145 = vmatprep.subr.bf16.mxu0 0
        %2146 = vmatpush2.bf16.msra.mxu0 0
        %2147 = vmatprep.subr.bf16.mxu0 0
        %2148 = vmatpush2.bf16.msra.mxu0 0
        %2149 = vmatprep.subr.bf16.mxu0 0
        %2150 = vmatpush2.bf16.msra.mxu0 0
        %2151 = vmatprep.subr.bf16.mxu0 0
        %2152 = vmatpush2.bf16.msra.mxu0 0
        %2153 = vmatprep.mubr.bf16.mxu0 0
        %2154 = vmatmul.mubr.bf16.gmra.mxu0 %v1832
        %v2155 = vpop.f32.mrf.mxu0
        %v2156 = vadd.f32 0.0, %v2155
        %v2157 = vpop.f32.mrf.mxu0
        %v2158 = vpop.f32.mrf.mxu0
        %v2159 = vadd.f32 0.0, %v2158
        %v2160 = vpop.f32.mrf.mxu0
        %2161 = vdwg.mxu0
        %v2163 = vsel %vm692, %v1716, 0
        %2165 = vmatprep.subr.bf16.mxu0 0
        %2166 = vmatpush1.bf16.msra.mxu0 0
        %2167 = vmatprep.subr.bf16.mxu0 0
        %2168 = vmatpush1.bf16.msra.mxu0 0
        %2169 = vmatprep.subr.bf16.mxu0 0
        %2170 = vmatpush1.bf16.msra.mxu0 0
        %2171 = vmatprep.subr.bf16.mxu0 0
        %2172 = vmatpush1.bf16.msra.mxu0 0
        %2173 = vmatprep.subr.bf16.mxu0 0
        %2174 = vmatpush1.bf16.msra.mxu0 0
        %2175 = vmatprep.subr.bf16.mxu0 0
        %2176 = vmatpush1.bf16.msra.mxu0 0
        %2177 = vmatprep.subr.bf16.mxu0 0
        %2178 = vmatpush1.bf16.msra.mxu0 0
        %2179 = vmatprep.subr.bf16.mxu0 0
        %2180 = vmatpush1.bf16.msra.mxu0 %v1823
        %2181 = vmatprep.subr.bf16.mxu0 0
        %2182 = vmatpush2.bf16.msra.mxu0 0
        %2183 = vmatprep.subr.bf16.mxu0 0
        %2184 = vmatpush2.bf16.msra.mxu0 0
        %2185 = vmatprep.subr.bf16.mxu0 0
        %2186 = vmatpush2.bf16.msra.mxu0 0
        %2187 = vmatprep.subr.bf16.mxu0 0
        %2188 = vmatpush2.bf16.msra.mxu0 0
        %2189 = vmatprep.subr.bf16.mxu0 0
        %2190 = vmatpush2.bf16.msra.mxu0 0
        %2191 = vmatprep.subr.bf16.mxu0 0
        %2192 = vmatpush2.bf16.msra.mxu0 0
        %2193 = vmatprep.subr.bf16.mxu0 0
        %2194 = vmatpush2.bf16.msra.mxu0 0
        %2195 = vmatprep.subr.bf16.mxu0 0
        %2196 = vmatpush2.bf16.msra.mxu0 0
        %2197 = vmatprep.mubr.bf16.mxu0 0
        %2198 = vmatmul.mubr.bf16.gmra.mxu0 %v2163
        %v2199 = vpop.f32.mrf.mxu0
        %v2200 = vadd.f32 0.0, %v2199
        %v2201 = vpop.f32.mrf.mxu0
        %v2202 = vpop.f32.mrf.mxu0
        %v2203 = vadd.f32 0.0, %v2202
        %v2204 = vpop.f32.mrf.mxu0
        %2205 = vdwg.mxu0
        %2206 = vmatprep.subr.bf16.mxu0 0
        %2207 = vmatpush1.bf16.msra.mxu0 0
        %2208 = vmatprep.subr.bf16.mxu0 0
        %2209 = vmatpush1.bf16.msra.mxu0 0
        %2210 = vmatprep.subr.bf16.mxu0 0
        %2211 = vmatpush1.bf16.msra.mxu0 0
        %2212 = vmatprep.subr.bf16.mxu0 0
        %2213 = vmatpush1.bf16.msra.mxu0 0
        %2214 = vmatprep.subr.bf16.mxu0 0
        %2215 = vmatpush1.bf16.msra.mxu0 0
        %2216 = vmatprep.subr.bf16.mxu0 0
        %2217 = vmatpush1.bf16.msra.mxu0 0
        %2218 = vmatprep.subr.bf16.mxu0 0
        %2219 = vmatpush1.bf16.msra.mxu0 0
        %2220 = vmatprep.subr.bf16.mxu0 0
        %2221 = vmatpush1.bf16.msra.mxu0 %v1824
        %2222 = vmatprep.subr.bf16.mxu0 0
        %2223 = vmatpush2.bf16.msra.mxu0 0
        %2224 = vmatprep.subr.bf16.mxu0 0
        %2225 = vmatpush2.bf16.msra.mxu0 0
        %2226 = vmatprep.subr.bf16.mxu0 0
        %2227 = vmatpush2.bf16.msra.mxu0 0
        %2228 = vmatprep.subr.bf16.mxu0 0
        %2229 = vmatpush2.bf16.msra.mxu0 0
        %2230 = vmatprep.subr.bf16.mxu0 0
        %2231 = vmatpush2.bf16.msra.mxu0 0
        %2232 = vmatprep.subr.bf16.mxu0 0
        %2233 = vmatpush2.bf16.msra.mxu0 0
        %2234 = vmatprep.subr.bf16.mxu0 0
        %2235 = vmatpush2.bf16.msra.mxu0 0
        %2236 = vmatprep.subr.bf16.mxu0 0
        %2237 = vmatpush2.bf16.msra.mxu0 0
        %2238 = vmatprep.mubr.bf16.mxu0 0
        %2239 = vmatmul.mubr.bf16.gmra.mxu0 %v2163
        %v2240 = vpop.f32.mrf.mxu0
        %v2241 = vadd.f32 0.0, %v2240
        %v2242 = vpop.f32.mrf.mxu0
        %v2243 = vpop.f32.mrf.mxu0
        %v2244 = vadd.f32 0.0, %v2243
        %v2245 = vpop.f32.mrf.mxu0
        %2246 = vdwg.mxu0
        %2247 = vmatprep.subr.bf16.mxu0 0
        %2248 = vmatpush1.bf16.msra.mxu0 0
        %2249 = vmatprep.subr.bf16.mxu0 0
        %2250 = vmatpush1.bf16.msra.mxu0 0
        %2251 = vmatprep.subr.bf16.mxu0 0
        %2252 = vmatpush1.bf16.msra.mxu0 0
        %2253 = vmatprep.subr.bf16.mxu0 0
        %2254 = vmatpush1.bf16.msra.mxu0 0
        %2255 = vmatprep.subr.bf16.mxu0 0
        %2256 = vmatpush1.bf16.msra.mxu0 0
        %2257 = vmatprep.subr.bf16.mxu0 0
        %2258 = vmatpush1.bf16.msra.mxu0 0
        %2259 = vmatprep.subr.bf16.mxu0 0
        %2260 = vmatpush1.bf16.msra.mxu0 0
        %2261 = vmatprep.subr.bf16.mxu0 0
        %2262 = vmatpush1.bf16.msra.mxu0 %v1825
        %2263 = vmatprep.subr.bf16.mxu0 0
        %2264 = vmatpush2.bf16.msra.mxu0 0
        %2265 = vmatprep.subr.bf16.mxu0 0
        %2266 = vmatpush2.bf16.msra.mxu0 0
        %2267 = vmatprep.subr.bf16.mxu0 0
        %2268 = vmatpush2.bf16.msra.mxu0 0
        %2269 = vmatprep.subr.bf16.mxu0 0
        %2270 = vmatpush2.bf16.msra.mxu0 0
        %2271 = vmatprep.subr.bf16.mxu0 0
        %2272 = vmatpush2.bf16.msra.mxu0 0
        %2273 = vmatprep.subr.bf16.mxu0 0
        %2274 = vmatpush2.bf16.msra.mxu0 0
        %2275 = vmatprep.subr.bf16.mxu0 0
        %2276 = vmatpush2.bf16.msra.mxu0 0
        %2277 = vmatprep.subr.bf16.mxu0 0
        %2278 = vmatpush2.bf16.msra.mxu0 0
        %2279 = vmatprep.mubr.bf16.mxu0 0
        %2280 = vmatmul.mubr.bf16.gmra.mxu0 %v2163
        %v2281 = vpop.f32.mrf.mxu0
        %v2282 = vadd.f32 0.0, %v2281
        %v2283 = vpop.f32.mrf.mxu0
        %v2284 = vpop.f32.mrf.mxu0
        %v2285 = vadd.f32 0.0, %v2284
        %v2286 = vpop.f32.mrf.mxu0
        %2287 = vdwg.mxu0
        %2288 = vmatprep.subr.bf16.mxu0 0
        %2289 = vmatpush1.bf16.msra.mxu0 0
        %2290 = vmatprep.subr.bf16.mxu0 0
        %2291 = vmatpush1.bf16.msra.mxu0 0
        %2292 = vmatprep.subr.bf16.mxu0 0
        %2293 = vmatpush1.bf16.msra.mxu0 0
        %2294 = vmatprep.subr.bf16.mxu0 0
        %2295 = vmatpush1.bf16.msra.mxu0 0
        %2296 = vmatprep.subr.bf16.mxu0 0
        %2297 = vmatpush1.bf16.msra.mxu0 0
        %2298 = vmatprep.subr.bf16.mxu0 0
        %2299 = vmatpush1.bf16.msra.mxu0 0
        %2300 = vmatprep.subr.bf16.mxu0 0
        %2301 = vmatpush1.bf16.msra.mxu0 0
        %2302 = vmatprep.subr.bf16.mxu0 0
        %2303 = vmatpush1.bf16.msra.mxu0 %v1826
        %2304 = vmatprep.subr.bf16.mxu0 0
        %2305 = vmatpush2.bf16.msra.mxu0 0
        %2306 = vmatprep.subr.bf16.mxu0 0
        %2307 = vmatpush2.bf16.msra.mxu0 0
        %2308 = vmatprep.subr.bf16.mxu0 0
        %2309 = vmatpush2.bf16.msra.mxu0 0
        %2310 = vmatprep.subr.bf16.mxu0 0
        %2311 = vmatpush2.bf16.msra.mxu0 0
        %2312 = vmatprep.subr.bf16.mxu0 0
        %2313 = vmatpush2.bf16.msra.mxu0 0
        %2314 = vmatprep.subr.bf16.mxu0 0
        %2315 = vmatpush2.bf16.msra.mxu0 0
        %2316 = vmatprep.subr.bf16.mxu0 0
        %2317 = vmatpush2.bf16.msra.mxu0 0
        %2318 = vmatprep.subr.bf16.mxu0 0
        %2319 = vmatpush2.bf16.msra.mxu0 0
        %2320 = vmatprep.mubr.bf16.mxu0 0
        %2321 = vmatmul.mubr.bf16.gmra.mxu0 %v2163
        %v2322 = vpop.f32.mrf.mxu0
        %v2323 = vadd.f32 0.0, %v2322
        %v2324 = vpop.f32.mrf.mxu0
        %v2325 = vpop.f32.mrf.mxu0
        %v2326 = vadd.f32 0.0, %v2325
        %v2327 = vpop.f32.mrf.mxu0
        %2328 = vdwg.mxu0
        %2329 = vmatprep.subr.bf16.mxu0 0
        %2330 = vmatpush1.bf16.msra.mxu0 0
        %2331 = vmatprep.subr.bf16.mxu0 0
        %2332 = vmatpush1.bf16.msra.mxu0 0
        %2333 = vmatprep.subr.bf16.mxu0 0
        %2334 = vmatpush1.bf16.msra.mxu0 0
        %2335 = vmatprep.subr.bf16.mxu0 0
        %2336 = vmatpush1.bf16.msra.mxu0 0
        %2337 = vmatprep.subr.bf16.mxu0 0
        %2338 = vmatpush1.bf16.msra.mxu0 0
        %2339 = vmatprep.subr.bf16.mxu0 0
        %2340 = vmatpush1.bf16.msra.mxu0 0
        %2341 = vmatprep.subr.bf16.mxu0 0
        %2342 = vmatpush1.bf16.msra.mxu0 0
        %2343 = vmatprep.subr.bf16.mxu0 0
        %2344 = vmatpush1.bf16.msra.mxu0 %v1827
        %2345 = vmatprep.subr.bf16.mxu0 0
        %2346 = vmatpush2.bf16.msra.mxu0 0
        %2347 = vmatprep.subr.bf16.mxu0 0
        %2348 = vmatpush2.bf16.msra.mxu0 0
        %2349 = vmatprep.subr.bf16.mxu0 0
        %2350 = vmatpush2.bf16.msra.mxu0 0
        %2351 = vmatprep.subr.bf16.mxu0 0
        %2352 = vmatpush2.bf16.msra.mxu0 0
        %2353 = vmatprep.subr.bf16.mxu0 0
        %2354 = vmatpush2.bf16.msra.mxu0 0
        %2355 = vmatprep.subr.bf16.mxu0 0
        %2356 = vmatpush2.bf16.msra.mxu0 0
        %2357 = vmatprep.subr.bf16.mxu0 0
        %2358 = vmatpush2.bf16.msra.mxu0 0
        %2359 = vmatprep.subr.bf16.mxu0 0
        %2360 = vmatpush2.bf16.msra.mxu0 0
        %2361 = vmatprep.mubr.bf16.mxu0 0
        %2362 = vmatmul.mubr.bf16.gmra.mxu0 %v2163
        %v2363 = vpop.f32.mrf.mxu0
        %v2364 = vadd.f32 0.0, %v2363
        %v2365 = vpop.f32.mrf.mxu0
        %v2366 = vpop.f32.mrf.mxu0
        %v2367 = vadd.f32 0.0, %v2366
        %v2368 = vpop.f32.mrf.mxu0
        %2369 = vdwg.mxu0
        %2370 = vmatprep.subr.bf16.mxu0 0
        %2371 = vmatpush1.bf16.msra.mxu0 0
        %2372 = vmatprep.subr.bf16.mxu0 0
        %2373 = vmatpush1.bf16.msra.mxu0 0
        %2374 = vmatprep.subr.bf16.mxu0 0
        %2375 = vmatpush1.bf16.msra.mxu0 0
        %2376 = vmatprep.subr.bf16.mxu0 0
        %2377 = vmatpush1.bf16.msra.mxu0 0
        %2378 = vmatprep.subr.bf16.mxu0 0
        %2379 = vmatpush1.bf16.msra.mxu0 0
        %2380 = vmatprep.subr.bf16.mxu0 0
        %2381 = vmatpush1.bf16.msra.mxu0 0
        %2382 = vmatprep.subr.bf16.mxu0 0
        %2383 = vmatpush1.bf16.msra.mxu0 0
        %2384 = vmatprep.subr.bf16.mxu0 0
        %2385 = vmatpush1.bf16.msra.mxu0 %v1828
        %2386 = vmatprep.subr.bf16.mxu0 0
        %2387 = vmatpush2.bf16.msra.mxu0 0
        %2388 = vmatprep.subr.bf16.mxu0 0
        %2389 = vmatpush2.bf16.msra.mxu0 0
        %2390 = vmatprep.subr.bf16.mxu0 0
        %2391 = vmatpush2.bf16.msra.mxu0 0
        %2392 = vmatprep.subr.bf16.mxu0 0
        %2393 = vmatpush2.bf16.msra.mxu0 0
        %2394 = vmatprep.subr.bf16.mxu0 0
        %2395 = vmatpush2.bf16.msra.mxu0 0
        %2396 = vmatprep.subr.bf16.mxu0 0
        %2397 = vmatpush2.bf16.msra.mxu0 0
        %2398 = vmatprep.subr.bf16.mxu0 0
        %2399 = vmatpush2.bf16.msra.mxu0 0
        %2400 = vmatprep.subr.bf16.mxu0 0
        %2401 = vmatpush2.bf16.msra.mxu0 0
        %2402 = vmatprep.mubr.bf16.mxu0 0
        %2403 = vmatmul.mubr.bf16.gmra.mxu0 %v2163
        %v2404 = vpop.f32.mrf.mxu0
        %v2405 = vadd.f32 0.0, %v2404
        %v2406 = vpop.f32.mrf.mxu0
        %v2407 = vpop.f32.mrf.mxu0
        %v2408 = vadd.f32 0.0, %v2407
        %v2409 = vpop.f32.mrf.mxu0
        %2410 = vdwg.mxu0
        %2411 = vmatprep.subr.bf16.mxu0 0
        %2412 = vmatpush1.bf16.msra.mxu0 0
        %2413 = vmatprep.subr.bf16.mxu0 0
        %2414 = vmatpush1.bf16.msra.mxu0 0
        %2415 = vmatprep.subr.bf16.mxu0 0
        %2416 = vmatpush1.bf16.msra.mxu0 0
        %2417 = vmatprep.subr.bf16.mxu0 0
        %2418 = vmatpush1.bf16.msra.mxu0 0
        %2419 = vmatprep.subr.bf16.mxu0 0
        %2420 = vmatpush1.bf16.msra.mxu0 0
        %2421 = vmatprep.subr.bf16.mxu0 0
        %2422 = vmatpush1.bf16.msra.mxu0 0
        %2423 = vmatprep.subr.bf16.mxu0 0
        %2424 = vmatpush1.bf16.msra.mxu0 0
        %2425 = vmatprep.subr.bf16.mxu0 0
        %2426 = vmatpush1.bf16.msra.mxu0 %v1829
        %2427 = vmatprep.subr.bf16.mxu0 0
        %2428 = vmatpush2.bf16.msra.mxu0 0
        %2429 = vmatprep.subr.bf16.mxu0 0
        %2430 = vmatpush2.bf16.msra.mxu0 0
        %2431 = vmatprep.subr.bf16.mxu0 0
        %2432 = vmatpush2.bf16.msra.mxu0 0
        %2433 = vmatprep.subr.bf16.mxu0 0
        %2434 = vmatpush2.bf16.msra.mxu0 0
        %2435 = vmatprep.subr.bf16.mxu0 0
        %2436 = vmatpush2.bf16.msra.mxu0 0
        %2437 = vmatprep.subr.bf16.mxu0 0
        %2438 = vmatpush2.bf16.msra.mxu0 0
        %2439 = vmatprep.subr.bf16.mxu0 0
        %2440 = vmatpush2.bf16.msra.mxu0 0
        %2441 = vmatprep.subr.bf16.mxu0 0
        %2442 = vmatpush2.bf16.msra.mxu0 0
        %2443 = vmatprep.mubr.bf16.mxu0 0
        %2444 = vmatmul.mubr.bf16.gmra.mxu0 %v2163
        %v2445 = vpop.f32.mrf.mxu0
        %v2446 = vadd.f32 0.0, %v2445
        %v2447 = vpop.f32.mrf.mxu0
        %v2448 = vpop.f32.mrf.mxu0
        %v2449 = vadd.f32 0.0, %v2448
        %v2450 = vpop.f32.mrf.mxu0
        %2451 = vdwg.mxu0
        %2452 = vmatprep.subr.bf16.mxu0 0
        %2453 = vmatpush1.bf16.msra.mxu0 0
        %2454 = vmatprep.subr.bf16.mxu0 0
        %2455 = vmatpush1.bf16.msra.mxu0 0
        %2456 = vmatprep.subr.bf16.mxu0 0
        %2457 = vmatpush1.bf16.msra.mxu0 0
        %2458 = vmatprep.subr.bf16.mxu0 0
        %2459 = vmatpush1.bf16.msra.mxu0 0
        %2460 = vmatprep.subr.bf16.mxu0 0
        %2461 = vmatpush1.bf16.msra.mxu0 0
        %2462 = vmatprep.subr.bf16.mxu0 0
        %2463 = vmatpush1.bf16.msra.mxu0 0
        %2464 = vmatprep.subr.bf16.mxu0 0
        %2465 = vmatpush1.bf16.msra.mxu0 0
        %2466 = vmatprep.subr.bf16.mxu0 0
        %2467 = vmatpush1.bf16.msra.mxu0 %v1830
        %2468 = vmatprep.subr.bf16.mxu0 0
        %2469 = vmatpush2.bf16.msra.mxu0 0
        %2470 = vmatprep.subr.bf16.mxu0 0
        %2471 = vmatpush2.bf16.msra.mxu0 0
        %2472 = vmatprep.subr.bf16.mxu0 0
        %2473 = vmatpush2.bf16.msra.mxu0 0
        %2474 = vmatprep.subr.bf16.mxu0 0
        %2475 = vmatpush2.bf16.msra.mxu0 0
        %2476 = vmatprep.subr.bf16.mxu0 0
        %2477 = vmatpush2.bf16.msra.mxu0 0
        %2478 = vmatprep.subr.bf16.mxu0 0
        %2479 = vmatpush2.bf16.msra.mxu0 0
        %2480 = vmatprep.subr.bf16.mxu0 0
        %2481 = vmatpush2.bf16.msra.mxu0 0
        %2482 = vmatprep.subr.bf16.mxu0 0
        %2483 = vmatpush2.bf16.msra.mxu0 0
        %2484 = vmatprep.mubr.bf16.mxu0 0
        %2485 = vmatmul.mubr.bf16.gmra.mxu0 %v2163
        %v2486 = vpop.f32.mrf.mxu0
        %v2487 = vadd.f32 0.0, %v2486
        %v2488 = vpop.f32.mrf.mxu0
        %v2489 = vpop.f32.mrf.mxu0
        %v2490 = vadd.f32 0.0, %v2489
        %v2491 = vpop.f32.mrf.mxu0
        %2492 = vdwg.mxu0
        %v2493 = vsub.f32 %v1869, %v2200
        %v2494 = vsub.f32 %v1872, %v2203
        %v2495 = vsub.f32 %v1910, %v2241
        %v2496 = vsub.f32 %v1913, %v2244
        %v2497 = vsub.f32 %v1951, %v2282
        %v2498 = vsub.f32 %v1954, %v2285
        %v2499 = vsub.f32 %v1992, %v2323
        %v2500 = vsub.f32 %v1995, %v2326
        %v2501 = vsub.f32 %v2033, %v2364
        %v2502 = vsub.f32 %v2036, %v2367
        %v2503 = vsub.f32 %v2074, %v2405
        %v2504 = vsub.f32 %v2077, %v2408
        %v2505 = vsub.f32 %v2115, %v2446
        %v2506 = vsub.f32 %v2118, %v2449
        %v2507 = vsub.f32 %v2156, %v2487
        %v2508 = vsub.f32 %v2159, %v2490
        %2509 = vmatprep.subr.bf16.mxu0 0
        %2510 = vmatpush1.bf16.msra.mxu0 0
        %2511 = vmatprep.subr.bf16.mxu0 0
        %2512 = vmatpush1.bf16.msra.mxu0 0
        %2513 = vmatprep.subr.bf16.mxu0 0
        %2514 = vmatpush1.bf16.msra.mxu0 0
        %2515 = vmatprep.subr.bf16.mxu0 0
        %2516 = vmatpush1.bf16.msra.mxu0 0
        %2517 = vmatprep.subr.bf16.mxu0 0
        %2518 = vmatpush1.bf16.msra.mxu0 0
        %2519 = vmatprep.subr.bf16.mxu0 0
        %2520 = vmatpush1.bf16.msra.mxu0 0
        %2521 = vmatprep.subr.bf16.mxu0 0
        %2522 = vmatpush1.bf16.msra.mxu0 0
        %2523 = vmatprep.subr.bf16.mxu0 0
        %2524 = vmatpush1.bf16.msra.mxu0 %v1815
        %2525 = vmatprep.subr.bf16.mxu0 0
        %2526 = vmatpush2.bf16.msra.mxu0 0
        %2527 = vmatprep.subr.bf16.mxu0 0
        %2528 = vmatpush2.bf16.msra.mxu0 0
        %2529 = vmatprep.subr.bf16.mxu0 0
        %2530 = vmatpush2.bf16.msra.mxu0 0
        %2531 = vmatprep.subr.bf16.mxu0 0
        %2532 = vmatpush2.bf16.msra.mxu0 0
        %2533 = vmatprep.subr.bf16.mxu0 0
        %2534 = vmatpush2.bf16.msra.mxu0 0
        %2535 = vmatprep.subr.bf16.mxu0 0
        %2536 = vmatpush2.bf16.msra.mxu0 0
        %2537 = vmatprep.subr.bf16.mxu0 0
        %2538 = vmatpush2.bf16.msra.mxu0 0
        %2539 = vmatprep.subr.bf16.mxu0 0
        %2540 = vmatpush2.bf16.msra.mxu0 0
        %2541 = vmatprep.mubr.bf16.mxu0 0
        %2542 = vmatmul.mubr.bf16.gmra.mxu0 %v2163
        %v2543 = vpop.f32.mrf.mxu0
        %v2544 = vadd.f32 0.0, %v2543
        %v2545 = vpop.f32.mrf.mxu0
        %v2546 = vpop.f32.mrf.mxu0
        %v2547 = vadd.f32 0.0, %v2546
        %v2548 = vpop.f32.mrf.mxu0
        %2549 = vdwg.mxu0
        %2550 = vmatprep.subr.bf16.mxu0 0
        %2551 = vmatpush1.bf16.msra.mxu0 0
        %2552 = vmatprep.subr.bf16.mxu0 0
        %2553 = vmatpush1.bf16.msra.mxu0 0
        %2554 = vmatprep.subr.bf16.mxu0 0
        %2555 = vmatpush1.bf16.msra.mxu0 0
        %2556 = vmatprep.subr.bf16.mxu0 0
        %2557 = vmatpush1.bf16.msra.mxu0 0
        %2558 = vmatprep.subr.bf16.mxu0 0
        %2559 = vmatpush1.bf16.msra.mxu0 0
        %2560 = vmatprep.subr.bf16.mxu0 0
        %2561 = vmatpush1.bf16.msra.mxu0 0
        %2562 = vmatprep.subr.bf16.mxu0 0
        %2563 = vmatpush1.bf16.msra.mxu0 0
        %2564 = vmatprep.subr.bf16.mxu0 0
        %2565 = vmatpush1.bf16.msra.mxu0 %v1816
        %2566 = vmatprep.subr.bf16.mxu0 0
        %2567 = vmatpush2.bf16.msra.mxu0 0
        %2568 = vmatprep.subr.bf16.mxu0 0
        %2569 = vmatpush2.bf16.msra.mxu0 0
        %2570 = vmatprep.subr.bf16.mxu0 0
        %2571 = vmatpush2.bf16.msra.mxu0 0
        %2572 = vmatprep.subr.bf16.mxu0 0
        %2573 = vmatpush2.bf16.msra.mxu0 0
        %2574 = vmatprep.subr.bf16.mxu0 0
        %2575 = vmatpush2.bf16.msra.mxu0 0
        %2576 = vmatprep.subr.bf16.mxu0 0
        %2577 = vmatpush2.bf16.msra.mxu0 0
        %2578 = vmatprep.subr.bf16.mxu0 0
        %2579 = vmatpush2.bf16.msra.mxu0 0
        %2580 = vmatprep.subr.bf16.mxu0 0
        %2581 = vmatpush2.bf16.msra.mxu0 0
        %2582 = vmatprep.mubr.bf16.mxu0 0
        %2583 = vmatmul.mubr.bf16.gmra.mxu0 %v2163
        %v2584 = vpop.f32.mrf.mxu0
        %v2585 = vadd.f32 0.0, %v2584
        %v2586 = vpop.f32.mrf.mxu0
        %v2587 = vpop.f32.mrf.mxu0
        %v2588 = vadd.f32 0.0, %v2587
        %v2589 = vpop.f32.mrf.mxu0
        %2590 = vdwg.mxu0
        %2591 = vmatprep.subr.bf16.mxu0 0
        %2592 = vmatpush1.bf16.msra.mxu0 0
        %2593 = vmatprep.subr.bf16.mxu0 0
        %2594 = vmatpush1.bf16.msra.mxu0 0
        %2595 = vmatprep.subr.bf16.mxu0 0
        %2596 = vmatpush1.bf16.msra.mxu0 0
        %2597 = vmatprep.subr.bf16.mxu0 0
        %2598 = vmatpush1.bf16.msra.mxu0 0
        %2599 = vmatprep.subr.bf16.mxu0 0
        %2600 = vmatpush1.bf16.msra.mxu0 0
        %2601 = vmatprep.subr.bf16.mxu0 0
        %2602 = vmatpush1.bf16.msra.mxu0 0
        %2603 = vmatprep.subr.bf16.mxu0 0
        %2604 = vmatpush1.bf16.msra.mxu0 0
        %2605 = vmatprep.subr.bf16.mxu0 0
        %2606 = vmatpush1.bf16.msra.mxu0 %v1817
        %2607 = vmatprep.subr.bf16.mxu0 0
        %2608 = vmatpush2.bf16.msra.mxu0 0
        %2609 = vmatprep.subr.bf16.mxu0 0
        %2610 = vmatpush2.bf16.msra.mxu0 0
        %2611 = vmatprep.subr.bf16.mxu0 0
        %2612 = vmatpush2.bf16.msra.mxu0 0
        %2613 = vmatprep.subr.bf16.mxu0 0
        %2614 = vmatpush2.bf16.msra.mxu0 0
        %2615 = vmatprep.subr.bf16.mxu0 0
        %2616 = vmatpush2.bf16.msra.mxu0 0
        %2617 = vmatprep.subr.bf16.mxu0 0
        %2618 = vmatpush2.bf16.msra.mxu0 0
        %2619 = vmatprep.subr.bf16.mxu0 0
        %2620 = vmatpush2.bf16.msra.mxu0 0
        %2621 = vmatprep.subr.bf16.mxu0 0
        %2622 = vmatpush2.bf16.msra.mxu0 0
        %2623 = vmatprep.mubr.bf16.mxu0 0
        %2624 = vmatmul.mubr.bf16.gmra.mxu0 %v2163
        %v2625 = vpop.f32.mrf.mxu0
        %v2626 = vadd.f32 0.0, %v2625
        %v2627 = vpop.f32.mrf.mxu0
        %v2628 = vpop.f32.mrf.mxu0
        %v2629 = vadd.f32 0.0, %v2628
        %v2630 = vpop.f32.mrf.mxu0
        %2631 = vdwg.mxu0
        %2632 = vmatprep.subr.bf16.mxu0 0
        %2633 = vmatpush1.bf16.msra.mxu0 0
        %2634 = vmatprep.subr.bf16.mxu0 0
        %2635 = vmatpush1.bf16.msra.mxu0 0
        %2636 = vmatprep.subr.bf16.mxu0 0
        %2637 = vmatpush1.bf16.msra.mxu0 0
        %2638 = vmatprep.subr.bf16.mxu0 0
        %2639 = vmatpush1.bf16.msra.mxu0 0
        %2640 = vmatprep.subr.bf16.mxu0 0
        %2641 = vmatpush1.bf16.msra.mxu0 0
        %2642 = vmatprep.subr.bf16.mxu0 0
        %2643 = vmatpush1.bf16.msra.mxu0 0
        %2644 = vmatprep.subr.bf16.mxu0 0
        %2645 = vmatpush1.bf16.msra.mxu0 0
        %2646 = vmatprep.subr.bf16.mxu0 0
        %2647 = vmatpush1.bf16.msra.mxu0 %v1818
        %2648 = vmatprep.subr.bf16.mxu0 0
        %2649 = vmatpush2.bf16.msra.mxu0 0
        %2650 = vmatprep.subr.bf16.mxu0 0
        %2651 = vmatpush2.bf16.msra.mxu0 0
        %2652 = vmatprep.subr.bf16.mxu0 0
        %2653 = vmatpush2.bf16.msra.mxu0 0
        %2654 = vmatprep.subr.bf16.mxu0 0
        %2655 = vmatpush2.bf16.msra.mxu0 0
        %2656 = vmatprep.subr.bf16.mxu0 0
        %2657 = vmatpush2.bf16.msra.mxu0 0
        %2658 = vmatprep.subr.bf16.mxu0 0
        %2659 = vmatpush2.bf16.msra.mxu0 0
        %2660 = vmatprep.subr.bf16.mxu0 0
        %2661 = vmatpush2.bf16.msra.mxu0 0
        %2662 = vmatprep.subr.bf16.mxu0 0
        %2663 = vmatpush2.bf16.msra.mxu0 0
        %2664 = vmatprep.mubr.bf16.mxu0 0
        %2665 = vmatmul.mubr.bf16.gmra.mxu0 %v2163
        %v2666 = vpop.f32.mrf.mxu0
        %v2667 = vadd.f32 0.0, %v2666
        %v2668 = vpop.f32.mrf.mxu0
        %v2669 = vpop.f32.mrf.mxu0
        %v2670 = vadd.f32 0.0, %v2669
        %v2671 = vpop.f32.mrf.mxu0
        %2672 = vdwg.mxu0
        %2673 = vmatprep.subr.bf16.mxu0 0
        %2674 = vmatpush1.bf16.msra.mxu0 0
        %2675 = vmatprep.subr.bf16.mxu0 0
        %2676 = vmatpush1.bf16.msra.mxu0 0
        %2677 = vmatprep.subr.bf16.mxu0 0
        %2678 = vmatpush1.bf16.msra.mxu0 0
        %2679 = vmatprep.subr.bf16.mxu0 0
        %2680 = vmatpush1.bf16.msra.mxu0 0
        %2681 = vmatprep.subr.bf16.mxu0 0
        %2682 = vmatpush1.bf16.msra.mxu0 0
        %2683 = vmatprep.subr.bf16.mxu0 0
        %2684 = vmatpush1.bf16.msra.mxu0 0
        %2685 = vmatprep.subr.bf16.mxu0 0
        %2686 = vmatpush1.bf16.msra.mxu0 0
        %2687 = vmatprep.subr.bf16.mxu0 0
        %2688 = vmatpush1.bf16.msra.mxu0 %v1819
        %2689 = vmatprep.subr.bf16.mxu0 0
        %2690 = vmatpush2.bf16.msra.mxu0 0
        %2691 = vmatprep.subr.bf16.mxu0 0
        %2692 = vmatpush2.bf16.msra.mxu0 0
        %2693 = vmatprep.subr.bf16.mxu0 0
        %2694 = vmatpush2.bf16.msra.mxu0 0
        %2695 = vmatprep.subr.bf16.mxu0 0
        %2696 = vmatpush2.bf16.msra.mxu0 0
        %2697 = vmatprep.subr.bf16.mxu0 0
        %2698 = vmatpush2.bf16.msra.mxu0 0
        %2699 = vmatprep.subr.bf16.mxu0 0
        %2700 = vmatpush2.bf16.msra.mxu0 0
        %2701 = vmatprep.subr.bf16.mxu0 0
        %2702 = vmatpush2.bf16.msra.mxu0 0
        %2703 = vmatprep.subr.bf16.mxu0 0
        %2704 = vmatpush2.bf16.msra.mxu0 0
        %2705 = vmatprep.mubr.bf16.mxu0 0
        %2706 = vmatmul.mubr.bf16.gmra.mxu0 %v2163
        %v2707 = vpop.f32.mrf.mxu0
        %v2708 = vadd.f32 0.0, %v2707
        %v2709 = vpop.f32.mrf.mxu0
        %v2710 = vpop.f32.mrf.mxu0
        %v2711 = vadd.f32 0.0, %v2710
        %v2712 = vpop.f32.mrf.mxu0
        %2713 = vdwg.mxu0
        %2714 = vmatprep.subr.bf16.mxu0 0
        %2715 = vmatpush1.bf16.msra.mxu0 0
        %2716 = vmatprep.subr.bf16.mxu0 0
        %2717 = vmatpush1.bf16.msra.mxu0 0
        %2718 = vmatprep.subr.bf16.mxu0 0
        %2719 = vmatpush1.bf16.msra.mxu0 0
        %2720 = vmatprep.subr.bf16.mxu0 0
        %2721 = vmatpush1.bf16.msra.mxu0 0
        %2722 = vmatprep.subr.bf16.mxu0 0
        %2723 = vmatpush1.bf16.msra.mxu0 0
        %2724 = vmatprep.subr.bf16.mxu0 0
        %2725 = vmatpush1.bf16.msra.mxu0 0
        %2726 = vmatprep.subr.bf16.mxu0 0
        %2727 = vmatpush1.bf16.msra.mxu0 0
        %2728 = vmatprep.subr.bf16.mxu0 0
        %2729 = vmatpush1.bf16.msra.mxu0 %v1820
        %2730 = vmatprep.subr.bf16.mxu0 0
        %2731 = vmatpush2.bf16.msra.mxu0 0
        %2732 = vmatprep.subr.bf16.mxu0 0
        %2733 = vmatpush2.bf16.msra.mxu0 0
        %2734 = vmatprep.subr.bf16.mxu0 0
        %2735 = vmatpush2.bf16.msra.mxu0 0
        %2736 = vmatprep.subr.bf16.mxu0 0
        %2737 = vmatpush2.bf16.msra.mxu0 0
        %2738 = vmatprep.subr.bf16.mxu0 0
        %2739 = vmatpush2.bf16.msra.mxu0 0
        %2740 = vmatprep.subr.bf16.mxu0 0
        %2741 = vmatpush2.bf16.msra.mxu0 0
        %2742 = vmatprep.subr.bf16.mxu0 0
        %2743 = vmatpush2.bf16.msra.mxu0 0
        %2744 = vmatprep.subr.bf16.mxu0 0
        %2745 = vmatpush2.bf16.msra.mxu0 0
        %2746 = vmatprep.mubr.bf16.mxu0 0
        %2747 = vmatmul.mubr.bf16.gmra.mxu0 %v2163
        %v2748 = vpop.f32.mrf.mxu0
        %v2749 = vadd.f32 0.0, %v2748
        %v2750 = vpop.f32.mrf.mxu0
        %v2751 = vpop.f32.mrf.mxu0
        %v2752 = vadd.f32 0.0, %v2751
        %v2753 = vpop.f32.mrf.mxu0
        %2754 = vdwg.mxu0
        %2755 = vmatprep.subr.bf16.mxu0 0
        %2756 = vmatpush1.bf16.msra.mxu0 0
        %2757 = vmatprep.subr.bf16.mxu0 0
        %2758 = vmatpush1.bf16.msra.mxu0 0
        %2759 = vmatprep.subr.bf16.mxu0 0
        %2760 = vmatpush1.bf16.msra.mxu0 0
        %2761 = vmatprep.subr.bf16.mxu0 0
        %2762 = vmatpush1.bf16.msra.mxu0 0
        %2763 = vmatprep.subr.bf16.mxu0 0
        %2764 = vmatpush1.bf16.msra.mxu0 0
        %2765 = vmatprep.subr.bf16.mxu0 0
        %2766 = vmatpush1.bf16.msra.mxu0 0
        %2767 = vmatprep.subr.bf16.mxu0 0
        %2768 = vmatpush1.bf16.msra.mxu0 0
        %2769 = vmatprep.subr.bf16.mxu0 0
        %2770 = vmatpush1.bf16.msra.mxu0 %v1821
        %2771 = vmatprep.subr.bf16.mxu0 0
        %2772 = vmatpush2.bf16.msra.mxu0 0
        %2773 = vmatprep.subr.bf16.mxu0 0
        %2774 = vmatpush2.bf16.msra.mxu0 0
        %2775 = vmatprep.subr.bf16.mxu0 0
        %2776 = vmatpush2.bf16.msra.mxu0 0
        %2777 = vmatprep.subr.bf16.mxu0 0
        %2778 = vmatpush2.bf16.msra.mxu0 0
        %2779 = vmatprep.subr.bf16.mxu0 0
        %2780 = vmatpush2.bf16.msra.mxu0 0
        %2781 = vmatprep.subr.bf16.mxu0 0
        %2782 = vmatpush2.bf16.msra.mxu0 0
        %2783 = vmatprep.subr.bf16.mxu0 0
        %2784 = vmatpush2.bf16.msra.mxu0 0
        %2785 = vmatprep.subr.bf16.mxu0 0
        %2786 = vmatpush2.bf16.msra.mxu0 0
        %2787 = vmatprep.mubr.bf16.mxu0 0
        %2788 = vmatmul.mubr.bf16.gmra.mxu0 %v2163
        %v2789 = vpop.f32.mrf.mxu0
        %v2790 = vadd.f32 0.0, %v2789
        %v2791 = vpop.f32.mrf.mxu0
        %v2792 = vpop.f32.mrf.mxu0
        %v2793 = vadd.f32 0.0, %v2792
        %v2794 = vpop.f32.mrf.mxu0
        %2795 = vdwg.mxu0
        %2796 = vmatprep.subr.bf16.mxu0 0
        %2797 = vmatpush1.bf16.msra.mxu0 0
        %2798 = vmatprep.subr.bf16.mxu0 0
        %2799 = vmatpush1.bf16.msra.mxu0 0
        %2800 = vmatprep.subr.bf16.mxu0 0
        %2801 = vmatpush1.bf16.msra.mxu0 0
        %2802 = vmatprep.subr.bf16.mxu0 0
        %2803 = vmatpush1.bf16.msra.mxu0 0
        %2804 = vmatprep.subr.bf16.mxu0 0
        %2805 = vmatpush1.bf16.msra.mxu0 0
        %2806 = vmatprep.subr.bf16.mxu0 0
        %2807 = vmatpush1.bf16.msra.mxu0 0
        %2808 = vmatprep.subr.bf16.mxu0 0
        %2809 = vmatpush1.bf16.msra.mxu0 0
        %2810 = vmatprep.subr.bf16.mxu0 0
        %2811 = vmatpush1.bf16.msra.mxu0 %v1822
        %2812 = vmatprep.subr.bf16.mxu0 0
        %2813 = vmatpush2.bf16.msra.mxu0 0
        %2814 = vmatprep.subr.bf16.mxu0 0
        %2815 = vmatpush2.bf16.msra.mxu0 0
        %2816 = vmatprep.subr.bf16.mxu0 0
        %2817 = vmatpush2.bf16.msra.mxu0 0
        %2818 = vmatprep.subr.bf16.mxu0 0
        %2819 = vmatpush2.bf16.msra.mxu0 0
        %2820 = vmatprep.subr.bf16.mxu0 0
        %2821 = vmatpush2.bf16.msra.mxu0 0
        %2822 = vmatprep.subr.bf16.mxu0 0
        %2823 = vmatpush2.bf16.msra.mxu0 0
        %2824 = vmatprep.subr.bf16.mxu0 0
        %2825 = vmatpush2.bf16.msra.mxu0 0
        %2826 = vmatprep.subr.bf16.mxu0 0
        %2827 = vmatpush2.bf16.msra.mxu0 0
        %2828 = vmatprep.mubr.bf16.mxu0 0
        %2829 = vmatmul.mubr.bf16.gmra.mxu0 %v2163
        %v2830 = vpop.f32.mrf.mxu0
        %v2831 = vadd.f32 0.0, %v2830
        %v2832 = vpop.f32.mrf.mxu0
        %v2833 = vpop.f32.mrf.mxu0
        %v2834 = vadd.f32 0.0, %v2833
        %v2835 = vpop.f32.mrf.mxu0
        %2836 = vdwg.mxu0
        %2837 = vmatprep.subr.bf16.mxu0 0
        %2838 = vmatpush1.bf16.msra.mxu0 0
        %2839 = vmatprep.subr.bf16.mxu0 0
        %2840 = vmatpush1.bf16.msra.mxu0 0
        %2841 = vmatprep.subr.bf16.mxu0 0
        %2842 = vmatpush1.bf16.msra.mxu0 0
        %2843 = vmatprep.subr.bf16.mxu0 0
        %2844 = vmatpush1.bf16.msra.mxu0 0
        %2845 = vmatprep.subr.bf16.mxu0 0
        %2846 = vmatpush1.bf16.msra.mxu0 0
        %2847 = vmatprep.subr.bf16.mxu0 0
        %2848 = vmatpush1.bf16.msra.mxu0 0
        %2849 = vmatprep.subr.bf16.mxu0 0
        %2850 = vmatpush1.bf16.msra.mxu0 0
        %2851 = vmatprep.subr.bf16.mxu0 0
        %2852 = vmatpush1.bf16.msra.mxu0 %v1823
        %2853 = vmatprep.subr.bf16.mxu0 0
        %2854 = vmatpush2.bf16.msra.mxu0 0
        %2855 = vmatprep.subr.bf16.mxu0 0
        %2856 = vmatpush2.bf16.msra.mxu0 0
        %2857 = vmatprep.subr.bf16.mxu0 0
        %2858 = vmatpush2.bf16.msra.mxu0 0
        %2859 = vmatprep.subr.bf16.mxu0 0
        %2860 = vmatpush2.bf16.msra.mxu0 0
        %2861 = vmatprep.subr.bf16.mxu0 0
        %2862 = vmatpush2.bf16.msra.mxu0 0
        %2863 = vmatprep.subr.bf16.mxu0 0
        %2864 = vmatpush2.bf16.msra.mxu0 0
        %2865 = vmatprep.subr.bf16.mxu0 0
        %2866 = vmatpush2.bf16.msra.mxu0 0
        %2867 = vmatprep.subr.bf16.mxu0 0
        %2868 = vmatpush2.bf16.msra.mxu0 0
        %2869 = vmatprep.mubr.bf16.mxu0 0
        %2870 = vmatmul.mubr.bf16.gmra.mxu0 %v1832
        %v2871 = vpop.f32.mrf.mxu0
        %v2872 = vadd.f32 %v2544, %v2871
        %v2873 = vpop.f32.mrf.mxu0
        %v2874 = vpop.f32.mrf.mxu0
        %v2875 = vadd.f32 %v2547, %v2874
        %v2876 = vpop.f32.mrf.mxu0
        %2877 = vdwg.mxu0
        %2878 = vmatprep.subr.bf16.mxu0 0
        %2879 = vmatpush1.bf16.msra.mxu0 0
        %2880 = vmatprep.subr.bf16.mxu0 0
        %2881 = vmatpush1.bf16.msra.mxu0 0
        %2882 = vmatprep.subr.bf16.mxu0 0
        %2883 = vmatpush1.bf16.msra.mxu0 0
        %2884 = vmatprep.subr.bf16.mxu0 0
        %2885 = vmatpush1.bf16.msra.mxu0 0
        %2886 = vmatprep.subr.bf16.mxu0 0
        %2887 = vmatpush1.bf16.msra.mxu0 0
        %2888 = vmatprep.subr.bf16.mxu0 0
        %2889 = vmatpush1.bf16.msra.mxu0 0
        %2890 = vmatprep.subr.bf16.mxu0 0
        %2891 = vmatpush1.bf16.msra.mxu0 0
        %2892 = vmatprep.subr.bf16.mxu0 0
        %2893 = vmatpush1.bf16.msra.mxu0 %v1824
        %2894 = vmatprep.subr.bf16.mxu0 0
        %2895 = vmatpush2.bf16.msra.mxu0 0
        %2896 = vmatprep.subr.bf16.mxu0 0
        %2897 = vmatpush2.bf16.msra.mxu0 0
        %2898 = vmatprep.subr.bf16.mxu0 0
        %2899 = vmatpush2.bf16.msra.mxu0 0
        %2900 = vmatprep.subr.bf16.mxu0 0
        %2901 = vmatpush2.bf16.msra.mxu0 0
        %2902 = vmatprep.subr.bf16.mxu0 0
        %2903 = vmatpush2.bf16.msra.mxu0 0
        %2904 = vmatprep.subr.bf16.mxu0 0
        %2905 = vmatpush2.bf16.msra.mxu0 0
        %2906 = vmatprep.subr.bf16.mxu0 0
        %2907 = vmatpush2.bf16.msra.mxu0 0
        %2908 = vmatprep.subr.bf16.mxu0 0
        %2909 = vmatpush2.bf16.msra.mxu0 0
        %2910 = vmatprep.mubr.bf16.mxu0 0
        %2911 = vmatmul.mubr.bf16.gmra.mxu0 %v1832
        %v2912 = vpop.f32.mrf.mxu0
        %v2913 = vadd.f32 %v2585, %v2912
        %v2914 = vpop.f32.mrf.mxu0
        %v2915 = vpop.f32.mrf.mxu0
        %v2916 = vadd.f32 %v2588, %v2915
        %v2917 = vpop.f32.mrf.mxu0
        %2918 = vdwg.mxu0
        %2919 = vmatprep.subr.bf16.mxu0 0
        %2920 = vmatpush1.bf16.msra.mxu0 0
        %2921 = vmatprep.subr.bf16.mxu0 0
        %2922 = vmatpush1.bf16.msra.mxu0 0
        %2923 = vmatprep.subr.bf16.mxu0 0
        %2924 = vmatpush1.bf16.msra.mxu0 0
        %2925 = vmatprep.subr.bf16.mxu0 0
        %2926 = vmatpush1.bf16.msra.mxu0 0
        %2927 = vmatprep.subr.bf16.mxu0 0
        %2928 = vmatpush1.bf16.msra.mxu0 0
        %2929 = vmatprep.subr.bf16.mxu0 0
        %2930 = vmatpush1.bf16.msra.mxu0 0
        %2931 = vmatprep.subr.bf16.mxu0 0
        %2932 = vmatpush1.bf16.msra.mxu0 0
        %2933 = vmatprep.subr.bf16.mxu0 0
        %2934 = vmatpush1.bf16.msra.mxu0 %v1825
        %2935 = vmatprep.subr.bf16.mxu0 0
        %2936 = vmatpush2.bf16.msra.mxu0 0
        %2937 = vmatprep.subr.bf16.mxu0 0
        %2938 = vmatpush2.bf16.msra.mxu0 0
        %2939 = vmatprep.subr.bf16.mxu0 0
        %2940 = vmatpush2.bf16.msra.mxu0 0
        %2941 = vmatprep.subr.bf16.mxu0 0
        %2942 = vmatpush2.bf16.msra.mxu0 0
        %2943 = vmatprep.subr.bf16.mxu0 0
        %2944 = vmatpush2.bf16.msra.mxu0 0
        %2945 = vmatprep.subr.bf16.mxu0 0
        %2946 = vmatpush2.bf16.msra.mxu0 0
        %2947 = vmatprep.subr.bf16.mxu0 0
        %2948 = vmatpush2.bf16.msra.mxu0 0
        %2949 = vmatprep.subr.bf16.mxu0 0
        %2950 = vmatpush2.bf16.msra.mxu0 0
        %2951 = vmatprep.mubr.bf16.mxu0 0
        %2952 = vmatmul.mubr.bf16.gmra.mxu0 %v1832
        %v2953 = vpop.f32.mrf.mxu0
        %v2954 = vadd.f32 %v2626, %v2953
        %v2955 = vpop.f32.mrf.mxu0
        %v2956 = vpop.f32.mrf.mxu0
        %v2957 = vadd.f32 %v2629, %v2956
        %v2958 = vpop.f32.mrf.mxu0
        %2959 = vdwg.mxu0
        %2960 = vmatprep.subr.bf16.mxu0 0
        %2961 = vmatpush1.bf16.msra.mxu0 0
        %2962 = vmatprep.subr.bf16.mxu0 0
        %2963 = vmatpush1.bf16.msra.mxu0 0
        %2964 = vmatprep.subr.bf16.mxu0 0
        %2965 = vmatpush1.bf16.msra.mxu0 0
        %2966 = vmatprep.subr.bf16.mxu0 0
        %2967 = vmatpush1.bf16.msra.mxu0 0
        %2968 = vmatprep.subr.bf16.mxu0 0
        %2969 = vmatpush1.bf16.msra.mxu0 0
        %2970 = vmatprep.subr.bf16.mxu0 0
        %2971 = vmatpush1.bf16.msra.mxu0 0
        %2972 = vmatprep.subr.bf16.mxu0 0
        %2973 = vmatpush1.bf16.msra.mxu0 0
        %2974 = vmatprep.subr.bf16.mxu0 0
        %2975 = vmatpush1.bf16.msra.mxu0 %v1826
        %2976 = vmatprep.subr.bf16.mxu0 0
        %2977 = vmatpush2.bf16.msra.mxu0 0
        %2978 = vmatprep.subr.bf16.mxu0 0
        %2979 = vmatpush2.bf16.msra.mxu0 0
        %2980 = vmatprep.subr.bf16.mxu0 0
        %2981 = vmatpush2.bf16.msra.mxu0 0
        %2982 = vmatprep.subr.bf16.mxu0 0
        %2983 = vmatpush2.bf16.msra.mxu0 0
        %2984 = vmatprep.subr.bf16.mxu0 0
        %2985 = vmatpush2.bf16.msra.mxu0 0
        %2986 = vmatprep.subr.bf16.mxu0 0
        %2987 = vmatpush2.bf16.msra.mxu0 0
        %2988 = vmatprep.subr.bf16.mxu0 0
        %2989 = vmatpush2.bf16.msra.mxu0 0
        %2990 = vmatprep.subr.bf16.mxu0 0
        %2991 = vmatpush2.bf16.msra.mxu0 0
        %2992 = vmatprep.mubr.bf16.mxu0 0
        %2993 = vmatmul.mubr.bf16.gmra.mxu0 %v1832
        %v2994 = vpop.f32.mrf.mxu0
        %v2995 = vadd.f32 %v2667, %v2994
        %v2996 = vpop.f32.mrf.mxu0
        %v2997 = vpop.f32.mrf.mxu0
        %v2998 = vadd.f32 %v2670, %v2997
        %v2999 = vpop.f32.mrf.mxu0
        %3000 = vdwg.mxu0
        %3001 = vmatprep.subr.bf16.mxu0 0
        %3002 = vmatpush1.bf16.msra.mxu0 0
        %3003 = vmatprep.subr.bf16.mxu0 0
        %3004 = vmatpush1.bf16.msra.mxu0 0
        %3005 = vmatprep.subr.bf16.mxu0 0
        %3006 = vmatpush1.bf16.msra.mxu0 0
        %3007 = vmatprep.subr.bf16.mxu0 0
        %3008 = vmatpush1.bf16.msra.mxu0 0
        %3009 = vmatprep.subr.bf16.mxu0 0
        %3010 = vmatpush1.bf16.msra.mxu0 0
        %3011 = vmatprep.subr.bf16.mxu0 0
        %3012 = vmatpush1.bf16.msra.mxu0 0
        %3013 = vmatprep.subr.bf16.mxu0 0
        %3014 = vmatpush1.bf16.msra.mxu0 0
        %3015 = vmatprep.subr.bf16.mxu0 0
        %3016 = vmatpush1.bf16.msra.mxu0 %v1827
        %3017 = vmatprep.subr.bf16.mxu0 0
        %3018 = vmatpush2.bf16.msra.mxu0 0
        %3019 = vmatprep.subr.bf16.mxu0 0
        %3020 = vmatpush2.bf16.msra.mxu0 0
        %3021 = vmatprep.subr.bf16.mxu0 0
        %3022 = vmatpush2.bf16.msra.mxu0 0
        %3023 = vmatprep.subr.bf16.mxu0 0
        %3024 = vmatpush2.bf16.msra.mxu0 0
        %3025 = vmatprep.subr.bf16.mxu0 0
        %3026 = vmatpush2.bf16.msra.mxu0 0
        %3027 = vmatprep.subr.bf16.mxu0 0
        %3028 = vmatpush2.bf16.msra.mxu0 0
        %3029 = vmatprep.subr.bf16.mxu0 0
        %3030 = vmatpush2.bf16.msra.mxu0 0
        %3031 = vmatprep.subr.bf16.mxu0 0
        %3032 = vmatpush2.bf16.msra.mxu0 0
        %3033 = vmatprep.mubr.bf16.mxu0 0
        %3034 = vmatmul.mubr.bf16.gmra.mxu0 %v1832
        %v3035 = vpop.f32.mrf.mxu0
        %v3036 = vadd.f32 %v2708, %v3035
        %v3037 = vpop.f32.mrf.mxu0
        %v3038 = vpop.f32.mrf.mxu0
        %v3039 = vadd.f32 %v2711, %v3038
        %v3040 = vpop.f32.mrf.mxu0
        %3041 = vdwg.mxu0
        %3042 = vmatprep.subr.bf16.mxu0 0
        %3043 = vmatpush1.bf16.msra.mxu0 0
        %3044 = vmatprep.subr.bf16.mxu0 0
        %3045 = vmatpush1.bf16.msra.mxu0 0
        %3046 = vmatprep.subr.bf16.mxu0 0
        %3047 = vmatpush1.bf16.msra.mxu0 0
        %3048 = vmatprep.subr.bf16.mxu0 0
        %3049 = vmatpush1.bf16.msra.mxu0 0
        %3050 = vmatprep.subr.bf16.mxu0 0
        %3051 = vmatpush1.bf16.msra.mxu0 0
        %3052 = vmatprep.subr.bf16.mxu0 0
        %3053 = vmatpush1.bf16.msra.mxu0 0
        %3054 = vmatprep.subr.bf16.mxu0 0
        %3055 = vmatpush1.bf16.msra.mxu0 0
        %3056 = vmatprep.subr.bf16.mxu0 0
        %3057 = vmatpush1.bf16.msra.mxu0 %v1828
        %3058 = vmatprep.subr.bf16.mxu0 0
        %3059 = vmatpush2.bf16.msra.mxu0 0
        %3060 = vmatprep.subr.bf16.mxu0 0
        %3061 = vmatpush2.bf16.msra.mxu0 0
        %3062 = vmatprep.subr.bf16.mxu0 0
        %3063 = vmatpush2.bf16.msra.mxu0 0
        %3064 = vmatprep.subr.bf16.mxu0 0
        %3065 = vmatpush2.bf16.msra.mxu0 0
        %3066 = vmatprep.subr.bf16.mxu0 0
        %3067 = vmatpush2.bf16.msra.mxu0 0
        %3068 = vmatprep.subr.bf16.mxu0 0
        %3069 = vmatpush2.bf16.msra.mxu0 0
        %3070 = vmatprep.subr.bf16.mxu0 0
        %3071 = vmatpush2.bf16.msra.mxu0 0
        %3072 = vmatprep.subr.bf16.mxu0 0
        %3073 = vmatpush2.bf16.msra.mxu0 0
        %3074 = vmatprep.mubr.bf16.mxu0 0
        %3075 = vmatmul.mubr.bf16.gmra.mxu0 %v1832
        %v3076 = vpop.f32.mrf.mxu0
        %v3077 = vadd.f32 %v2749, %v3076
        %v3078 = vpop.f32.mrf.mxu0
        %v3079 = vpop.f32.mrf.mxu0
        %v3080 = vadd.f32 %v2752, %v3079
        %v3081 = vpop.f32.mrf.mxu0
        %3082 = vdwg.mxu0
        %3083 = vmatprep.subr.bf16.mxu0 0
        %3084 = vmatpush1.bf16.msra.mxu0 0
        %3085 = vmatprep.subr.bf16.mxu0 0
        %3086 = vmatpush1.bf16.msra.mxu0 0
        %3087 = vmatprep.subr.bf16.mxu0 0
        %3088 = vmatpush1.bf16.msra.mxu0 0
        %3089 = vmatprep.subr.bf16.mxu0 0
        %3090 = vmatpush1.bf16.msra.mxu0 0
        %3091 = vmatprep.subr.bf16.mxu0 0
        %3092 = vmatpush1.bf16.msra.mxu0 0
        %3093 = vmatprep.subr.bf16.mxu0 0
        %3094 = vmatpush1.bf16.msra.mxu0 0
        %3095 = vmatprep.subr.bf16.mxu0 0
        %3096 = vmatpush1.bf16.msra.mxu0 0
        %3097 = vmatprep.subr.bf16.mxu0 0
        %3098 = vmatpush1.bf16.msra.mxu0 %v1829
        %3099 = vmatprep.subr.bf16.mxu0 0
        %3100 = vmatpush2.bf16.msra.mxu0 0
        %3101 = vmatprep.subr.bf16.mxu0 0
        %3102 = vmatpush2.bf16.msra.mxu0 0
        %3103 = vmatprep.subr.bf16.mxu0 0
        %3104 = vmatpush2.bf16.msra.mxu0 0
        %3105 = vmatprep.subr.bf16.mxu0 0
        %3106 = vmatpush2.bf16.msra.mxu0 0
        %3107 = vmatprep.subr.bf16.mxu0 0
        %3108 = vmatpush2.bf16.msra.mxu0 0
        %3109 = vmatprep.subr.bf16.mxu0 0
        %3110 = vmatpush2.bf16.msra.mxu0 0
        %3111 = vmatprep.subr.bf16.mxu0 0
        %3112 = vmatpush2.bf16.msra.mxu0 0
        %3113 = vmatprep.subr.bf16.mxu0 0
        %3114 = vmatpush2.bf16.msra.mxu0 0
        %3115 = vmatprep.mubr.bf16.mxu0 0
        %3116 = vmatmul.mubr.bf16.gmra.mxu0 %v1832
        %v3117 = vpop.f32.mrf.mxu0
        %v3118 = vadd.f32 %v2790, %v3117
        %v3119 = vpop.f32.mrf.mxu0
        %v3120 = vpop.f32.mrf.mxu0
        %v3121 = vadd.f32 %v2793, %v3120
        %v3122 = vpop.f32.mrf.mxu0
        %3123 = vdwg.mxu0
        %3124 = vmatprep.subr.bf16.mxu0 0
        %3125 = vmatpush1.bf16.msra.mxu0 0
        %3126 = vmatprep.subr.bf16.mxu0 0
        %3127 = vmatpush1.bf16.msra.mxu0 0
        %3128 = vmatprep.subr.bf16.mxu0 0
        %3129 = vmatpush1.bf16.msra.mxu0 0
        %3130 = vmatprep.subr.bf16.mxu0 0
        %3131 = vmatpush1.bf16.msra.mxu0 0
        %3132 = vmatprep.subr.bf16.mxu0 0
        %3133 = vmatpush1.bf16.msra.mxu0 0
        %3134 = vmatprep.subr.bf16.mxu0 0
        %3135 = vmatpush1.bf16.msra.mxu0 0
        %3136 = vmatprep.subr.bf16.mxu0 0
        %3137 = vmatpush1.bf16.msra.mxu0 0
        %3138 = vmatprep.subr.bf16.mxu0 0
        %3139 = vmatpush1.bf16.msra.mxu0 %v1830
        %3140 = vmatprep.subr.bf16.mxu0 0
        %3141 = vmatpush2.bf16.msra.mxu0 0
        %3142 = vmatprep.subr.bf16.mxu0 0
        %3143 = vmatpush2.bf16.msra.mxu0 0
        %3144 = vmatprep.subr.bf16.mxu0 0
        %3145 = vmatpush2.bf16.msra.mxu0 0
        %3146 = vmatprep.subr.bf16.mxu0 0
        %3147 = vmatpush2.bf16.msra.mxu0 0
        %3148 = vmatprep.subr.bf16.mxu0 0
        %3149 = vmatpush2.bf16.msra.mxu0 0
        %3150 = vmatprep.subr.bf16.mxu0 0
        %3151 = vmatpush2.bf16.msra.mxu0 0
        %3152 = vmatprep.subr.bf16.mxu0 0
        %3153 = vmatpush2.bf16.msra.mxu0 0
        %3154 = vmatprep.subr.bf16.mxu0 0
        %3155 = vmatpush2.bf16.msra.mxu0 0
        %3156 = vmatprep.mubr.bf16.mxu0 0
        %3157 = vmatmul.mubr.bf16.gmra.mxu0 %v1832
        %v3158 = vpop.f32.mrf.mxu0
        %v3159 = vadd.f32 %v2831, %v3158
        %v3160 = vpop.f32.mrf.mxu0
        %v3161 = vpop.f32.mrf.mxu0
        %v3162 = vadd.f32 %v2834, %v3161
        %v3163 = vpop.f32.mrf.mxu0
        %3164 = vdwg.mxu0
        %v3165 = vld [vmem:[%s401] sm:$0xff]
        %v3166 = vld [vmem:[%s401 + $0x8] sm:$0xff]
        %v3167 = vld [vmem:[%s1] sm:$0xff]
        %v3168 = vld [vmem:[%s1 + $0x8] sm:$0xff]
        %v3169 = vld [vmem:[%s1 + $0x10] sm:$0xff]
        %v3170 = vld [vmem:[%s1 + $0x18] sm:$0xff]
        %v3171 = vld [vmem:[%s1 + $0x20] sm:$0xff]
        %v3172 = vld [vmem:[%s1 + $0x28] sm:$0xff]
        %v3173 = vld [vmem:[%s1 + $0x30] sm:$0xff]
        %v3174 = vld [vmem:[%s1 + $0x38] sm:$0xff]
        %v3175 = vld [vmem:[%s1 + $0x40] sm:$0xff]
        %v3176 = vld [vmem:[%s1 + $0x48] sm:$0xff]
        %v3177 = vld [vmem:[%s1 + $0x50] sm:$0xff]
        %v3178 = vld [vmem:[%s1 + $0x58] sm:$0xff]
        %v3179 = vld [vmem:[%s1 + $0x60] sm:$0xff]
        %v3180 = vld [vmem:[%s1 + $0x68] sm:$0xff]
        %v3181 = vld [vmem:[%s1 + $0x70] sm:$0xff]
        %v3182 = vld [vmem:[%s1 + $0x78] sm:$0xff]
        %v3183 = vsub.f32 %v3167, %v2493
        %v3184 = vsub.f32 %v3168, %v2494
        %v3185 = vsub.f32 %v3169, %v2495
        %v3186 = vsub.f32 %v3170, %v2496
        %v3187 = vsub.f32 %v3171, %v2497
        %v3188 = vsub.f32 %v3172, %v2498
        %v3189 = vsub.f32 %v3173, %v2499
        %v3190 = vsub.f32 %v3174, %v2500
        %v3191 = vsub.f32 %v3175, %v2501
        %v3192 = vsub.f32 %v3176, %v2502
        %v3193 = vsub.f32 %v3177, %v2503
        %v3194 = vsub.f32 %v3178, %v2504
        %v3195 = vsub.f32 %v3179, %v2505
        %v3196 = vsub.f32 %v3180, %v2506
        %v3197 = vsub.f32 %v3181, %v2507
        %v3198 = vsub.f32 %v3182, %v2508
        %v3199 = vmul.f32 %v3165, %v3183
        %v3200 = vmul.f32 %v3166, %v3184
        %v3201 = vmul.f32 %v3165, %v3185
        %v3202 = vmul.f32 %v3166, %v3186
        %v3203 = vmul.f32 %v3165, %v3187
        %v3204 = vmul.f32 %v3166, %v3188
        %v3205 = vmul.f32 %v3165, %v3189
        %v3206 = vmul.f32 %v3166, %v3190
        %v3207 = vmul.f32 %v3165, %v3191
        %v3208 = vmul.f32 %v3166, %v3192
        %v3209 = vmul.f32 %v3165, %v3193
        %v3210 = vmul.f32 %v3166, %v3194
        %v3211 = vmul.f32 %v3165, %v3195
        %v3212 = vmul.f32 %v3166, %v3196
        %v3213 = vmul.f32 %v3165, %v3197
        %v3214 = vmul.f32 %v3166, %v3198
        %v3215 = vld [vmem:[%s2] sm:$0xff]
        %v3216 = vld [vmem:[%s2 + $0x8] sm:$0xff]
        %v3217 = vld [vmem:[%s2 + $0x10] sm:$0xff]
        %v3218 = vld [vmem:[%s2 + $0x18] sm:$0xff]
        %v3219 = vld [vmem:[%s2 + $0x20] sm:$0xff]
        %v3220 = vld [vmem:[%s2 + $0x28] sm:$0xff]
        %v3221 = vld [vmem:[%s2 + $0x30] sm:$0xff]
        %v3222 = vld [vmem:[%s2 + $0x38] sm:$0xff]
        %v3223 = vld [vmem:[%s2 + $0x40] sm:$0xff]
        %v3224 = vld [vmem:[%s2 + $0x48] sm:$0xff]
        %v3225 = vld [vmem:[%s2 + $0x50] sm:$0xff]
        %v3226 = vld [vmem:[%s2 + $0x58] sm:$0xff]
        %v3227 = vld [vmem:[%s2 + $0x60] sm:$0xff]
        %v3228 = vld [vmem:[%s2 + $0x68] sm:$0xff]
        %v3229 = vld [vmem:[%s2 + $0x70] sm:$0xff]
        %v3230 = vld [vmem:[%s2 + $0x78] sm:$0xff]
        %v3231 = vsub.f32 %v3215, %v2872
        %v3232 = vsub.f32 %v3216, %v2875
        %v3233 = vsub.f32 %v3217, %v2913
        %v3234 = vsub.f32 %v3218, %v2916
        %v3235 = vsub.f32 %v3219, %v2954
        %v3236 = vsub.f32 %v3220, %v2957
        %v3237 = vsub.f32 %v3221, %v2995
        %v3238 = vsub.f32 %v3222, %v2998
        %v3239 = vsub.f32 %v3223, %v3036
        %v3240 = vsub.f32 %v3224, %v3039
        %v3241 = vsub.f32 %v3225, %v3077
        %v3242 = vsub.f32 %v3226, %v3080
        %v3243 = vsub.f32 %v3227, %v3118
        %v3244 = vsub.f32 %v3228, %v3121
        %v3245 = vsub.f32 %v3229, %v3159
        %v3246 = vsub.f32 %v3230, %v3162
        %v3247 = vmul.f32 %v3165, %v3231
        %v3248 = vmul.f32 %v3166, %v3232
        %v3249 = vmul.f32 %v3165, %v3233
        %v3250 = vmul.f32 %v3166, %v3234
        %v3251 = vmul.f32 %v3165, %v3235
        %v3252 = vmul.f32 %v3166, %v3236
        %v3253 = vmul.f32 %v3165, %v3237
        %v3254 = vmul.f32 %v3166, %v3238
        %v3255 = vmul.f32 %v3165, %v3239
        %v3256 = vmul.f32 %v3166, %v3240
        %v3257 = vmul.f32 %v3165, %v3241
        %v3258 = vmul.f32 %v3166, %v3242
        %v3259 = vmul.f32 %v3165, %v3243
        %v3260 = vmul.f32 %v3166, %v3244
        %v3261 = vmul.f32 %v3165, %v3245
        %v3262 = vmul.f32 %v3166, %v3246
        %v3263 = vpack.c.bf16 %v3200, %v3199
        %v3264 = vpack.c.bf16 %v3202, %v3201
        %v3265 = vpack.c.bf16 %v3204, %v3203
        %v3266 = vpack.c.bf16 %v3206, %v3205
        %v3267 = vpack.c.bf16 %v3208, %v3207
        %v3268 = vpack.c.bf16 %v3210, %v3209
        %v3269 = vpack.c.bf16 %v3212, %v3211
        %v3270 = vpack.c.bf16 %v3214, %v3213
        %v3271 = vpack.c.bf16 %v3248, %v3247
        %v3272 = vpack.c.bf16 %v3250, %v3249
        %v3273 = vpack.c.bf16 %v3252, %v3251
        %v3274 = vpack.c.bf16 %v3254, %v3253
        %v3275 = vpack.c.bf16 %v3256, %v3255
        %v3276 = vpack.c.bf16 %v3258, %v3257
        %v3277 = vpack.c.bf16 %v3260, %v3259
        %v3278 = vpack.c.bf16 %v3262, %v3261
        %v3280 = vsel %vm692, %v3271, 0
        %v3283 = vsel %vm692, %v3272, 0
        %v3286 = vsel %vm692, %v3273, 0
        %v3289 = vsel %vm692, %v3274, 0
        %v3292 = vsel %vm692, %v3275, 0
        %v3295 = vsel %vm692, %v3276, 0
        %v3298 = vsel %vm692, %v3277, 0
        %v3301 = vsel %vm692, %v3278, 0
        %3303 = vmatprep.subr.bf16.mxu0 0
        %3304 = vmatpush1.bf16.msra.mxu0 0
        %3305 = vmatprep.subr.bf16.mxu0 0
        %3306 = vmatpush1.bf16.msra.mxu0 0
        %3307 = vmatprep.subr.bf16.mxu0 0
        %3308 = vmatpush1.bf16.msra.mxu0 0
        %3309 = vmatprep.subr.bf16.mxu0 0
        %3310 = vmatpush1.bf16.msra.mxu0 0
        %3311 = vmatprep.subr.bf16.mxu0 0
        %3312 = vmatpush1.bf16.msra.mxu0 0
        %3313 = vmatprep.subr.bf16.mxu0 0
        %3314 = vmatpush1.bf16.msra.mxu0 0
        %3315 = vmatprep.subr.bf16.mxu0 0
        %3316 = vmatpush1.bf16.msra.mxu0 0
        %3317 = vmatprep.subr.bf16.mxu0 0
        %3318 = vmatpush1.bf16.msra.mxu0 %v1716
        %3319 = vmatprep.subr.bf16.mxu0 0
        %3320 = vmatpush2.bf16.msra.mxu0 0
        %3321 = vmatprep.subr.bf16.mxu0 0
        %3322 = vmatpush2.bf16.msra.mxu0 0
        %3323 = vmatprep.subr.bf16.mxu0 0
        %3324 = vmatpush2.bf16.msra.mxu0 0
        %3325 = vmatprep.subr.bf16.mxu0 0
        %3326 = vmatpush2.bf16.msra.mxu0 0
        %3327 = vmatprep.subr.bf16.mxu0 0
        %3328 = vmatpush2.bf16.msra.mxu0 0
        %3329 = vmatprep.subr.bf16.mxu0 0
        %3330 = vmatpush2.bf16.msra.mxu0 0
        %3331 = vmatprep.subr.bf16.mxu0 0
        %3332 = vmatpush2.bf16.msra.mxu0 0
        %3333 = vmatprep.subr.bf16.mxu0 0
        %3334 = vmatpush2.bf16.msra.mxu0 0
        %3335 = vmatprep.mubr.bf16.mxu0 0
        %3336 = vmatmul.mubr.bf16.gmra.mxu0 %v3280
        %v3337 = vpop.f32.mrf.mxu0
        %v3338 = vadd.f32 0.0, %v3337
        %v3339 = vpop.f32.mrf.mxu0
        %v3340 = vpop.f32.mrf.mxu0
        %v3341 = vadd.f32 0.0, %v3340
        %v3342 = vpop.f32.mrf.mxu0
        %3343 = vmatprep.mubr.bf16.mxu0 0
        %3344 = vmatmul.mubr.bf16.gmra.mxu0 %v3283
        %v3345 = vpop.f32.mrf.mxu0
        %v3346 = vadd.f32 0.0, %v3345
        %v3347 = vpop.f32.mrf.mxu0
        %v3348 = vpop.f32.mrf.mxu0
        %v3349 = vadd.f32 0.0, %v3348
        %v3350 = vpop.f32.mrf.mxu0
        %3351 = vmatprep.mubr.bf16.mxu0 0
        %3352 = vmatmul.mubr.bf16.gmra.mxu0 %v3286
        %v3353 = vpop.f32.mrf.mxu0
        %v3354 = vadd.f32 0.0, %v3353
        %v3355 = vpop.f32.mrf.mxu0
        %v3356 = vpop.f32.mrf.mxu0
        %v3357 = vadd.f32 0.0, %v3356
        %v3358 = vpop.f32.mrf.mxu0
        %3359 = vmatprep.mubr.bf16.mxu0 0
        %3360 = vmatmul.mubr.bf16.gmra.mxu0 %v3289
        %v3361 = vpop.f32.mrf.mxu0
        %v3362 = vadd.f32 0.0, %v3361
        %v3363 = vpop.f32.mrf.mxu0
        %v3364 = vpop.f32.mrf.mxu0
        %v3365 = vadd.f32 0.0, %v3364
        %v3366 = vpop.f32.mrf.mxu0
        %3367 = vmatprep.mubr.bf16.mxu0 0
        %3368 = vmatmul.mubr.bf16.gmra.mxu0 %v3292
        %v3369 = vpop.f32.mrf.mxu0
        %v3370 = vadd.f32 0.0, %v3369
        %v3371 = vpop.f32.mrf.mxu0
        %v3372 = vpop.f32.mrf.mxu0
        %v3373 = vadd.f32 0.0, %v3372
        %v3374 = vpop.f32.mrf.mxu0
        %3375 = vmatprep.mubr.bf16.mxu0 0
        %3376 = vmatmul.mubr.bf16.gmra.mxu0 %v3295
        %v3377 = vpop.f32.mrf.mxu0
        %v3378 = vadd.f32 0.0, %v3377
        %v3379 = vpop.f32.mrf.mxu0
        %v3380 = vpop.f32.mrf.mxu0
        %v3381 = vadd.f32 0.0, %v3380
        %v3382 = vpop.f32.mrf.mxu0
        %3383 = vmatprep.mubr.bf16.mxu0 0
        %3384 = vmatmul.mubr.bf16.gmra.mxu0 %v3298
        %v3385 = vpop.f32.mrf.mxu0
        %v3386 = vadd.f32 0.0, %v3385
        %v3387 = vpop.f32.mrf.mxu0
        %v3388 = vpop.f32.mrf.mxu0
        %v3389 = vadd.f32 0.0, %v3388
        %v3390 = vpop.f32.mrf.mxu0
        %3391 = vmatprep.mubr.bf16.mxu0 0
        %3392 = vmatmul.mubr.bf16.gmra.mxu0 %v3301
        %v3393 = vpop.f32.mrf.mxu0
        %v3394 = vadd.f32 0.0, %v3393
        %v3395 = vpop.f32.mrf.mxu0
        %v3396 = vpop.f32.mrf.mxu0
        %v3397 = vadd.f32 0.0, %v3396
        %v3398 = vpop.f32.mrf.mxu0
        %3399 = vdwg.mxu0
        %v3401 = vsel %vm692, %v3263, 0
        %v3404 = vsel %vm692, %v3264, 0
        %v3407 = vsel %vm692, %v3265, 0
        %v3410 = vsel %vm692, %v3266, 0
        %v3413 = vsel %vm692, %v3267, 0
        %v3416 = vsel %vm692, %v3268, 0
        %v3419 = vsel %vm692, %v3269, 0
        %v3422 = vsel %vm692, %v3270, 0
        %3424 = vmatprep.subr.bf16.mxu0 0
        %3425 = vmatpush1.bf16.msra.mxu0 0
        %3426 = vmatprep.subr.bf16.mxu0 0
        %3427 = vmatpush1.bf16.msra.mxu0 0
        %3428 = vmatprep.subr.bf16.mxu0 0
        %3429 = vmatpush1.bf16.msra.mxu0 0
        %3430 = vmatprep.subr.bf16.mxu0 0
        %3431 = vmatpush1.bf16.msra.mxu0 0
        %3432 = vmatprep.subr.bf16.mxu0 0
        %3433 = vmatpush1.bf16.msra.mxu0 0
        %3434 = vmatprep.subr.bf16.mxu0 0
        %3435 = vmatpush1.bf16.msra.mxu0 0
        %3436 = vmatprep.subr.bf16.mxu0 0
        %3437 = vmatpush1.bf16.msra.mxu0 0
        %3438 = vmatprep.subr.bf16.mxu0 0
        %3439 = vmatpush1.bf16.msra.mxu0 %v1589
        %3440 = vmatprep.subr.bf16.mxu0 0
        %3441 = vmatpush2.bf16.msra.mxu0 0
        %3442 = vmatprep.subr.bf16.mxu0 0
        %3443 = vmatpush2.bf16.msra.mxu0 0
        %3444 = vmatprep.subr.bf16.mxu0 0
        %3445 = vmatpush2.bf16.msra.mxu0 0
        %3446 = vmatprep.subr.bf16.mxu0 0
        %3447 = vmatpush2.bf16.msra.mxu0 0
        %3448 = vmatprep.subr.bf16.mxu0 0
        %3449 = vmatpush2.bf16.msra.mxu0 0
        %3450 = vmatprep.subr.bf16.mxu0 0
        %3451 = vmatpush2.bf16.msra.mxu0 0
        %3452 = vmatprep.subr.bf16.mxu0 0
        %3453 = vmatpush2.bf16.msra.mxu0 0
        %3454 = vmatprep.subr.bf16.mxu0 0
        %3455 = vmatpush2.bf16.msra.mxu0 0
        %3456 = vmatprep.mubr.bf16.mxu0 0
        %3457 = vmatmul.mubr.bf16.gmra.mxu0 %v3401
        %v3458 = vpop.f32.mrf.mxu0
        %v3459 = vadd.f32 %v3338, %v3458
        %v3460 = vpop.f32.mrf.mxu0
        %v3461 = vpop.f32.mrf.mxu0
        %v3462 = vadd.f32 %v3341, %v3461
        %v3463 = vpop.f32.mrf.mxu0
        %3464 = vmatprep.mubr.bf16.mxu0 0
        %3465 = vmatmul.mubr.bf16.gmra.mxu0 %v3404
        %v3466 = vpop.f32.mrf.mxu0
        %v3467 = vadd.f32 %v3346, %v3466
        %v3468 = vpop.f32.mrf.mxu0
        %v3469 = vpop.f32.mrf.mxu0
        %v3470 = vadd.f32 %v3349, %v3469
        %v3471 = vpop.f32.mrf.mxu0
        %3472 = vmatprep.mubr.bf16.mxu0 0
        %3473 = vmatmul.mubr.bf16.gmra.mxu0 %v3407
        %v3474 = vpop.f32.mrf.mxu0
        %v3475 = vadd.f32 %v3354, %v3474
        %v3476 = vpop.f32.mrf.mxu0
        %v3477 = vpop.f32.mrf.mxu0
        %v3478 = vadd.f32 %v3357, %v3477
        %v3479 = vpop.f32.mrf.mxu0
        %3480 = vmatprep.mubr.bf16.mxu0 0
        %3481 = vmatmul.mubr.bf16.gmra.mxu0 %v3410
        %v3482 = vpop.f32.mrf.mxu0
        %v3483 = vadd.f32 %v3362, %v3482
        %v3484 = vpop.f32.mrf.mxu0
        %v3485 = vpop.f32.mrf.mxu0
        %v3486 = vadd.f32 %v3365, %v3485
        %v3487 = vpop.f32.mrf.mxu0
        %3488 = vmatprep.mubr.bf16.mxu0 0
        %3489 = vmatmul.mubr.bf16.gmra.mxu0 %v3413
        %v3490 = vpop.f32.mrf.mxu0
        %v3491 = vadd.f32 %v3370, %v3490
        %v3492 = vpop.f32.mrf.mxu0
        %v3493 = vpop.f32.mrf.mxu0
        %v3494 = vadd.f32 %v3373, %v3493
        %v3495 = vpop.f32.mrf.mxu0
        %3496 = vmatprep.mubr.bf16.mxu0 0
        %3497 = vmatmul.mubr.bf16.gmra.mxu0 %v3416
        %v3498 = vpop.f32.mrf.mxu0
        %v3499 = vadd.f32 %v3378, %v3498
        %v3500 = vpop.f32.mrf.mxu0
        %v3501 = vpop.f32.mrf.mxu0
        %v3502 = vadd.f32 %v3381, %v3501
        %v3503 = vpop.f32.mrf.mxu0
        %3504 = vmatprep.mubr.bf16.mxu0 0
        %3505 = vmatmul.mubr.bf16.gmra.mxu0 %v3419
        %v3506 = vpop.f32.mrf.mxu0
        %v3507 = vadd.f32 %v3386, %v3506
        %v3508 = vpop.f32.mrf.mxu0
        %v3509 = vpop.f32.mrf.mxu0
        %v3510 = vadd.f32 %v3389, %v3509
        %v3511 = vpop.f32.mrf.mxu0
        %3512 = vmatprep.mubr.bf16.mxu0 0
        %3513 = vmatmul.mubr.bf16.gmra.mxu0 %v3422
        %v3514 = vpop.f32.mrf.mxu0
        %v3515 = vadd.f32 %v3394, %v3514
        %v3516 = vpop.f32.mrf.mxu0
        %v3517 = vpop.f32.mrf.mxu0
        %v3518 = vadd.f32 %v3397, %v3517
        %v3519 = vpop.f32.mrf.mxu0
        %3520 = vdwg.mxu0
        %3521 = vmatprep.subr.bf16.mxu0 0
        %3522 = vmatpush1.bf16.msra.mxu0 0
        %3523 = vmatprep.subr.bf16.mxu0 0
        %3524 = vmatpush1.bf16.msra.mxu0 0
        %3525 = vmatprep.subr.bf16.mxu0 0
        %3526 = vmatpush1.bf16.msra.mxu0 0
        %3527 = vmatprep.subr.bf16.mxu0 0
        %3528 = vmatpush1.bf16.msra.mxu0 0
        %3529 = vmatprep.subr.bf16.mxu0 0
        %3530 = vmatpush1.bf16.msra.mxu0 0
        %3531 = vmatprep.subr.bf16.mxu0 0
        %3532 = vmatpush1.bf16.msra.mxu0 0
        %3533 = vmatprep.subr.bf16.mxu0 0
        %3534 = vmatpush1.bf16.msra.mxu0 0
        %3535 = vmatprep.subr.bf16.mxu0 0
        %3536 = vmatpush1.bf16.msra.mxu0 %v1589
        %3537 = vmatprep.subr.bf16.mxu0 0
        %3538 = vmatpush2.bf16.msra.mxu0 0
        %3539 = vmatprep.subr.bf16.mxu0 0
        %3540 = vmatpush2.bf16.msra.mxu0 0
        %3541 = vmatprep.subr.bf16.mxu0 0
        %3542 = vmatpush2.bf16.msra.mxu0 0
        %3543 = vmatprep.subr.bf16.mxu0 0
        %3544 = vmatpush2.bf16.msra.mxu0 0
        %3545 = vmatprep.subr.bf16.mxu0 0
        %3546 = vmatpush2.bf16.msra.mxu0 0
        %3547 = vmatprep.subr.bf16.mxu0 0
        %3548 = vmatpush2.bf16.msra.mxu0 0
        %3549 = vmatprep.subr.bf16.mxu0 0
        %3550 = vmatpush2.bf16.msra.mxu0 0
        %3551 = vmatprep.subr.bf16.mxu0 0
        %3552 = vmatpush2.bf16.msra.mxu0 0
        %3553 = vmatprep.mubr.bf16.mxu0 0
        %3554 = vmatmul.mubr.bf16.gmra.mxu0 %v3280
        %v3555 = vpop.f32.mrf.mxu0
        %v3556 = vadd.f32 0.0, %v3555
        %v3557 = vpop.f32.mrf.mxu0
        %v3558 = vpop.f32.mrf.mxu0
        %v3559 = vadd.f32 0.0, %v3558
        %v3560 = vpop.f32.mrf.mxu0
        %3561 = vmatprep.mubr.bf16.mxu0 0
        %3562 = vmatmul.mubr.bf16.gmra.mxu0 %v3283
        %v3563 = vpop.f32.mrf.mxu0
        %v3564 = vadd.f32 0.0, %v3563
        %v3565 = vpop.f32.mrf.mxu0
        %v3566 = vpop.f32.mrf.mxu0
        %v3567 = vadd.f32 0.0, %v3566
        %v3568 = vpop.f32.mrf.mxu0
        %3569 = vmatprep.mubr.bf16.mxu0 0
        %3570 = vmatmul.mubr.bf16.gmra.mxu0 %v3286
        %v3571 = vpop.f32.mrf.mxu0
        %v3572 = vadd.f32 0.0, %v3571
        %v3573 = vpop.f32.mrf.mxu0
        %v3574 = vpop.f32.mrf.mxu0
        %v3575 = vadd.f32 0.0, %v3574
        %v3576 = vpop.f32.mrf.mxu0
        %3577 = vmatprep.mubr.bf16.mxu0 0
        %3578 = vmatmul.mubr.bf16.gmra.mxu0 %v3289
        %v3579 = vpop.f32.mrf.mxu0
        %v3580 = vadd.f32 0.0, %v3579
        %v3581 = vpop.f32.mrf.mxu0
        %v3582 = vpop.f32.mrf.mxu0
        %v3583 = vadd.f32 0.0, %v3582
        %v3584 = vpop.f32.mrf.mxu0
        %3585 = vmatprep.mubr.bf16.mxu0 0
        %3586 = vmatmul.mubr.bf16.gmra.mxu0 %v3292
        %v3587 = vpop.f32.mrf.mxu0
        %v3588 = vadd.f32 0.0, %v3587
        %v3589 = vpop.f32.mrf.mxu0
        %v3590 = vpop.f32.mrf.mxu0
        %v3591 = vadd.f32 0.0, %v3590
        %v3592 = vpop.f32.mrf.mxu0
        %3593 = vmatprep.mubr.bf16.mxu0 0
        %3594 = vmatmul.mubr.bf16.gmra.mxu0 %v3295
        %v3595 = vpop.f32.mrf.mxu0
        %v3596 = vadd.f32 0.0, %v3595
        %v3597 = vpop.f32.mrf.mxu0
        %v3598 = vpop.f32.mrf.mxu0
        %v3599 = vadd.f32 0.0, %v3598
        %v3600 = vpop.f32.mrf.mxu0
        %3601 = vmatprep.mubr.bf16.mxu0 0
        %3602 = vmatmul.mubr.bf16.gmra.mxu0 %v3298
        %v3603 = vpop.f32.mrf.mxu0
        %v3604 = vadd.f32 0.0, %v3603
        %v3605 = vpop.f32.mrf.mxu0
        %v3606 = vpop.f32.mrf.mxu0
        %v3607 = vadd.f32 0.0, %v3606
        %v3608 = vpop.f32.mrf.mxu0
        %3609 = vmatprep.mubr.bf16.mxu0 0
        %3610 = vmatmul.mubr.bf16.gmra.mxu0 %v3301
        %v3611 = vpop.f32.mrf.mxu0
        %v3612 = vadd.f32 0.0, %v3611
        %v3613 = vpop.f32.mrf.mxu0
        %v3614 = vpop.f32.mrf.mxu0
        %v3615 = vadd.f32 0.0, %v3614
        %v3616 = vpop.f32.mrf.mxu0
        %3617 = vdwg.mxu0
        %3618 = vmatprep.subr.bf16.mxu0 0
        %3619 = vmatpush1.bf16.msra.mxu0 0
        %3620 = vmatprep.subr.bf16.mxu0 0
        %3621 = vmatpush1.bf16.msra.mxu0 0
        %3622 = vmatprep.subr.bf16.mxu0 0
        %3623 = vmatpush1.bf16.msra.mxu0 0
        %3624 = vmatprep.subr.bf16.mxu0 0
        %3625 = vmatpush1.bf16.msra.mxu0 0
        %3626 = vmatprep.subr.bf16.mxu0 0
        %3627 = vmatpush1.bf16.msra.mxu0 0
        %3628 = vmatprep.subr.bf16.mxu0 0
        %3629 = vmatpush1.bf16.msra.mxu0 0
        %3630 = vmatprep.subr.bf16.mxu0 0
        %3631 = vmatpush1.bf16.msra.mxu0 0
        %3632 = vmatprep.subr.bf16.mxu0 0
        %3633 = vmatpush1.bf16.msra.mxu0 %v1716
        %3634 = vmatprep.subr.bf16.mxu0 0
        %3635 = vmatpush2.bf16.msra.mxu0 0
        %3636 = vmatprep.subr.bf16.mxu0 0
        %3637 = vmatpush2.bf16.msra.mxu0 0
        %3638 = vmatprep.subr.bf16.mxu0 0
        %3639 = vmatpush2.bf16.msra.mxu0 0
        %3640 = vmatprep.subr.bf16.mxu0 0
        %3641 = vmatpush2.bf16.msra.mxu0 0
        %3642 = vmatprep.subr.bf16.mxu0 0
        %3643 = vmatpush2.bf16.msra.mxu0 0
        %3644 = vmatprep.subr.bf16.mxu0 0
        %3645 = vmatpush2.bf16.msra.mxu0 0
        %3646 = vmatprep.subr.bf16.mxu0 0
        %3647 = vmatpush2.bf16.msra.mxu0 0
        %3648 = vmatprep.subr.bf16.mxu0 0
        %3649 = vmatpush2.bf16.msra.mxu0 0
        %3650 = vmatprep.mubr.bf16.mxu0 0
        %3651 = vmatmul.mubr.bf16.gmra.mxu0 %v3401
        %v3652 = vpop.f32.mrf.mxu0
        %v3653 = vadd.f32 0.0, %v3652
        %v3654 = vpop.f32.mrf.mxu0
        %v3655 = vpop.f32.mrf.mxu0
        %v3656 = vadd.f32 0.0, %v3655
        %v3657 = vpop.f32.mrf.mxu0
        %3658 = vmatprep.mubr.bf16.mxu0 0
        %3659 = vmatmul.mubr.bf16.gmra.mxu0 %v3404
        %v3660 = vpop.f32.mrf.mxu0
        %v3661 = vadd.f32 0.0, %v3660
        %v3662 = vpop.f32.mrf.mxu0
        %v3663 = vpop.f32.mrf.mxu0
        %v3664 = vadd.f32 0.0, %v3663
        %v3665 = vpop.f32.mrf.mxu0
        %3666 = vmatprep.mubr.bf16.mxu0 0
        %3667 = vmatmul.mubr.bf16.gmra.mxu0 %v3407
        %v3668 = vpop.f32.mrf.mxu0
        %v3669 = vadd.f32 0.0, %v3668
        %v3670 = vpop.f32.mrf.mxu0
        %v3671 = vpop.f32.mrf.mxu0
        %v3672 = vadd.f32 0.0, %v3671
        %v3673 = vpop.f32.mrf.mxu0
        %3674 = vmatprep.mubr.bf16.mxu0 0
        %3675 = vmatmul.mubr.bf16.gmra.mxu0 %v3410
        %v3676 = vpop.f32.mrf.mxu0
        %v3677 = vadd.f32 0.0, %v3676
        %v3678 = vpop.f32.mrf.mxu0
        %v3679 = vpop.f32.mrf.mxu0
        %v3680 = vadd.f32 0.0, %v3679
        %v3681 = vpop.f32.mrf.mxu0
        %3682 = vmatprep.mubr.bf16.mxu0 0
        %3683 = vmatmul.mubr.bf16.gmra.mxu0 %v3413
        %v3684 = vpop.f32.mrf.mxu0
        %v3685 = vadd.f32 0.0, %v3684
        %v3686 = vpop.f32.mrf.mxu0
        %v3687 = vpop.f32.mrf.mxu0
        %v3688 = vadd.f32 0.0, %v3687
        %v3689 = vpop.f32.mrf.mxu0
        %3690 = vmatprep.mubr.bf16.mxu0 0
        %3691 = vmatmul.mubr.bf16.gmra.mxu0 %v3416
        %v3692 = vpop.f32.mrf.mxu0
        %v3693 = vadd.f32 0.0, %v3692
        %v3694 = vpop.f32.mrf.mxu0
        %v3695 = vpop.f32.mrf.mxu0
        %v3696 = vadd.f32 0.0, %v3695
        %v3697 = vpop.f32.mrf.mxu0
        %3698 = vmatprep.mubr.bf16.mxu0 0
        %3699 = vmatmul.mubr.bf16.gmra.mxu0 %v3419
        %v3700 = vpop.f32.mrf.mxu0
        %v3701 = vadd.f32 0.0, %v3700
        %v3702 = vpop.f32.mrf.mxu0
        %v3703 = vpop.f32.mrf.mxu0
        %v3704 = vadd.f32 0.0, %v3703
        %v3705 = vpop.f32.mrf.mxu0
        %3706 = vmatprep.mubr.bf16.mxu0 0
        %3707 = vmatmul.mubr.bf16.gmra.mxu0 %v3422
        %v3708 = vpop.f32.mrf.mxu0
        %v3709 = vadd.f32 0.0, %v3708
        %v3710 = vpop.f32.mrf.mxu0
        %v3711 = vpop.f32.mrf.mxu0
        %v3712 = vadd.f32 0.0, %v3711
        %v3713 = vpop.f32.mrf.mxu0
        %3714 = vdwg.mxu0
        %v3715 = vsub.f32 %v3556, %v3653
        %v3716 = vsub.f32 %v3559, %v3656
        %v3717 = vsub.f32 %v3564, %v3661
        %v3718 = vsub.f32 %v3567, %v3664
        %v3719 = vsub.f32 %v3572, %v3669
        %v3720 = vsub.f32 %v3575, %v3672
        %v3721 = vsub.f32 %v3580, %v3677
        %v3722 = vsub.f32 %v3583, %v3680
        %v3723 = vsub.f32 %v3588, %v3685
        %v3724 = vsub.f32 %v3591, %v3688
        %v3725 = vsub.f32 %v3596, %v3693
        %v3726 = vsub.f32 %v3599, %v3696
        %v3727 = vsub.f32 %v3604, %v3701
        %v3728 = vsub.f32 %v3607, %v3704
        %v3729 = vsub.f32 %v3612, %v3709
        %v3730 = vsub.f32 %v3615, %v3712
        %v3731 = vpack.c.bf16 %v3462, %v3459
        %v3732 = vpack.c.bf16 %v3470, %v3467
        %v3733 = vpack.c.bf16 %v3478, %v3475
        %v3734 = vpack.c.bf16 %v3486, %v3483
        %v3735 = vpack.c.bf16 %v3494, %v3491
        %v3736 = vpack.c.bf16 %v3502, %v3499
        %v3737 = vpack.c.bf16 %v3510, %v3507
        %v3738 = vpack.c.bf16 %v3518, %v3515
        %v3739 = vpack.c.bf16 %v3716, %v3715
        %v3740 = vpack.c.bf16 %v3718, %v3717
        %v3741 = vpack.c.bf16 %v3720, %v3719
        %v3742 = vpack.c.bf16 %v3722, %v3721
        %v3743 = vpack.c.bf16 %v3724, %v3723
        %v3744 = vpack.c.bf16 %v3726, %v3725
        %v3745 = vpack.c.bf16 %v3728, %v3727
        %v3746 = vpack.c.bf16 %v3730, %v3729
        %3747 = vmatprep.subr.bf16.mxu0 0
        %3748 = vmatpush1.bf16.msra.mxu0 0
        %3749 = vmatprep.subr.bf16.mxu0 0
        %3750 = vmatpush1.bf16.msra.mxu0 0
        %3751 = vmatprep.subr.bf16.mxu0 0
        %3752 = vmatpush1.bf16.msra.mxu0 0
        %3753 = vmatprep.subr.bf16.mxu0 0
        %3754 = vmatpush1.bf16.msra.mxu0 0
        %3755 = vmatprep.subr.bf16.mxu0 0
        %3756 = vmatpush1.bf16.msra.mxu0 0
        %3757 = vmatprep.subr.bf16.mxu0 0
        %3758 = vmatpush1.bf16.msra.mxu0 0
        %3759 = vmatprep.subr.bf16.mxu0 0
        %3760 = vmatpush1.bf16.msra.mxu0 0
        %3761 = vmatprep.subr.bf16.mxu0 0
        %3762 = vmatpush1.bf16.msra.mxu0 %v3739
        %3763 = vmatprep.subr.bf16.mxu0 0
        %3764 = vmatpush2.bf16.msra.mxu0 0
        %3765 = vmatprep.subr.bf16.mxu0 0
        %3766 = vmatpush2.bf16.msra.mxu0 0
        %3767 = vmatprep.subr.bf16.mxu0 0
        %3768 = vmatpush2.bf16.msra.mxu0 0
        %3769 = vmatprep.subr.bf16.mxu0 0
        %3770 = vmatpush2.bf16.msra.mxu0 0
        %3771 = vmatprep.subr.bf16.mxu0 0
        %3772 = vmatpush2.bf16.msra.mxu0 0
        %3773 = vmatprep.subr.bf16.mxu0 0
        %3774 = vmatpush2.bf16.msra.mxu0 0
        %3775 = vmatprep.subr.bf16.mxu0 0
        %3776 = vmatpush2.bf16.msra.mxu0 0
        %3777 = vmatprep.subr.bf16.mxu0 0
        %3778 = vmatpush2.bf16.msra.mxu0 0
        %3779 = vmatprep.mubr.bf16.mxu0 0
        %3780 = vmatmul.mubr.bf16.gmra.mxu0 %v2163
        %v3781 = vpop.f32.mrf.mxu0
        %v3782 = vadd.f32 0.0, %v3781
        %v3783 = vpop.f32.mrf.mxu0
        %v3784 = vpop.f32.mrf.mxu0
        %v3785 = vadd.f32 0.0, %v3784
        %v3786 = vpop.f32.mrf.mxu0
        %3787 = vdwg.mxu0
        %3788 = vmatprep.subr.bf16.mxu0 0
        %3789 = vmatpush1.bf16.msra.mxu0 0
        %3790 = vmatprep.subr.bf16.mxu0 0
        %3791 = vmatpush1.bf16.msra.mxu0 0
        %3792 = vmatprep.subr.bf16.mxu0 0
        %3793 = vmatpush1.bf16.msra.mxu0 0
        %3794 = vmatprep.subr.bf16.mxu0 0
        %3795 = vmatpush1.bf16.msra.mxu0 0
        %3796 = vmatprep.subr.bf16.mxu0 0
        %3797 = vmatpush1.bf16.msra.mxu0 0
        %3798 = vmatprep.subr.bf16.mxu0 0
        %3799 = vmatpush1.bf16.msra.mxu0 0
        %3800 = vmatprep.subr.bf16.mxu0 0
        %3801 = vmatpush1.bf16.msra.mxu0 0
        %3802 = vmatprep.subr.bf16.mxu0 0
        %3803 = vmatpush1.bf16.msra.mxu0 %v3740
        %3804 = vmatprep.subr.bf16.mxu0 0
        %3805 = vmatpush2.bf16.msra.mxu0 0
        %3806 = vmatprep.subr.bf16.mxu0 0
        %3807 = vmatpush2.bf16.msra.mxu0 0
        %3808 = vmatprep.subr.bf16.mxu0 0
        %3809 = vmatpush2.bf16.msra.mxu0 0
        %3810 = vmatprep.subr.bf16.mxu0 0
        %3811 = vmatpush2.bf16.msra.mxu0 0
        %3812 = vmatprep.subr.bf16.mxu0 0
        %3813 = vmatpush2.bf16.msra.mxu0 0
        %3814 = vmatprep.subr.bf16.mxu0 0
        %3815 = vmatpush2.bf16.msra.mxu0 0
        %3816 = vmatprep.subr.bf16.mxu0 0
        %3817 = vmatpush2.bf16.msra.mxu0 0
        %3818 = vmatprep.subr.bf16.mxu0 0
        %3819 = vmatpush2.bf16.msra.mxu0 0
        %3820 = vmatprep.mubr.bf16.mxu0 0
        %3821 = vmatmul.mubr.bf16.gmra.mxu0 %v2163
        %v3822 = vpop.f32.mrf.mxu0
        %v3823 = vadd.f32 0.0, %v3822
        %v3824 = vpop.f32.mrf.mxu0
        %v3825 = vpop.f32.mrf.mxu0
        %v3826 = vadd.f32 0.0, %v3825
        %v3827 = vpop.f32.mrf.mxu0
        %3828 = vdwg.mxu0
        %3829 = vmatprep.subr.bf16.mxu0 0
        %3830 = vmatpush1.bf16.msra.mxu0 0
        %3831 = vmatprep.subr.bf16.mxu0 0
        %3832 = vmatpush1.bf16.msra.mxu0 0
        %3833 = vmatprep.subr.bf16.mxu0 0
        %3834 = vmatpush1.bf16.msra.mxu0 0
        %3835 = vmatprep.subr.bf16.mxu0 0
        %3836 = vmatpush1.bf16.msra.mxu0 0
        %3837 = vmatprep.subr.bf16.mxu0 0
        %3838 = vmatpush1.bf16.msra.mxu0 0
        %3839 = vmatprep.subr.bf16.mxu0 0
        %3840 = vmatpush1.bf16.msra.mxu0 0
        %3841 = vmatprep.subr.bf16.mxu0 0
        %3842 = vmatpush1.bf16.msra.mxu0 0
        %3843 = vmatprep.subr.bf16.mxu0 0
        %3844 = vmatpush1.bf16.msra.mxu0 %v3741
        %3845 = vmatprep.subr.bf16.mxu0 0
        %3846 = vmatpush2.bf16.msra.mxu0 0
        %3847 = vmatprep.subr.bf16.mxu0 0
        %3848 = vmatpush2.bf16.msra.mxu0 0
        %3849 = vmatprep.subr.bf16.mxu0 0
        %3850 = vmatpush2.bf16.msra.mxu0 0
        %3851 = vmatprep.subr.bf16.mxu0 0
        %3852 = vmatpush2.bf16.msra.mxu0 0
        %3853 = vmatprep.subr.bf16.mxu0 0
        %3854 = vmatpush2.bf16.msra.mxu0 0
        %3855 = vmatprep.subr.bf16.mxu0 0
        %3856 = vmatpush2.bf16.msra.mxu0 0
        %3857 = vmatprep.subr.bf16.mxu0 0
        %3858 = vmatpush2.bf16.msra.mxu0 0
        %3859 = vmatprep.subr.bf16.mxu0 0
        %3860 = vmatpush2.bf16.msra.mxu0 0
        %3861 = vmatprep.mubr.bf16.mxu0 0
        %3862 = vmatmul.mubr.bf16.gmra.mxu0 %v2163
        %v3863 = vpop.f32.mrf.mxu0
        %v3864 = vadd.f32 0.0, %v3863
        %v3865 = vpop.f32.mrf.mxu0
        %v3866 = vpop.f32.mrf.mxu0
        %v3867 = vadd.f32 0.0, %v3866
        %v3868 = vpop.f32.mrf.mxu0
        %3869 = vdwg.mxu0
        %3870 = vmatprep.subr.bf16.mxu0 0
        %3871 = vmatpush1.bf16.msra.mxu0 0
        %3872 = vmatprep.subr.bf16.mxu0 0
        %3873 = vmatpush1.bf16.msra.mxu0 0
        %3874 = vmatprep.subr.bf16.mxu0 0
        %3875 = vmatpush1.bf16.msra.mxu0 0
        %3876 = vmatprep.subr.bf16.mxu0 0
        %3877 = vmatpush1.bf16.msra.mxu0 0
        %3878 = vmatprep.subr.bf16.mxu0 0
        %3879 = vmatpush1.bf16.msra.mxu0 0
        %3880 = vmatprep.subr.bf16.mxu0 0
        %3881 = vmatpush1.bf16.msra.mxu0 0
        %3882 = vmatprep.subr.bf16.mxu0 0
        %3883 = vmatpush1.bf16.msra.mxu0 0
        %3884 = vmatprep.subr.bf16.mxu0 0
        %3885 = vmatpush1.bf16.msra.mxu0 %v3742
        %3886 = vmatprep.subr.bf16.mxu0 0
        %3887 = vmatpush2.bf16.msra.mxu0 0
        %3888 = vmatprep.subr.bf16.mxu0 0
        %3889 = vmatpush2.bf16.msra.mxu0 0
        %3890 = vmatprep.subr.bf16.mxu0 0
        %3891 = vmatpush2.bf16.msra.mxu0 0
        %3892 = vmatprep.subr.bf16.mxu0 0
        %3893 = vmatpush2.bf16.msra.mxu0 0
        %3894 = vmatprep.subr.bf16.mxu0 0
        %3895 = vmatpush2.bf16.msra.mxu0 0
        %3896 = vmatprep.subr.bf16.mxu0 0
        %3897 = vmatpush2.bf16.msra.mxu0 0
        %3898 = vmatprep.subr.bf16.mxu0 0
        %3899 = vmatpush2.bf16.msra.mxu0 0
        %3900 = vmatprep.subr.bf16.mxu0 0
        %3901 = vmatpush2.bf16.msra.mxu0 0
        %3902 = vmatprep.mubr.bf16.mxu0 0
        %3903 = vmatmul.mubr.bf16.gmra.mxu0 %v2163
        %v3904 = vpop.f32.mrf.mxu0
        %v3905 = vadd.f32 0.0, %v3904
        %v3906 = vpop.f32.mrf.mxu0
        %v3907 = vpop.f32.mrf.mxu0
        %v3908 = vadd.f32 0.0, %v3907
        %v3909 = vpop.f32.mrf.mxu0
        %3910 = vdwg.mxu0
        %3911 = vmatprep.subr.bf16.mxu0 0
        %3912 = vmatpush1.bf16.msra.mxu0 0
        %3913 = vmatprep.subr.bf16.mxu0 0
        %3914 = vmatpush1.bf16.msra.mxu0 0
        %3915 = vmatprep.subr.bf16.mxu0 0
        %3916 = vmatpush1.bf16.msra.mxu0 0
        %3917 = vmatprep.subr.bf16.mxu0 0
        %3918 = vmatpush1.bf16.msra.mxu0 0
        %3919 = vmatprep.subr.bf16.mxu0 0
        %3920 = vmatpush1.bf16.msra.mxu0 0
        %3921 = vmatprep.subr.bf16.mxu0 0
        %3922 = vmatpush1.bf16.msra.mxu0 0
        %3923 = vmatprep.subr.bf16.mxu0 0
        %3924 = vmatpush1.bf16.msra.mxu0 0
        %3925 = vmatprep.subr.bf16.mxu0 0
        %3926 = vmatpush1.bf16.msra.mxu0 %v3743
        %3927 = vmatprep.subr.bf16.mxu0 0
        %3928 = vmatpush2.bf16.msra.mxu0 0
        %3929 = vmatprep.subr.bf16.mxu0 0
        %3930 = vmatpush2.bf16.msra.mxu0 0
        %3931 = vmatprep.subr.bf16.mxu0 0
        %3932 = vmatpush2.bf16.msra.mxu0 0
        %3933 = vmatprep.subr.bf16.mxu0 0
        %3934 = vmatpush2.bf16.msra.mxu0 0
        %3935 = vmatprep.subr.bf16.mxu0 0
        %3936 = vmatpush2.bf16.msra.mxu0 0
        %3937 = vmatprep.subr.bf16.mxu0 0
        %3938 = vmatpush2.bf16.msra.mxu0 0
        %3939 = vmatprep.subr.bf16.mxu0 0
        %3940 = vmatpush2.bf16.msra.mxu0 0
        %3941 = vmatprep.subr.bf16.mxu0 0
        %3942 = vmatpush2.bf16.msra.mxu0 0
        %3943 = vmatprep.mubr.bf16.mxu0 0
        %3944 = vmatmul.mubr.bf16.gmra.mxu0 %v2163
        %v3945 = vpop.f32.mrf.mxu0
        %v3946 = vadd.f32 0.0, %v3945
        %v3947 = vpop.f32.mrf.mxu0
        %v3948 = vpop.f32.mrf.mxu0
        %v3949 = vadd.f32 0.0, %v3948
        %v3950 = vpop.f32.mrf.mxu0
        %3951 = vdwg.mxu0
        %3952 = vmatprep.subr.bf16.mxu0 0
        %3953 = vmatpush1.bf16.msra.mxu0 0
        %3954 = vmatprep.subr.bf16.mxu0 0
        %3955 = vmatpush1.bf16.msra.mxu0 0
        %3956 = vmatprep.subr.bf16.mxu0 0
        %3957 = vmatpush1.bf16.msra.mxu0 0
        %3958 = vmatprep.subr.bf16.mxu0 0
        %3959 = vmatpush1.bf16.msra.mxu0 0
        %3960 = vmatprep.subr.bf16.mxu0 0
        %3961 = vmatpush1.bf16.msra.mxu0 0
        %3962 = vmatprep.subr.bf16.mxu0 0
        %3963 = vmatpush1.bf16.msra.mxu0 0
        %3964 = vmatprep.subr.bf16.mxu0 0
        %3965 = vmatpush1.bf16.msra.mxu0 0
        %3966 = vmatprep.subr.bf16.mxu0 0
        %3967 = vmatpush1.bf16.msra.mxu0 %v3744
        %3968 = vmatprep.subr.bf16.mxu0 0
        %3969 = vmatpush2.bf16.msra.mxu0 0
        %3970 = vmatprep.subr.bf16.mxu0 0
        %3971 = vmatpush2.bf16.msra.mxu0 0
        %3972 = vmatprep.subr.bf16.mxu0 0
        %3973 = vmatpush2.bf16.msra.mxu0 0
        %3974 = vmatprep.subr.bf16.mxu0 0
        %3975 = vmatpush2.bf16.msra.mxu0 0
        %3976 = vmatprep.subr.bf16.mxu0 0
        %3977 = vmatpush2.bf16.msra.mxu0 0
        %3978 = vmatprep.subr.bf16.mxu0 0
        %3979 = vmatpush2.bf16.msra.mxu0 0
        %3980 = vmatprep.subr.bf16.mxu0 0
        %3981 = vmatpush2.bf16.msra.mxu0 0
        %3982 = vmatprep.subr.bf16.mxu0 0
        %3983 = vmatpush2.bf16.msra.mxu0 0
        %3984 = vmatprep.mubr.bf16.mxu0 0
        %3985 = vmatmul.mubr.bf16.gmra.mxu0 %v2163
        %v3986 = vpop.f32.mrf.mxu0
        %v3987 = vadd.f32 0.0, %v3986
        %v3988 = vpop.f32.mrf.mxu0
        %v3989 = vpop.f32.mrf.mxu0
        %v3990 = vadd.f32 0.0, %v3989
        %v3991 = vpop.f32.mrf.mxu0
        %3992 = vdwg.mxu0
        %3993 = vmatprep.subr.bf16.mxu0 0
        %3994 = vmatpush1.bf16.msra.mxu0 0
        %3995 = vmatprep.subr.bf16.mxu0 0
        %3996 = vmatpush1.bf16.msra.mxu0 0
        %3997 = vmatprep.subr.bf16.mxu0 0
        %3998 = vmatpush1.bf16.msra.mxu0 0
        %3999 = vmatprep.subr.bf16.mxu0 0
        %4000 = vmatpush1.bf16.msra.mxu0 0
        %4001 = vmatprep.subr.bf16.mxu0 0
        %4002 = vmatpush1.bf16.msra.mxu0 0
        %4003 = vmatprep.subr.bf16.mxu0 0
        %4004 = vmatpush1.bf16.msra.mxu0 0
        %4005 = vmatprep.subr.bf16.mxu0 0
        %4006 = vmatpush1.bf16.msra.mxu0 0
        %4007 = vmatprep.subr.bf16.mxu0 0
        %4008 = vmatpush1.bf16.msra.mxu0 %v3745
        %4009 = vmatprep.subr.bf16.mxu0 0
        %4010 = vmatpush2.bf16.msra.mxu0 0
        %4011 = vmatprep.subr.bf16.mxu0 0
        %4012 = vmatpush2.bf16.msra.mxu0 0
        %4013 = vmatprep.subr.bf16.mxu0 0
        %4014 = vmatpush2.bf16.msra.mxu0 0
        %4015 = vmatprep.subr.bf16.mxu0 0
        %4016 = vmatpush2.bf16.msra.mxu0 0
        %4017 = vmatprep.subr.bf16.mxu0 0
        %4018 = vmatpush2.bf16.msra.mxu0 0
        %4019 = vmatprep.subr.bf16.mxu0 0
        %4020 = vmatpush2.bf16.msra.mxu0 0
        %4021 = vmatprep.subr.bf16.mxu0 0
        %4022 = vmatpush2.bf16.msra.mxu0 0
        %4023 = vmatprep.subr.bf16.mxu0 0
        %4024 = vmatpush2.bf16.msra.mxu0 0
        %4025 = vmatprep.mubr.bf16.mxu0 0
        %4026 = vmatmul.mubr.bf16.gmra.mxu0 %v2163
        %v4027 = vpop.f32.mrf.mxu0
        %v4028 = vadd.f32 0.0, %v4027
        %v4029 = vpop.f32.mrf.mxu0
        %v4030 = vpop.f32.mrf.mxu0
        %v4031 = vadd.f32 0.0, %v4030
        %v4032 = vpop.f32.mrf.mxu0
        %4033 = vdwg.mxu0
        %4034 = vmatprep.subr.bf16.mxu0 0
        %4035 = vmatpush1.bf16.msra.mxu0 0
        %4036 = vmatprep.subr.bf16.mxu0 0
        %4037 = vmatpush1.bf16.msra.mxu0 0
        %4038 = vmatprep.subr.bf16.mxu0 0
        %4039 = vmatpush1.bf16.msra.mxu0 0
        %4040 = vmatprep.subr.bf16.mxu0 0
        %4041 = vmatpush1.bf16.msra.mxu0 0
        %4042 = vmatprep.subr.bf16.mxu0 0
        %4043 = vmatpush1.bf16.msra.mxu0 0
        %4044 = vmatprep.subr.bf16.mxu0 0
        %4045 = vmatpush1.bf16.msra.mxu0 0
        %4046 = vmatprep.subr.bf16.mxu0 0
        %4047 = vmatpush1.bf16.msra.mxu0 0
        %4048 = vmatprep.subr.bf16.mxu0 0
        %4049 = vmatpush1.bf16.msra.mxu0 %v3746
        %4050 = vmatprep.subr.bf16.mxu0 0
        %4051 = vmatpush2.bf16.msra.mxu0 0
        %4052 = vmatprep.subr.bf16.mxu0 0
        %4053 = vmatpush2.bf16.msra.mxu0 0
        %4054 = vmatprep.subr.bf16.mxu0 0
        %4055 = vmatpush2.bf16.msra.mxu0 0
        %4056 = vmatprep.subr.bf16.mxu0 0
        %4057 = vmatpush2.bf16.msra.mxu0 0
        %4058 = vmatprep.subr.bf16.mxu0 0
        %4059 = vmatpush2.bf16.msra.mxu0 0
        %4060 = vmatprep.subr.bf16.mxu0 0
        %4061 = vmatpush2.bf16.msra.mxu0 0
        %4062 = vmatprep.subr.bf16.mxu0 0
        %4063 = vmatpush2.bf16.msra.mxu0 0
        %4064 = vmatprep.subr.bf16.mxu0 0
        %4065 = vmatpush2.bf16.msra.mxu0 0
        %4066 = vmatprep.mubr.bf16.mxu0 0
        %4067 = vmatmul.mubr.bf16.gmra.mxu0 %v2163
        %v4068 = vpop.f32.mrf.mxu0
        %v4069 = vadd.f32 0.0, %v4068
        %v4070 = vpop.f32.mrf.mxu0
        %v4071 = vpop.f32.mrf.mxu0
        %v4072 = vadd.f32 0.0, %v4071
        %v4073 = vpop.f32.mrf.mxu0
        %4074 = vdwg.mxu0
        %4075 = vmatprep.subr.bf16.mxu0 0
        %4076 = vmatpush1.bf16.msra.mxu0 0
        %4077 = vmatprep.subr.bf16.mxu0 0
        %4078 = vmatpush1.bf16.msra.mxu0 0
        %4079 = vmatprep.subr.bf16.mxu0 0
        %4080 = vmatpush1.bf16.msra.mxu0 0
        %4081 = vmatprep.subr.bf16.mxu0 0
        %4082 = vmatpush1.bf16.msra.mxu0 0
        %4083 = vmatprep.subr.bf16.mxu0 0
        %4084 = vmatpush1.bf16.msra.mxu0 0
        %4085 = vmatprep.subr.bf16.mxu0 0
        %4086 = vmatpush1.bf16.msra.mxu0 0
        %4087 = vmatprep.subr.bf16.mxu0 0
        %4088 = vmatpush1.bf16.msra.mxu0 0
        %4089 = vmatprep.subr.bf16.mxu0 0
        %4090 = vmatpush1.bf16.msra.mxu0 %v3731
        %4091 = vmatprep.subr.bf16.mxu0 0
        %4092 = vmatpush2.bf16.msra.mxu0 0
        %4093 = vmatprep.subr.bf16.mxu0 0
        %4094 = vmatpush2.bf16.msra.mxu0 0
        %4095 = vmatprep.subr.bf16.mxu0 0
        %4096 = vmatpush2.bf16.msra.mxu0 0
        %4097 = vmatprep.subr.bf16.mxu0 0
        %4098 = vmatpush2.bf16.msra.mxu0 0
        %4099 = vmatprep.subr.bf16.mxu0 0
        %4100 = vmatpush2.bf16.msra.mxu0 0
        %4101 = vmatprep.subr.bf16.mxu0 0
        %4102 = vmatpush2.bf16.msra.mxu0 0
        %4103 = vmatprep.subr.bf16.mxu0 0
        %4104 = vmatpush2.bf16.msra.mxu0 0
        %4105 = vmatprep.subr.bf16.mxu0 0
        %4106 = vmatpush2.bf16.msra.mxu0 0
        %4107 = vmatprep.mubr.bf16.mxu0 0
        %4108 = vmatmul.mubr.bf16.gmra.mxu0 %v1832
        %v4109 = vpop.f32.mrf.mxu0
        %v4110 = vadd.f32 %v3782, %v4109
        %v4111 = vpop.f32.mrf.mxu0
        %v4112 = vpop.f32.mrf.mxu0
        %v4113 = vadd.f32 %v3785, %v4112
        %v4114 = vpop.f32.mrf.mxu0
        %4115 = vdwg.mxu0
        %4116 = vmatprep.subr.bf16.mxu0 0
        %4117 = vmatpush1.bf16.msra.mxu0 0
        %4118 = vmatprep.subr.bf16.mxu0 0
        %4119 = vmatpush1.bf16.msra.mxu0 0
        %4120 = vmatprep.subr.bf16.mxu0 0
        %4121 = vmatpush1.bf16.msra.mxu0 0
        %4122 = vmatprep.subr.bf16.mxu0 0
        %4123 = vmatpush1.bf16.msra.mxu0 0
        %4124 = vmatprep.subr.bf16.mxu0 0
        %4125 = vmatpush1.bf16.msra.mxu0 0
        %4126 = vmatprep.subr.bf16.mxu0 0
        %4127 = vmatpush1.bf16.msra.mxu0 0
        %4128 = vmatprep.subr.bf16.mxu0 0
        %4129 = vmatpush1.bf16.msra.mxu0 0
        %4130 = vmatprep.subr.bf16.mxu0 0
        %4131 = vmatpush1.bf16.msra.mxu0 %v3732
        %4132 = vmatprep.subr.bf16.mxu0 0
        %4133 = vmatpush2.bf16.msra.mxu0 0
        %4134 = vmatprep.subr.bf16.mxu0 0
        %4135 = vmatpush2.bf16.msra.mxu0 0
        %4136 = vmatprep.subr.bf16.mxu0 0
        %4137 = vmatpush2.bf16.msra.mxu0 0
        %4138 = vmatprep.subr.bf16.mxu0 0
        %4139 = vmatpush2.bf16.msra.mxu0 0
        %4140 = vmatprep.subr.bf16.mxu0 0
        %4141 = vmatpush2.bf16.msra.mxu0 0
        %4142 = vmatprep.subr.bf16.mxu0 0
        %4143 = vmatpush2.bf16.msra.mxu0 0
        %4144 = vmatprep.subr.bf16.mxu0 0
        %4145 = vmatpush2.bf16.msra.mxu0 0
        %4146 = vmatprep.subr.bf16.mxu0 0
        %4147 = vmatpush2.bf16.msra.mxu0 0
        %4148 = vmatprep.mubr.bf16.mxu0 0
        %4149 = vmatmul.mubr.bf16.gmra.mxu0 %v1832
        %v4150 = vpop.f32.mrf.mxu0
        %v4151 = vadd.f32 %v3823, %v4150
        %v4152 = vpop.f32.mrf.mxu0
        %v4153 = vpop.f32.mrf.mxu0
        %v4154 = vadd.f32 %v3826, %v4153
        %v4155 = vpop.f32.mrf.mxu0
        %4156 = vdwg.mxu0
        %4157 = vmatprep.subr.bf16.mxu0 0
        %4158 = vmatpush1.bf16.msra.mxu0 0
        %4159 = vmatprep.subr.bf16.mxu0 0
        %4160 = vmatpush1.bf16.msra.mxu0 0
        %4161 = vmatprep.subr.bf16.mxu0 0
        %4162 = vmatpush1.bf16.msra.mxu0 0
        %4163 = vmatprep.subr.bf16.mxu0 0
        %4164 = vmatpush1.bf16.msra.mxu0 0
        %4165 = vmatprep.subr.bf16.mxu0 0
        %4166 = vmatpush1.bf16.msra.mxu0 0
        %4167 = vmatprep.subr.bf16.mxu0 0
        %4168 = vmatpush1.bf16.msra.mxu0 0
        %4169 = vmatprep.subr.bf16.mxu0 0
        %4170 = vmatpush1.bf16.msra.mxu0 0
        %4171 = vmatprep.subr.bf16.mxu0 0
        %4172 = vmatpush1.bf16.msra.mxu0 %v3733
        %4173 = vmatprep.subr.bf16.mxu0 0
        %4174 = vmatpush2.bf16.msra.mxu0 0
        %4175 = vmatprep.subr.bf16.mxu0 0
        %4176 = vmatpush2.bf16.msra.mxu0 0
        %4177 = vmatprep.subr.bf16.mxu0 0
        %4178 = vmatpush2.bf16.msra.mxu0 0
        %4179 = vmatprep.subr.bf16.mxu0 0
        %4180 = vmatpush2.bf16.msra.mxu0 0
        %4181 = vmatprep.subr.bf16.mxu0 0
        %4182 = vmatpush2.bf16.msra.mxu0 0
        %4183 = vmatprep.subr.bf16.mxu0 0
        %4184 = vmatpush2.bf16.msra.mxu0 0
        %4185 = vmatprep.subr.bf16.mxu0 0
        %4186 = vmatpush2.bf16.msra.mxu0 0
        %4187 = vmatprep.subr.bf16.mxu0 0
        %4188 = vmatpush2.bf16.msra.mxu0 0
        %4189 = vmatprep.mubr.bf16.mxu0 0
        %4190 = vmatmul.mubr.bf16.gmra.mxu0 %v1832
        %v4191 = vpop.f32.mrf.mxu0
        %v4192 = vadd.f32 %v3864, %v4191
        %v4193 = vpop.f32.mrf.mxu0
        %v4194 = vpop.f32.mrf.mxu0
        %v4195 = vadd.f32 %v3867, %v4194
        %v4196 = vpop.f32.mrf.mxu0
        %4197 = vdwg.mxu0
        %4198 = vmatprep.subr.bf16.mxu0 0
        %4199 = vmatpush1.bf16.msra.mxu0 0
        %4200 = vmatprep.subr.bf16.mxu0 0
        %4201 = vmatpush1.bf16.msra.mxu0 0
        %4202 = vmatprep.subr.bf16.mxu0 0
        %4203 = vmatpush1.bf16.msra.mxu0 0
        %4204 = vmatprep.subr.bf16.mxu0 0
        %4205 = vmatpush1.bf16.msra.mxu0 0
        %4206 = vmatprep.subr.bf16.mxu0 0
        %4207 = vmatpush1.bf16.msra.mxu0 0
        %4208 = vmatprep.subr.bf16.mxu0 0
        %4209 = vmatpush1.bf16.msra.mxu0 0
        %4210 = vmatprep.subr.bf16.mxu0 0
        %4211 = vmatpush1.bf16.msra.mxu0 0
        %4212 = vmatprep.subr.bf16.mxu0 0
        %4213 = vmatpush1.bf16.msra.mxu0 %v3734
        %4214 = vmatprep.subr.bf16.mxu0 0
        %4215 = vmatpush2.bf16.msra.mxu0 0
        %4216 = vmatprep.subr.bf16.mxu0 0
        %4217 = vmatpush2.bf16.msra.mxu0 0
        %4218 = vmatprep.subr.bf16.mxu0 0
        %4219 = vmatpush2.bf16.msra.mxu0 0
        %4220 = vmatprep.subr.bf16.mxu0 0
        %4221 = vmatpush2.bf16.msra.mxu0 0
        %4222 = vmatprep.subr.bf16.mxu0 0
        %4223 = vmatpush2.bf16.msra.mxu0 0
        %4224 = vmatprep.subr.bf16.mxu0 0
        %4225 = vmatpush2.bf16.msra.mxu0 0
        %4226 = vmatprep.subr.bf16.mxu0 0
        %4227 = vmatpush2.bf16.msra.mxu0 0
        %4228 = vmatprep.subr.bf16.mxu0 0
        %4229 = vmatpush2.bf16.msra.mxu0 0
        %4230 = vmatprep.mubr.bf16.mxu0 0
        %4231 = vmatmul.mubr.bf16.gmra.mxu0 %v1832
        %v4232 = vpop.f32.mrf.mxu0
        %v4233 = vadd.f32 %v3905, %v4232
        %v4234 = vpop.f32.mrf.mxu0
        %v4235 = vpop.f32.mrf.mxu0
        %v4236 = vadd.f32 %v3908, %v4235
        %v4237 = vpop.f32.mrf.mxu0
        %4238 = vdwg.mxu0
        %4239 = vmatprep.subr.bf16.mxu0 0
        %4240 = vmatpush1.bf16.msra.mxu0 0
        %4241 = vmatprep.subr.bf16.mxu0 0
        %4242 = vmatpush1.bf16.msra.mxu0 0
        %4243 = vmatprep.subr.bf16.mxu0 0
        %4244 = vmatpush1.bf16.msra.mxu0 0
        %4245 = vmatprep.subr.bf16.mxu0 0
        %4246 = vmatpush1.bf16.msra.mxu0 0
        %4247 = vmatprep.subr.bf16.mxu0 0
        %4248 = vmatpush1.bf16.msra.mxu0 0
        %4249 = vmatprep.subr.bf16.mxu0 0
        %4250 = vmatpush1.bf16.msra.mxu0 0
        %4251 = vmatprep.subr.bf16.mxu0 0
        %4252 = vmatpush1.bf16.msra.mxu0 0
        %4253 = vmatprep.subr.bf16.mxu0 0
        %4254 = vmatpush1.bf16.msra.mxu0 %v3735
        %4255 = vmatprep.subr.bf16.mxu0 0
        %4256 = vmatpush2.bf16.msra.mxu0 0
        %4257 = vmatprep.subr.bf16.mxu0 0
        %4258 = vmatpush2.bf16.msra.mxu0 0
        %4259 = vmatprep.subr.bf16.mxu0 0
        %4260 = vmatpush2.bf16.msra.mxu0 0
        %4261 = vmatprep.subr.bf16.mxu0 0
        %4262 = vmatpush2.bf16.msra.mxu0 0
        %4263 = vmatprep.subr.bf16.mxu0 0
        %4264 = vmatpush2.bf16.msra.mxu0 0
        %4265 = vmatprep.subr.bf16.mxu0 0
        %4266 = vmatpush2.bf16.msra.mxu0 0
        %4267 = vmatprep.subr.bf16.mxu0 0
        %4268 = vmatpush2.bf16.msra.mxu0 0
        %4269 = vmatprep.subr.bf16.mxu0 0
        %4270 = vmatpush2.bf16.msra.mxu0 0
        %4271 = vmatprep.mubr.bf16.mxu0 0
        %4272 = vmatmul.mubr.bf16.gmra.mxu0 %v1832
        %v4273 = vpop.f32.mrf.mxu0
        %v4274 = vadd.f32 %v3946, %v4273
        %v4275 = vpop.f32.mrf.mxu0
        %v4276 = vpop.f32.mrf.mxu0
        %v4277 = vadd.f32 %v3949, %v4276
        %v4278 = vpop.f32.mrf.mxu0
        %4279 = vdwg.mxu0
        %4280 = vmatprep.subr.bf16.mxu0 0
        %4281 = vmatpush1.bf16.msra.mxu0 0
        %4282 = vmatprep.subr.bf16.mxu0 0
        %4283 = vmatpush1.bf16.msra.mxu0 0
        %4284 = vmatprep.subr.bf16.mxu0 0
        %4285 = vmatpush1.bf16.msra.mxu0 0
        %4286 = vmatprep.subr.bf16.mxu0 0
        %4287 = vmatpush1.bf16.msra.mxu0 0
        %4288 = vmatprep.subr.bf16.mxu0 0
        %4289 = vmatpush1.bf16.msra.mxu0 0
        %4290 = vmatprep.subr.bf16.mxu0 0
        %4291 = vmatpush1.bf16.msra.mxu0 0
        %4292 = vmatprep.subr.bf16.mxu0 0
        %4293 = vmatpush1.bf16.msra.mxu0 0
        %4294 = vmatprep.subr.bf16.mxu0 0
        %4295 = vmatpush1.bf16.msra.mxu0 %v3736
        %4296 = vmatprep.subr.bf16.mxu0 0
        %4297 = vmatpush2.bf16.msra.mxu0 0
        %4298 = vmatprep.subr.bf16.mxu0 0
        %4299 = vmatpush2.bf16.msra.mxu0 0
        %4300 = vmatprep.subr.bf16.mxu0 0
        %4301 = vmatpush2.bf16.msra.mxu0 0
        %4302 = vmatprep.subr.bf16.mxu0 0
        %4303 = vmatpush2.bf16.msra.mxu0 0
        %4304 = vmatprep.subr.bf16.mxu0 0
        %4305 = vmatpush2.bf16.msra.mxu0 0
        %4306 = vmatprep.subr.bf16.mxu0 0
        %4307 = vmatpush2.bf16.msra.mxu0 0
        %4308 = vmatprep.subr.bf16.mxu0 0
        %4309 = vmatpush2.bf16.msra.mxu0 0
        %4310 = vmatprep.subr.bf16.mxu0 0
        %4311 = vmatpush2.bf16.msra.mxu0 0
        %4312 = vmatprep.mubr.bf16.mxu0 0
        %4313 = vmatmul.mubr.bf16.gmra.mxu0 %v1832
        %v4314 = vpop.f32.mrf.mxu0
        %v4315 = vadd.f32 %v3987, %v4314
        %v4316 = vpop.f32.mrf.mxu0
        %v4317 = vpop.f32.mrf.mxu0
        %v4318 = vadd.f32 %v3990, %v4317
        %v4319 = vpop.f32.mrf.mxu0
        %4320 = vdwg.mxu0
        %4321 = vmatprep.subr.bf16.mxu0 0
        %4322 = vmatpush1.bf16.msra.mxu0 0
        %4323 = vmatprep.subr.bf16.mxu0 0
        %4324 = vmatpush1.bf16.msra.mxu0 0
        %4325 = vmatprep.subr.bf16.mxu0 0
        %4326 = vmatpush1.bf16.msra.mxu0 0
        %4327 = vmatprep.subr.bf16.mxu0 0
        %4328 = vmatpush1.bf16.msra.mxu0 0
        %4329 = vmatprep.subr.bf16.mxu0 0
        %4330 = vmatpush1.bf16.msra.mxu0 0
        %4331 = vmatprep.subr.bf16.mxu0 0
        %4332 = vmatpush1.bf16.msra.mxu0 0
        %4333 = vmatprep.subr.bf16.mxu0 0
        %4334 = vmatpush1.bf16.msra.mxu0 0
        %4335 = vmatprep.subr.bf16.mxu0 0
        %4336 = vmatpush1.bf16.msra.mxu0 %v3737
        %4337 = vmatprep.subr.bf16.mxu0 0
        %4338 = vmatpush2.bf16.msra.mxu0 0
        %4339 = vmatprep.subr.bf16.mxu0 0
        %4340 = vmatpush2.bf16.msra.mxu0 0
        %4341 = vmatprep.subr.bf16.mxu0 0
        %4342 = vmatpush2.bf16.msra.mxu0 0
        %4343 = vmatprep.subr.bf16.mxu0 0
        %4344 = vmatpush2.bf16.msra.mxu0 0
        %4345 = vmatprep.subr.bf16.mxu0 0
        %4346 = vmatpush2.bf16.msra.mxu0 0
        %4347 = vmatprep.subr.bf16.mxu0 0
        %4348 = vmatpush2.bf16.msra.mxu0 0
        %4349 = vmatprep.subr.bf16.mxu0 0
        %4350 = vmatpush2.bf16.msra.mxu0 0
        %4351 = vmatprep.subr.bf16.mxu0 0
        %4352 = vmatpush2.bf16.msra.mxu0 0
        %4353 = vmatprep.mubr.bf16.mxu0 0
        %4354 = vmatmul.mubr.bf16.gmra.mxu0 %v1832
        %v4355 = vpop.f32.mrf.mxu0
        %v4356 = vadd.f32 %v4028, %v4355
        %v4357 = vpop.f32.mrf.mxu0
        %v4358 = vpop.f32.mrf.mxu0
        %v4359 = vadd.f32 %v4031, %v4358
        %v4360 = vpop.f32.mrf.mxu0
        %4361 = vdwg.mxu0
        %4362 = vmatprep.subr.bf16.mxu0 0
        %4363 = vmatpush1.bf16.msra.mxu0 0
        %4364 = vmatprep.subr.bf16.mxu0 0
        %4365 = vmatpush1.bf16.msra.mxu0 0
        %4366 = vmatprep.subr.bf16.mxu0 0
        %4367 = vmatpush1.bf16.msra.mxu0 0
        %4368 = vmatprep.subr.bf16.mxu0 0
        %4369 = vmatpush1.bf16.msra.mxu0 0
        %4370 = vmatprep.subr.bf16.mxu0 0
        %4371 = vmatpush1.bf16.msra.mxu0 0
        %4372 = vmatprep.subr.bf16.mxu0 0
        %4373 = vmatpush1.bf16.msra.mxu0 0
        %4374 = vmatprep.subr.bf16.mxu0 0
        %4375 = vmatpush1.bf16.msra.mxu0 0
        %4376 = vmatprep.subr.bf16.mxu0 0
        %4377 = vmatpush1.bf16.msra.mxu0 %v3738
        %4378 = vmatprep.subr.bf16.mxu0 0
        %4379 = vmatpush2.bf16.msra.mxu0 0
        %4380 = vmatprep.subr.bf16.mxu0 0
        %4381 = vmatpush2.bf16.msra.mxu0 0
        %4382 = vmatprep.subr.bf16.mxu0 0
        %4383 = vmatpush2.bf16.msra.mxu0 0
        %4384 = vmatprep.subr.bf16.mxu0 0
        %4385 = vmatpush2.bf16.msra.mxu0 0
        %4386 = vmatprep.subr.bf16.mxu0 0
        %4387 = vmatpush2.bf16.msra.mxu0 0
        %4388 = vmatprep.subr.bf16.mxu0 0
        %4389 = vmatpush2.bf16.msra.mxu0 0
        %4390 = vmatprep.subr.bf16.mxu0 0
        %4391 = vmatpush2.bf16.msra.mxu0 0
        %4392 = vmatprep.subr.bf16.mxu0 0
        %4393 = vmatpush2.bf16.msra.mxu0 0
        %4394 = vmatprep.mubr.bf16.mxu0 0
        %4395 = vmatmul.mubr.bf16.gmra.mxu0 %v1832
        %v4396 = vpop.f32.mrf.mxu0
        %v4397 = vadd.f32 %v4069, %v4396
        %v4398 = vpop.f32.mrf.mxu0
        %v4399 = vpop.f32.mrf.mxu0
        %v4400 = vadd.f32 %v4072, %v4399
        %v4401 = vpop.f32.mrf.mxu0
        %4402 = vdwg.mxu0
        %v4403 = vadd.f32 %v1557, %v4110
        %v4404 = vadd.f32 %v1558, %v4113
        %v4405 = vadd.f32 %v1559, %v4151
        %v4406 = vadd.f32 %v1560, %v4154
        %v4407 = vadd.f32 %v1561, %v4192
        %v4408 = vadd.f32 %v1562, %v4195
        %v4409 = vadd.f32 %v1563, %v4233
        %v4410 = vadd.f32 %v1564, %v4236
        %v4411 = vadd.f32 %v1565, %v4274
        %v4412 = vadd.f32 %v1566, %v4277
        %v4413 = vadd.f32 %v1567, %v4315
        %v4414 = vadd.f32 %v1568, %v4318
        %v4415 = vadd.f32 %v1569, %v4356
        %v4416 = vadd.f32 %v1570, %v4359
        %v4417 = vadd.f32 %v1571, %v4397
        %v4418 = vadd.f32 %v1572, %v4400
        %4419 = vst.msk [vmem:[#allocation2] sm:$0xff] %vm692, %v4403
        %4420 = vst.msk [vmem:[#allocation2 + $0x8] sm:$0xff] %vm692, %v4404
        %4421 = vst.msk [vmem:[#allocation2 + $0x10] sm:$0xff] %vm692, %v4405
        %4422 = vst.msk [vmem:[#allocation2 + $0x18] sm:$0xff] %vm692, %v4406
        %4423 = vst.msk [vmem:[#allocation2 + $0x20] sm:$0xff] %vm692, %v4407
        %4424 = vst.msk [vmem:[#allocation2 + $0x28] sm:$0xff] %vm692, %v4408
        %4425 = vst.msk [vmem:[#allocation2 + $0x30] sm:$0xff] %vm692, %v4409
        %4426 = vst.msk [vmem:[#allocation2 + $0x38] sm:$0xff] %vm692, %v4410
        %4427 = vst.msk [vmem:[#allocation2 + $0x40] sm:$0xff] %vm692, %v4411
        %4428 = vst.msk [vmem:[#allocation2 + $0x48] sm:$0xff] %vm692, %v4412
        %4429 = vst.msk [vmem:[#allocation2 + $0x50] sm:$0xff] %vm692, %v4413
        %4430 = vst.msk [vmem:[#allocation2 + $0x58] sm:$0xff] %vm692, %v4414
        %4431 = vst.msk [vmem:[#allocation2 + $0x60] sm:$0xff] %vm692, %v4415
        %4432 = vst.msk [vmem:[#allocation2 + $0x68] sm:$0xff] %vm692, %v4416
        %4433 = vst.msk [vmem:[#allocation2 + $0x70] sm:$0xff] %vm692, %v4417
        %4434 = vst.msk [vmem:[#allocation2 + $0x78] sm:$0xff] %vm692, %v4418
        %p4435 = scmp.eq.s32.totalorder %s22, 1
        // Predicated region
        $region65: #{cascade_net_forward.1} parent=59 // pred_check
          %p4436 = pneg %p4435
        $region66: #{cascade_net_forward.1} parent=59 // pred_check_branch
          %4438 = sbr.rel (%p4436) target = $region68
        $region67: #{cascade_net_forward.1} parent=59 // pred_region
          %4439 = vst.msk [vmem:[#allocation3] sm:$0xff] %vm692, %v4403
          %4440 = vst.msk [vmem:[#allocation3 + $0x8] sm:$0xff] %vm692, %v4404
          %4441 = vst.msk [vmem:[#allocation3 + $0x10] sm:$0xff] %vm692, %v4405
          %4442 = vst.msk [vmem:[#allocation3 + $0x18] sm:$0xff] %vm692, %v4406
          %4443 = vst.msk [vmem:[#allocation3 + $0x20] sm:$0xff] %vm692, %v4407
          %4444 = vst.msk [vmem:[#allocation3 + $0x28] sm:$0xff] %vm692, %v4408
          %4445 = vst.msk [vmem:[#allocation3 + $0x30] sm:$0xff] %vm692, %v4409
          %4446 = vst.msk [vmem:[#allocation3 + $0x38] sm:$0xff] %vm692, %v4410
          %4447 = vst.msk [vmem:[#allocation3 + $0x40] sm:$0xff] %vm692, %v4411
          %4448 = vst.msk [vmem:[#allocation3 + $0x48] sm:$0xff] %vm692, %v4412
          %4449 = vst.msk [vmem:[#allocation3 + $0x50] sm:$0xff] %vm692, %v4413
          %4450 = vst.msk [vmem:[#allocation3 + $0x58] sm:$0xff] %vm692, %v4414
          %4451 = vst.msk [vmem:[#allocation3 + $0x60] sm:$0xff] %vm692, %v4415
          %4452 = vst.msk [vmem:[#allocation3 + $0x68] sm:$0xff] %vm692, %v4416
          %4453 = vst.msk [vmem:[#allocation3 + $0x70] sm:$0xff] %vm692, %v4417
          %4454 = vst.msk [vmem:[#allocation3 + $0x78] sm:$0xff] %vm692, %v4418
        $region68: #{cascade_net_forward.1} parent=59 // pred_fallthru
          _
        // Predicated region
        $region69: #{cascade_net_forward.1} parent=59 // pred_check
          %p4455 = pneg %p270
        $region70: #{cascade_net_forward.1} parent=59 // pred_check_branch
          %4457 = sbr.rel (%p4455) target = $region72
        $region71: #{cascade_net_forward.1} parent=59 // pred_region
          %s4459 = ssub.s32 2048, 2048
          %4460 = vsyncadd [#allocation4], %s4459
          %s4461 = sshll.u32 [#allocation3], 4
          %s4462 = int_to_ptr.vmem [resolvable:$true] %s4461
          %4467 = dma.vmem_to_hbm [thread:$0]  %s4462, 2048, %s10, [#allocation4], 128, 128, 8
        $region72: #{cascade_net_forward.1} parent=59 // pred_fallthru
          _
        // Predicated region
        $region73: #{cascade_net_forward.1} parent=59 // pred_check
          %p4468 = pneg %p270
        $region74: #{cascade_net_forward.1} parent=59 // pred_check_branch
          %4470 = sbr.rel (%p4468) target = $region76
        $region75: #{cascade_net_forward.1} parent=59 // pred_region
          %4471 = dma.done [#allocation4], 2048
        $region76: #{cascade_net_forward.1} parent=59 // pred_fallthru
          _
      $region60: #{cascade_net_forward.1} parent=5 // pred_fallthru
        _
      %p4472 = scmp.le.s32.totalorder 2, %s17
      // Predicated region
      $region77: #{cascade_net_forward.1} parent=5 // pred_check
        %p4473 = pneg %p4472
      $region78: #{cascade_net_forward.1} parent=5 // pred_check_branch
        %4475 = sbr.rel (%p4473) target = $region80
      $region79: #{cascade_net_forward.1} parent=5 // pred_region
        %s4476 = ssub.s32 %s17, 2
      $region80: #{cascade_net_forward.1} parent=5 // pred_fallthru
        _
    $region6: #{cascade_net_forward.1} parent=1 // loop_footer
      %s21 = sadd.s32 1, %s17
    $region7: #{cascade_net_forward.1} parent=1 // loop_footer_branch
      %16 = sbr.rel target = $region3
    $region8: #{cascade_net_forward.1} parent=1 // loop_exit
      _
    %4477 = vsyncpa [#allocation4], 1
    %s4478 = scalar_lea.sflag [#allocation4], 1
    %4479 = vsyncpa %s4478, 1

</llo_original>
